<compile_context>
chip_gen: v7x
topology: tpu7x:2x2x1
jax: 0.10.0
libtpu: 0.0.40
codegen_flags: <defaults>
</compile_context>

<pallas_src>
import jax
import jax.numpy as jnp
from jax.experimental import pallas as pl
from jax.experimental.pallas import tpu as pltpu


def _round_up(x, m):
    return ((x + m - 1) // m) * m


def _row_tile(n, target=512):
    """Pad row count to a multiple of 8 and pick a row tile <= target."""
    n_pad = _round_up(max(n, 8), 8)
    if n_pad <= target:
        return n_pad, n_pad
    tile = target
    n_pad = _round_up(n_pad, tile)
    return n_pad, tile


# ----------------------------- Pallas kernels ------------------------------

def _matmul_bn_relu_kernel(p_ref, w_ref, s_ref, b_ref, o_ref):
    # p: (TM, KCp) bf16, w: (KCp, Coutp) bf16, s/b: (1, Coutp) f32 -> o bf16.
    acc = jnp.dot(p_ref[...], w_ref[...], preferred_element_type=jnp.float32)
    o_ref[...] = jnp.maximum(acc * s_ref[...] + b_ref[...], 0.0).astype(o_ref.dtype)


def _maxpool_kernel(t_ref, o_ref):
    # t: (KK, TR, L) shifted taps -> o: (TR, L) = max over taps (lane-dense L).
    acc = t_ref[0]
    for i in range(1, t_ref.shape[0]):
        acc = jnp.maximum(acc, t_ref[i])
    o_ref[...] = acc.astype(o_ref.dtype)


def _mean_linear_kernel(x_ref, w_ref, b_ref, o_ref):
    # x: (B, HW, C), w: (C, nclsp), b: (1, nclsp) -> o: (B, nclsp) f32.
    feats = jnp.mean(x_ref[...].astype(jnp.float32), axis=1)
    o_ref[...] = (jnp.dot(feats, w_ref[...], preferred_element_type=jnp.float32)
                  + b_ref[...]).astype(o_ref.dtype)


_PAR = pltpu.CompilerParams(dimension_semantics=("parallel",))


# ------------------------------ JAX glue ------------------------------------

def _extract_taps(x, K, stride, pad, pad_value):
    """x: (B,H,W,C) NHWC -> list of K*K shifted strided views (B,Ho,Wo,C)."""
    B, H, W, C = x.shape
    xp = jnp.pad(x, ((0, 0), (pad, pad), (pad, pad), (0, 0)),
                 constant_values=pad_value)
    Ho = (H + 2 * pad - K) // stride + 1
    Wo = (W + 2 * pad - K) // stride + 1
    taps = []
    for kh in range(K):
        for kw in range(K):
            sl = jax.lax.slice(
                xp,
                (0, kh, kw, 0),
                (B, kh + stride * (Ho - 1) + 1, kw + stride * (Wo - 1) + 1, C),
                (1, stride, stride, 1),
            )
            taps.append(sl)
    return taps, Ho, Wo


def conv_bn_relu(x, w, b, gamma, beta, rmean, rvar, *, stride, pad, eps=1e-5):
    """Fused Conv2d(K,K) + BatchNorm2d(eval) + ReLU.  x: NHWC bf16, w: (Co,Ci,K,K) f32."""
    B, H, W, Cin = x.shape
    Cout, _, K, _ = w.shape
    taps, Ho, Wo = _extract_taps(x, K, stride, pad, 0.0)
    N = B * Ho * Wo
    KC = K * K * Cin

    # im2col patches in bf16 (MXU operand), zero-padded to aligned shapes.
    patches = jnp.stack(taps, axis=3).reshape(N, KC).astype(jnp.bfloat16)
    KCp = _round_up(KC, 128)
    Coutp = _round_up(Cout, 128)
    Np, tm = _row_tile(N, target=512)
    patches = jnp.pad(patches, ((0, Np - N), (0, KCp - KC)))

    w2d = jnp.transpose(w, (2, 3, 1, 0)).reshape(KC, Cout)
    w2d = jnp.pad(w2d, ((0, KCp - KC), (0, Coutp - Cout))).astype(jnp.bfloat16)

    # Fold BatchNorm (inference) into a per-channel scale/bias, kept in f32.
    scale = gamma / jnp.sqrt(rvar + eps)
    bias = (b - rmean) * scale + beta
    scale = jnp.pad(scale, (0, Coutp - Cout)).reshape(1, Coutp).astype(jnp.float32)
    bias = jnp.pad(bias, (0, Coutp - Cout)).reshape(1, Coutp).astype(jnp.float32)

    cost = pl.CostEstimate(
        flops=2 * Np * KCp * Coutp,
        transcendentals=0,
        bytes_accessed=Np * KCp * 2 + KCp * Coutp * 2 + 2 * Coutp * 4 + Np * Coutp * 2,
    )

    out = pl.pallas_call(
        _matmul_bn_relu_kernel,
        grid=(Np // tm,),
        in_specs=[
            pl.BlockSpec((tm, KCp), lambda i: (i, 0)),
            pl.BlockSpec((KCp, Coutp), lambda i: (0, 0)),
            pl.BlockSpec((1, Coutp), lambda i: (0, 0)),
            pl.BlockSpec((1, Coutp), lambda i: (0, 0)),
        ],
        out_specs=pl.BlockSpec((tm, Coutp), lambda i: (i, 0)),
        out_shape=jax.ShapeDtypeStruct((Np, Coutp), jnp.bfloat16),
        compiler_params=_PAR,
        cost_estimate=cost,
    )(patches, w2d, scale, bias)
    return out[:N, :Cout].reshape(B, Ho, Wo, Cout)


def maxpool2d(x, *, K=3, stride=2, pad=1):
    """MaxPool2d(3, stride=2, padding=1) on NHWC bf16 (post-ReLU, so 0-padding)."""
    B, H, W, C = x.shape
    taps, Ho, Wo = _extract_taps(x, K, stride, pad, 0.0)
    R, L = B * Ho, Wo * C                              # lane-dense slabs (L >= 512 here)
    stacked = jnp.stack([t.reshape(R, L) for t in taps], axis=0)   # (KK, R, L)
    Rp, tr = _row_tile(R, target=256)
    stacked = jnp.pad(stacked, ((0, 0), (0, Rp - R), (0, 0)))
    KK = stacked.shape[0]

    out = pl.pallas_call(
        _maxpool_kernel,
        grid=(Rp // tr,),
        in_specs=[pl.BlockSpec((KK, tr, L), lambda i: (0, i, 0))],
        out_specs=pl.BlockSpec((tr, L), lambda i: (i, 0)),
        out_shape=jax.ShapeDtypeStruct((Rp, L), x.dtype),
        compiler_params=_PAR,
    )(stacked)
    return out[:R].reshape(B, Ho, Wo, C)


def mean_linear(x, w, b):
    """Global mean over H,W then Linear.  x: (B,H,W,C) bf16, w: (C,ncls), b: (ncls,)."""
    B, H, W, C = x.shape
    ncls = w.shape[1]
    nclsp = _round_up(ncls, 128)
    xr = x.reshape(B, H * W, C)
    wp = jnp.pad(w, ((0, 0), (0, nclsp - ncls))).astype(jnp.float32)
    bp = jnp.pad(b, (0, nclsp - ncls)).reshape(1, nclsp).astype(jnp.float32)

    out = pl.pallas_call(
        _mean_linear_kernel,
        grid=(1,),
        in_specs=[
            pl.BlockSpec((B, H * W, C), lambda i: (0, 0, 0)),
            pl.BlockSpec((C, nclsp), lambda i: (0, 0)),
            pl.BlockSpec((1, nclsp), lambda i: (0, 0)),
        ],
        out_specs=pl.BlockSpec((B, nclsp), lambda i: (0, 0)),
        out_shape=jax.ShapeDtypeStruct((B, nclsp), jnp.float32),
        compiler_params=_PAR,
    )(xr, wp, bp)
    return out[:, :ncls]


# ------------------------------ model ---------------------------------------

def init_params(key, layer_channels=(32, 64, 128, 256), num_classes=6):
    """Deterministic synthetic parameters matching CNNClassifier.__init__ shapes."""
    specs = [(3, layer_channels[0], 7, 2, 3)]          # stem: Conv2d(3,c,7,s2,p3)
    c = layer_channels[0]
    for l in layer_channels[1:]:                       # Block(c,l,stride=2): 3x3 s2 p1
        specs.append((c, l, 3, 2, 1))
        c = l

    keys = jax.random.split(key, 2 * len(specs) + 2)
    convs = []
    ki = 0
    for (ci, co, K, stride, pad) in specs:
        fan_in = ci * K * K
        w = jax.random.normal(keys[ki], (co, ci, K, K), jnp.float32) * (2.0 / fan_in) ** 0.5
        b = jax.random.normal(keys[ki + 1], (co,), jnp.float32) * 0.01
        ki += 2
        convs.append(dict(
            w=w, b=b,
            gamma=jnp.ones((co,), jnp.float32),    # BatchNorm2d defaults (eval mode)
            beta=jnp.zeros((co,), jnp.float32),
            rmean=jnp.zeros((co,), jnp.float32),
            rvar=jnp.ones((co,), jnp.float32),
            stride=stride, pad=pad,
        ))
    w_lin = jax.random.normal(keys[ki], (c, num_classes), jnp.float32) * (1.0 / c) ** 0.5
    b_lin = jax.random.normal(keys[ki + 1], (num_classes,), jnp.float32) * 0.01
    return convs, w_lin, b_lin


def cnn_classifier_forward(x_nchw, convs, w_lin, b_lin):
    """x_nchw: (B,3,64,64) float32 (PyTorch NCHW) -> logits (B,6) float32."""
    # NCHW -> NHWC, bf16 activations between kernels (f32 accumulation inside).
    x = jnp.transpose(x_nchw, (0, 2, 3, 1)).astype(jnp.bfloat16)
    # Stem: Conv 7x7 s2 p3 + BN + ReLU, then MaxPool 3x3 s2 p1
    stem = convs[0]
    x = conv_bn_relu(x, stem["w"], stem["b"], stem["gamma"], stem["beta"],
                     stem["rmean"], stem["rvar"], stride=stem["stride"], pad=stem["pad"])
    x = maxpool2d(x, K=3, stride=2, pad=1)
    # Blocks: Conv 3x3 s2 p1 + BN + ReLU
    for layer in convs[1:]:
        x = conv_bn_relu(x, layer["w"], layer["b"], layer["gamma"], layer["beta"],
                         layer["rmean"], layer["rvar"],
                         stride=layer["stride"], pad=layer["pad"])
    # x.mean([2,3]) in NCHW == mean over (H,W) in NHWC, then Linear(c,6)
    return mean_linear(x, w_lin, b_lin)


if __name__ == "__main__":
    key = jax.random.PRNGKey(0)
    pkey, xkey = jax.random.split(key)
    convs, w_lin, b_lin = init_params(pkey, layer_channels=(32, 64, 128, 256))
    x = jax.random.normal(xkey, (2, 3, 64, 64), jnp.float32)   # (B,3,64,64) as in forward()

    fwd = jax.jit(lambda xx: cnn_classifier_forward(xx, convs, w_lin, b_lin))
    out = jax.block_until_ready(fwd(x))
    assert out.shape == (2, 6) and out.dtype == jnp.float32
    assert bool(jnp.all(jnp.isfinite(out)))
    print("KERNEL_OK")
</pallas_src>

<mosaic_0001>
module attributes {stable_mosaic.version = 11 : i64} {
  func.func @_matmul_bn_relu_kernel(%arg0: i32, %arg1: memref<512x256xbf16, #tpu.memory_space<vmem>>, %arg2: memref<256x128xbf16, #tpu.memory_space<vmem>>, %arg3: memref<1x128xf32, #tpu.memory_space<vmem>>, %arg4: memref<1x128xf32, #tpu.memory_space<vmem>>, %arg5: memref<512x128xbf16, #tpu.memory_space<vmem>>) attributes {dimension_semantics = [#tpu.dimension_semantics<parallel>], iteration_bounds = array<i64: 4>, scalar_prefetch = 0 : i64, scratch_operands = 0 : i64, tpu.core_type = #tpu.core_type<tc>, window_params = [{transform_indices = @transform_0, window_bounds = array<i64: 512, 256>}, {pipeline_mode = #tpu.pipeline_mode<synchronous>, transform_indices = @transform_1, window_bounds = array<i64: 256, 128>}, {pipeline_mode = #tpu.pipeline_mode<synchronous>, transform_indices = @transform_2, window_bounds = array<i64: 1, 128>}, {pipeline_mode = #tpu.pipeline_mode<synchronous>, transform_indices = @transform_3, window_bounds = array<i64: 1, 128>}, {transform_indices = @transform_4, window_bounds = array<i64: 512, 128>}]} {
    %c0 = arith.constant 0 : index
    %c0_0 = arith.constant 0 : index
    %0 = vector.load %arg1[%c0, %c0_0] : memref<512x256xbf16, #tpu.memory_space<vmem>>, vector<512x256xbf16>
    %c0_1 = arith.constant 0 : index
    %c0_2 = arith.constant 0 : index
    %1 = vector.load %arg2[%c0_1, %c0_2] : memref<256x128xbf16, #tpu.memory_space<vmem>>, vector<256x128xbf16>
    %cst = arith.constant dense<0.000000e+00> : vector<512x128xf32>
    %2 = tpu.matmul %0, %1, %cst {dimension_numbers = #tpu.dot_dimension_numbers<[1], [0], [0], [1], [0, 0, 1, 1], [], []>} : vector<512x256xbf16>, vector<256x128xbf16>, vector<512x128xf32> -> vector<512x128xf32>
    %c0_3 = arith.constant 0 : index
    %c0_4 = arith.constant 0 : index
    %3 = vector.load %arg3[%c0_3, %c0_4] : memref<1x128xf32, #tpu.memory_space<vmem>>, vector<1x128xf32>
    %4 = vector.broadcast %3 : vector<1x128xf32> to vector<512x128xf32>
    %5 = arith.mulf %2, %4 : vector<512x128xf32>
    %c0_5 = arith.constant 0 : index
    %c0_6 = arith.constant 0 : index
    %6 = vector.load %arg4[%c0_5, %c0_6] : memref<1x128xf32, #tpu.memory_space<vmem>>, vector<1x128xf32>
    %7 = vector.broadcast %6 : vector<1x128xf32> to vector<512x128xf32>
    %8 = arith.addf %5, %7 : vector<512x128xf32>
    %cst_7 = arith.constant 0.000000e+00 : f32
    %9 = vector.broadcast %cst_7 : f32 to vector<512x128xf32>
    %10 = arith.maximumf %8, %9 : vector<512x128xf32>
    %11 = arith.truncf %10 : vector<512x128xf32> to vector<512x128xbf16>
    %c0_8 = arith.constant 0 : index
    %c0_9 = arith.constant 0 : index
    %12 = vector.load %arg5[%c0_8, %c0_9] : memref<512x128xbf16, #tpu.memory_space<vmem>>, vector<512x128xbf16>
    tpu.vector_store %arg5[%c0_8, %c0_9], %11 {strides = array<i32>} : memref<512x128xbf16, #tpu.memory_space<vmem>>, vector<512x128xbf16>,
    return
  }
  func.func @transform_0(%arg0: i32) -> (i32, i32) {
    %c0_i32 = arith.constant 0 : i32
    %c0_i32_0 = arith.constant 0 : i32
    return %arg0, %c0_i32 : i32, i32
  }
  func.func @transform_1(%arg0: i32) -> (i32, i32) {
    %c0_i32 = arith.constant 0 : i32
    %c0_i32_0 = arith.constant 0 : i32
    %c0_i32_1 = arith.constant 0 : i32
    return %c0_i32, %c0_i32_0 : i32, i32
  }
  func.func @transform_2(%arg0: i32) -> (i32, i32) {
    %c0_i32 = arith.constant 0 : i32
    %c0_i32_0 = arith.constant 0 : i32
    %c0_i32_1 = arith.constant 0 : i32
    return %c0_i32, %c0_i32_0 : i32, i32
  }
  func.func @transform_3(%arg0: i32) -> (i32, i32) {
    %c0_i32 = arith.constant 0 : i32
    %c0_i32_0 = arith.constant 0 : i32
    %c0_i32_1 = arith.constant 0 : i32
    return %c0_i32, %c0_i32_0 : i32, i32
  }
  func.func @transform_4(%arg0: i32) -> (i32, i32) {
    %c0_i32 = arith.constant 0 : i32
    %c0_i32_0 = arith.constant 0 : i32
    return %arg0, %c0_i32 : i32, i32
  }
}

module attributes {stable_mosaic.version = 11 : i64} {
  func.func @_maxpool_kernel(%arg0: i32, %arg1: memref<9x32x512xbf16, #tpu.memory_space<vmem>>, %arg2: memref<32x512xbf16, #tpu.memory_space<vmem>>) attributes {dimension_semantics = [#tpu.dimension_semantics<parallel>], iteration_bounds = array<i64: 1>, scalar_prefetch = 0 : i64, scratch_operands = 0 : i64, tpu.core_type = #tpu.core_type<tc>, window_params = [{transform_indices = @transform_0, window_bounds = array<i64: 9, 32, 512>}, {transform_indices = @transform_1, window_bounds = array<i64: 32, 512>}]} {
    %c0 = arith.constant 0 : index
    %c0_0 = arith.constant 0 : index
    %c0_1 = arith.constant 0 : index
    %0 = vector.load %arg1[%c0, %c0_0, %c0_1] : memref<9x32x512xbf16, #tpu.memory_space<vmem>>, vector<1x32x512xbf16>
    %1 = vector.shape_cast %0 : vector<1x32x512xbf16> to vector<32x512xbf16>
    %c1 = arith.constant 1 : index
    %c0_2 = arith.constant 0 : index
    %c0_3 = arith.constant 0 : index
    %2 = vector.load %arg1[%c1, %c0_2, %c0_3] : memref<9x32x512xbf16, #tpu.memory_space<vmem>>, vector<1x32x512xbf16>
    %3 = vector.shape_cast %2 : vector<1x32x512xbf16> to vector<32x512xbf16>
    %4 = arith.maximumf %1, %3 : vector<32x512xbf16>
    %c2 = arith.constant 2 : index
    %c0_4 = arith.constant 0 : index
    %c0_5 = arith.constant 0 : index
    %5 = vector.load %arg1[%c2, %c0_4, %c0_5] : memref<9x32x512xbf16, #tpu.memory_space<vmem>>, vector<1x32x512xbf16>
    %6 = vector.shape_cast %5 : vector<1x32x512xbf16> to vector<32x512xbf16>
    %7 = arith.maximumf %4, %6 : vector<32x512xbf16>
    %c3 = arith.constant 3 : index
    %c0_6 = arith.constant 0 : index
    %c0_7 = arith.constant 0 : index
    %8 = vector.load %arg1[%c3, %c0_6, %c0_7] : memref<9x32x512xbf16, #tpu.memory_space<vmem>>, vector<1x32x512xbf16>
    %9 = vector.shape_cast %8 : vector<1x32x512xbf16> to vector<32x512xbf16>
    %10 = arith.maximumf %7, %9 : vector<32x512xbf16>
    %c4 = arith.constant 4 : index
    %c0_8 = arith.constant 0 : index
    %c0_9 = arith.constant 0 : index
    %11 = vector.load %arg1[%c4, %c0_8, %c0_9] : memref<9x32x512xbf16, #tpu.memory_space<vmem>>, vector<1x32x512xbf16>
    %12 = vector.shape_cast %11 : vector<1x32x512xbf16> to vector<32x512xbf16>
    %13 = arith.maximumf %10, %12 : vector<32x512xbf16>
    %c5 = arith.constant 5 : index
    %c0_10 = arith.constant 0 : index
    %c0_11 = arith.constant 0 : index
    %14 = vector.load %arg1[%c5, %c0_10, %c0_11] : memref<9x32x512xbf16, #tpu.memory_space<vmem>>, vector<1x32x512xbf16>
    %15 = vector.shape_cast %14 : vector<1x32x512xbf16> to vector<32x512xbf16>
    %16 = arith.maximumf %13, %15 : vector<32x512xbf16>
    %c6 = arith.constant 6 : index
    %c0_12 = arith.constant 0 : index
    %c0_13 = arith.constant 0 : index
    %17 = vector.load %arg1[%c6, %c0_12, %c0_13] : memref<9x32x512xbf16, #tpu.memory_space<vmem>>, vector<1x32x512xbf16>
    %18 = vector.shape_cast %17 : vector<1x32x512xbf16> to vector<32x512xbf16>
    %19 = arith.maximumf %16, %18 : vector<32x512xbf16>
    %c7 = arith.constant 7 : index
    %c0_14 = arith.constant 0 : index
    %c0_15 = arith.constant 0 : index
    %20 = vector.load %arg1[%c7, %c0_14, %c0_15] : memref<9x32x512xbf16, #tpu.memory_space<vmem>>, vector<1x32x512xbf16>
    %21 = vector.shape_cast %20 : vector<1x32x512xbf16> to vector<32x512xbf16>
    %22 = arith.maximumf %19, %21 : vector<32x512xbf16>
    %c8 = arith.constant 8 : index
    %c0_16 = arith.constant 0 : index
    %c0_17 = arith.constant 0 : index
    %23 = vector.load %arg1[%c8, %c0_16, %c0_17] : memref<9x32x512xbf16, #tpu.memory_space<vmem>>, vector<1x32x512xbf16>
    %24 = vector.shape_cast %23 : vector<1x32x512xbf16> to vector<32x512xbf16>
    %25 = arith.maximumf %22, %24 : vector<32x512xbf16>
    %c0_18 = arith.constant 0 : index
    %c0_19 = arith.constant 0 : index
    %26 = vector.load %arg2[%c0_18, %c0_19] : memref<32x512xbf16, #tpu.memory_space<vmem>>, vector<32x512xbf16>
    tpu.vector_store %arg2[%c0_18, %c0_19], %25 {strides = array<i32>} : memref<32x512xbf16, #tpu.memory_space<vmem>>, vector<32x512xbf16>,
    return
  }
  func.func @transform_0(%arg0: i32) -> (i32, i32, i32) {
    %c0_i32 = arith.constant 0 : i32
    %c0_i32_0 = arith.constant 0 : i32
    %c0_i32_1 = arith.constant 0 : i32
    return %c0_i32, %arg0, %c0_i32_0 : i32, i32, i32
  }
  func.func @transform_1(%arg0: i32) -> (i32, i32) {
    %c0_i32 = arith.constant 0 : i32
    %c0_i32_0 = arith.constant 0 : i32
    return %arg0, %c0_i32 : i32, i32
  }
}

module attributes {stable_mosaic.version = 11 : i64} {
  func.func @_matmul_bn_relu_kernel(%arg0: i32, %arg1: memref<128x384xbf16, #tpu.memory_space<vmem>>, %arg2: memref<384x128xbf16, #tpu.memory_space<vmem>>, %arg3: memref<1x128xf32, #tpu.memory_space<vmem>>, %arg4: memref<1x128xf32, #tpu.memory_space<vmem>>, %arg5: memref<128x128xbf16, #tpu.memory_space<vmem>>) attributes {dimension_semantics = [#tpu.dimension_semantics<parallel>], iteration_bounds = array<i64: 1>, scalar_prefetch = 0 : i64, scratch_operands = 0 : i64, tpu.core_type = #tpu.core_type<tc>, window_params = [{transform_indices = @transform_0, window_bounds = array<i64: 128, 384>}, {pipeline_mode = #tpu.pipeline_mode<synchronous>, transform_indices = @transform_1, window_bounds = array<i64: 384, 128>}, {pipeline_mode = #tpu.pipeline_mode<synchronous>, transform_indices = @transform_2, window_bounds = array<i64: 1, 128>}, {pipeline_mode = #tpu.pipeline_mode<synchronous>, transform_indices = @transform_3, window_bounds = array<i64: 1, 128>}, {transform_indices = @transform_4, window_bounds = array<i64: 128, 128>}]} {
    %c0 = arith.constant 0 : index
    %c0_0 = arith.constant 0 : index
    %0 = vector.load %arg1[%c0, %c0_0] : memref<128x384xbf16, #tpu.memory_space<vmem>>, vector<128x384xbf16>
    %c0_1 = arith.constant 0 : index
    %c0_2 = arith.constant 0 : index
    %1 = vector.load %arg2[%c0_1, %c0_2] : memref<384x128xbf16, #tpu.memory_space<vmem>>, vector<384x128xbf16>
    %cst = arith.constant dense<0.000000e+00> : vector<128x128xf32>
    %2 = tpu.matmul %0, %1, %cst {dimension_numbers = #tpu.dot_dimension_numbers<[1], [0], [0], [1], [0, 0, 1, 1], [], []>} : vector<128x384xbf16>, vector<384x128xbf16>, vector<128x128xf32> -> vector<128x128xf32>
    %c0_3 = arith.constant 0 : index
    %c0_4 = arith.constant 0 : index
    %3 = vector.load %arg3[%c0_3, %c0_4] : memref<1x128xf32, #tpu.memory_space<vmem>>, vector<1x128xf32>
    %4 = vector.broadcast %3 : vector<1x128xf32> to vector<128x128xf32>
    %5 = arith.mulf %2, %4 : vector<128x128xf32>
    %c0_5 = arith.constant 0 : index
    %c0_6 = arith.constant 0 : index
    %6 = vector.load %arg4[%c0_5, %c0_6] : memref<1x128xf32, #tpu.memory_space<vmem>>, vector<1x128xf32>
    %7 = vector.broadcast %6 : vector<1x128xf32> to vector<128x128xf32>
    %8 = arith.addf %5, %7 : vector<128x128xf32>
    %cst_7 = arith.constant 0.000000e+00 : f32
    %9 = vector.broadcast %cst_7 : f32 to vector<128x128xf32>
    %10 = arith.maximumf %8, %9 : vector<128x128xf32>
    %11 = arith.truncf %10 : vector<128x128xf32> to vector<128x128xbf16>
    %c0_8 = arith.constant 0 : index
    %c0_9 = arith.constant 0 : index
    %12 = vector.load %arg5[%c0_8, %c0_9] : memref<128x128xbf16, #tpu.memory_space<vmem>>, vector<128x128xbf16>
    tpu.vector_store %arg5[%c0_8, %c0_9], %11 {strides = array<i32>} : memref<128x128xbf16, #tpu.memory_space<vmem>>, vector<128x128xbf16>,
    return
  }
  func.func @transform_0(%arg0: i32) -> (i32, i32) {
    %c0_i32 = arith.constant 0 : i32
    %c0_i32_0 = arith.constant 0 : i32
    return %arg0, %c0_i32 : i32, i32
  }
  func.func @transform_1(%arg0: i32) -> (i32, i32) {
    %c0_i32 = arith.constant 0 : i32
    %c0_i32_0 = arith.constant 0 : i32
    %c0_i32_1 = arith.constant 0 : i32
    return %c0_i32, %c0_i32_0 : i32, i32
  }
  func.func @transform_2(%arg0: i32) -> (i32, i32) {
    %c0_i32 = arith.constant 0 : i32
    %c0_i32_0 = arith.constant 0 : i32
    %c0_i32_1 = arith.constant 0 : i32
    return %c0_i32, %c0_i32_0 : i32, i32
  }
  func.func @transform_3(%arg0: i32) -> (i32, i32) {
    %c0_i32 = arith.constant 0 : i32
    %c0_i32_0 = arith.constant 0 : i32
    %c0_i32_1 = arith.constant 0 : i32
    return %c0_i32, %c0_i32_0 : i32, i32
  }
  func.func @transform_4(%arg0: i32) -> (i32, i32) {
    %c0_i32 = arith.constant 0 : i32
    %c0_i32_0 = arith.constant 0 : i32
    return %arg0, %c0_i32 : i32, i32
  }
}

module attributes {stable_mosaic.version = 11 : i64} {
  func.func @_matmul_bn_relu_kernel(%arg0: i32, %arg1: memref<32x640xbf16, #tpu.memory_space<vmem>>, %arg2: memref<640x128xbf16, #tpu.memory_space<vmem>>, %arg3: memref<1x128xf32, #tpu.memory_space<vmem>>, %arg4: memref<1x128xf32, #tpu.memory_space<vmem>>, %arg5: memref<32x128xbf16, #tpu.memory_space<vmem>>) attributes {dimension_semantics = [#tpu.dimension_semantics<parallel>], iteration_bounds = array<i64: 1>, scalar_prefetch = 0 : i64, scratch_operands = 0 : i64, tpu.core_type = #tpu.core_type<tc>, window_params = [{transform_indices = @transform_0, window_bounds = array<i64: 32, 640>}, {pipeline_mode = #tpu.pipeline_mode<synchronous>, transform_indices = @transform_1, window_bounds = array<i64: 640, 128>}, {pipeline_mode = #tpu.pipeline_mode<synchronous>, transform_indices = @transform_2, window_bounds = array<i64: 1, 128>}, {pipeline_mode = #tpu.pipeline_mode<synchronous>, transform_indices = @transform_3, window_bounds = array<i64: 1, 128>}, {transform_indices = @transform_4, window_bounds = array<i64: 32, 128>}]} {
    %c0 = arith.constant 0 : index
    %c0_0 = arith.constant 0 : index
    %0 = vector.load %arg1[%c0, %c0_0] : memref<32x640xbf16, #tpu.memory_space<vmem>>, vector<32x640xbf16>
    %c0_1 = arith.constant 0 : index
    %c0_2 = arith.constant 0 : index
    %1 = vector.load %arg2[%c0_1, %c0_2] : memref<640x128xbf16, #tpu.memory_space<vmem>>, vector<640x128xbf16>
    %cst = arith.constant dense<0.000000e+00> : vector<32x128xf32>
    %2 = tpu.matmul %0, %1, %cst {dimension_numbers = #tpu.dot_dimension_numbers<[1], [0], [0], [1], [0, 0, 1, 1], [], []>} : vector<32x640xbf16>, vector<640x128xbf16>, vector<32x128xf32> -> vector<32x128xf32>
    %c0_3 = arith.constant 0 : index
    %c0_4 = arith.constant 0 : index
    %3 = vector.load %arg3[%c0_3, %c0_4] : memref<1x128xf32, #tpu.memory_space<vmem>>, vector<1x128xf32>
    %4 = vector.broadcast %3 : vector<1x128xf32> to vector<32x128xf32>
    %5 = arith.mulf %2, %4 : vector<32x128xf32>
    %c0_5 = arith.constant 0 : index
    %c0_6 = arith.constant 0 : index
    %6 = vector.load %arg4[%c0_5, %c0_6] : memref<1x128xf32, #tpu.memory_space<vmem>>, vector<1x128xf32>
    %7 = vector.broadcast %6 : vector<1x128xf32> to vector<32x128xf32>
    %8 = arith.addf %5, %7 : vector<32x128xf32>
    %cst_7 = arith.constant 0.000000e+00 : f32
    %9 = vector.broadcast %cst_7 : f32 to vector<32x128xf32>
    %10 = arith.maximumf %8, %9 : vector<32x128xf32>
    %11 = arith.truncf %10 : vector<32x128xf32> to vector<32x128xbf16>
    %c0_8 = arith.constant 0 : index
    %c0_9 = arith.constant 0 : index
    %12 = vector.load %arg5[%c0_8, %c0_9] : memref<32x128xbf16, #tpu.memory_space<vmem>>, vector<32x128xbf16>
    tpu.vector_store %arg5[%c0_8, %c0_9], %11 {strides = array<i32>} : memref<32x128xbf16, #tpu.memory_space<vmem>>, vector<32x128xbf16>,
    return
  }
  func.func @transform_0(%arg0: i32) -> (i32, i32) {
    %c0_i32 = arith.constant 0 : i32
    %c0_i32_0 = arith.constant 0 : i32
    return %arg0, %c0_i32 : i32, i32
  }
  func.func @transform_1(%arg0: i32) -> (i32, i32) {
    %c0_i32 = arith.constant 0 : i32
    %c0_i32_0 = arith.constant 0 : i32
    %c0_i32_1 = arith.constant 0 : i32
    return %c0_i32, %c0_i32_0 : i32, i32
  }
  func.func @transform_2(%arg0: i32) -> (i32, i32) {
    %c0_i32 = arith.constant 0 : i32
    %c0_i32_0 = arith.constant 0 : i32
    %c0_i32_1 = arith.constant 0 : i32
    return %c0_i32, %c0_i32_0 : i32, i32
  }
  func.func @transform_3(%arg0: i32) -> (i32, i32) {
    %c0_i32 = arith.constant 0 : i32
    %c0_i32_0 = arith.constant 0 : i32
    %c0_i32_1 = arith.constant 0 : i32
    return %c0_i32, %c0_i32_0 : i32, i32
  }
  func.func @transform_4(%arg0: i32) -> (i32, i32) {
    %c0_i32 = arith.constant 0 : i32
    %c0_i32_0 = arith.constant 0 : i32
    return %arg0, %c0_i32 : i32, i32
  }
}

module attributes {stable_mosaic.version = 11 : i64} {
  func.func @_matmul_bn_relu_kernel(%arg0: i32, %arg1: memref<8x1152xbf16, #tpu.memory_space<vmem>>, %arg2: memref<1152x256xbf16, #tpu.memory_space<vmem>>, %arg3: memref<1x256xf32, #tpu.memory_space<vmem>>, %arg4: memref<1x256xf32, #tpu.memory_space<vmem>>, %arg5: memref<8x256xbf16, #tpu.memory_space<vmem>>) attributes {dimension_semantics = [#tpu.dimension_semantics<parallel>], iteration_bounds = array<i64: 1>, scalar_prefetch = 0 : i64, scratch_operands = 0 : i64, tpu.core_type = #tpu.core_type<tc>, window_params = [{transform_indices = @transform_0, window_bounds = array<i64: 8, 1152>}, {pipeline_mode = #tpu.pipeline_mode<synchronous>, transform_indices = @transform_1, window_bounds = array<i64: 1152, 256>}, {pipeline_mode = #tpu.pipeline_mode<synchronous>, transform_indices = @transform_2, window_bounds = array<i64: 1, 256>}, {pipeline_mode = #tpu.pipeline_mode<synchronous>, transform_indices = @transform_3, window_bounds = array<i64: 1, 256>}, {transform_indices = @transform_4, window_bounds = array<i64: 8, 256>}]} {
    %c0 = arith.constant 0 : index
    %c0_0 = arith.constant 0 : index
    %0 = vector.load %arg1[%c0, %c0_0] : memref<8x1152xbf16, #tpu.memory_space<vmem>>, vector<8x1152xbf16>
    %c0_1 = arith.constant 0 : index
    %c0_2 = arith.constant 0 : index
    %1 = vector.load %arg2[%c0_1, %c0_2] : memref<1152x256xbf16, #tpu.memory_space<vmem>>, vector<1152x256xbf16>
    %cst = arith.constant dense<0.000000e+00> : vector<8x256xf32>
    %2 = tpu.matmul %0, %1, %cst {dimension_numbers = #tpu.dot_dimension_numbers<[1], [0], [0], [1], [0, 0, 1, 1], [], []>} : vector<8x1152xbf16>, vector<1152x256xbf16>, vector<8x256xf32> -> vector<8x256xf32>
    %c0_3 = arith.constant 0 : index
    %c0_4 = arith.constant 0 : index
    %3 = vector.load %arg3[%c0_3, %c0_4] : memref<1x256xf32, #tpu.memory_space<vmem>>, vector<1x256xf32>
    %4 = vector.broadcast %3 : vector<1x256xf32> to vector<8x256xf32>
    %5 = arith.mulf %2, %4 : vector<8x256xf32>
    %c0_5 = arith.constant 0 : index
    %c0_6 = arith.constant 0 : index
    %6 = vector.load %arg4[%c0_5, %c0_6] : memref<1x256xf32, #tpu.memory_space<vmem>>, vector<1x256xf32>
    %7 = vector.broadcast %6 : vector<1x256xf32> to vector<8x256xf32>
    %8 = arith.addf %5, %7 : vector<8x256xf32>
    %cst_7 = arith.constant 0.000000e+00 : f32
    %9 = vector.broadcast %cst_7 : f32 to vector<8x256xf32>
    %10 = arith.maximumf %8, %9 : vector<8x256xf32>
    %11 = arith.truncf %10 : vector<8x256xf32> to vector<8x256xbf16>
    %c0_8 = arith.constant 0 : index
    %c0_9 = arith.constant 0 : index
    %12 = vector.load %arg5[%c0_8, %c0_9] : memref<8x256xbf16, #tpu.memory_space<vmem>>, vector<8x256xbf16>
    tpu.vector_store %arg5[%c0_8, %c0_9], %11 {strides = array<i32>} : memref<8x256xbf16, #tpu.memory_space<vmem>>, vector<8x256xbf16>,
    return
  }
  func.func @transform_0(%arg0: i32) -> (i32, i32) {
    %c0_i32 = arith.constant 0 : i32
    %c0_i32_0 = arith.constant 0 : i32
    return %arg0, %c0_i32 : i32, i32
  }
  func.func @transform_1(%arg0: i32) -> (i32, i32) {
    %c0_i32 = arith.constant 0 : i32
    %c0_i32_0 = arith.constant 0 : i32
    %c0_i32_1 = arith.constant 0 : i32
    return %c0_i32, %c0_i32_0 : i32, i32
  }
  func.func @transform_2(%arg0: i32) -> (i32, i32) {
    %c0_i32 = arith.constant 0 : i32
    %c0_i32_0 = arith.constant 0 : i32
    %c0_i32_1 = arith.constant 0 : i32
    return %c0_i32, %c0_i32_0 : i32, i32
  }
  func.func @transform_3(%arg0: i32) -> (i32, i32) {
    %c0_i32 = arith.constant 0 : i32
    %c0_i32_0 = arith.constant 0 : i32
    %c0_i32_1 = arith.constant 0 : i32
    return %c0_i32, %c0_i32_0 : i32, i32
  }
  func.func @transform_4(%arg0: i32) -> (i32, i32) {
    %c0_i32 = arith.constant 0 : i32
    %c0_i32_0 = arith.constant 0 : i32
    return %arg0, %c0_i32 : i32, i32
  }
}

module attributes {stable_mosaic.version = 11 : i64} {
  func.func @_mean_linear_kernel(%arg0: i32, %arg1: memref<2x4x256xbf16, #tpu.memory_space<vmem>>, %arg2: memref<256x128xf32, #tpu.memory_space<vmem>>, %arg3: memref<1x128xf32, #tpu.memory_space<vmem>>, %arg4: memref<2x128xf32, #tpu.memory_space<vmem>>) attributes {dimension_semantics = [#tpu.dimension_semantics<parallel>], iteration_bounds = array<i64: 1>, scalar_prefetch = 0 : i64, scratch_operands = 0 : i64, tpu.core_type = #tpu.core_type<tc>, window_params = [{pipeline_mode = #tpu.pipeline_mode<synchronous>, transform_indices = @transform_0, window_bounds = array<i64: 2, 4, 256>}, {pipeline_mode = #tpu.pipeline_mode<synchronous>, transform_indices = @transform_1, window_bounds = array<i64: 256, 128>}, {pipeline_mode = #tpu.pipeline_mode<synchronous>, transform_indices = @transform_2, window_bounds = array<i64: 1, 128>}, {pipeline_mode = #tpu.pipeline_mode<synchronous>, transform_indices = @transform_3, window_bounds = array<i64: 2, 128>}]} {
    %c0 = arith.constant 0 : index
    %c0_0 = arith.constant 0 : index
    %c0_1 = arith.constant 0 : index
    %0 = vector.load %arg1[%c0, %c0_0, %c0_1] : memref<2x4x256xbf16, #tpu.memory_space<vmem>>, vector<2x4x256xbf16>
    %1 = arith.extf %0 : vector<2x4x256xbf16> to vector<2x4x256xf32>
    %cst = arith.constant dense<0.000000e+00> : vector<2x256xf32>
    %2 = vector.multi_reduction <add>, %1, %cst [1] : vector<2x4x256xf32> to vector<2x256xf32>
    %cst_2 = arith.constant 4.000000e+00 : f32
    %3 = vector.broadcast %cst_2 : f32 to vector<2x256xf32>
    %4 = arith.divf %2, %3 : vector<2x256xf32>
    %c0_3 = arith.constant 0 : index
    %c0_4 = arith.constant 0 : index
    %5 = vector.load %arg2[%c0_3, %c0_4] : memref<256x128xf32, #tpu.memory_space<vmem>>, vector<256x128xf32>
    %cst_5 = arith.constant dense<0.000000e+00> : vector<2x128xf32>
    %6 = tpu.matmul %4, %5, %cst_5 {dimension_numbers = #tpu.dot_dimension_numbers<[1], [0], [0], [1], [0, 0, 1, 1], [], []>} : vector<2x256xf32>, vector<256x128xf32>, vector<2x128xf32> -> vector<2x128xf32>
    %c0_6 = arith.constant 0 : index
    %c0_7 = arith.constant 0 : index
    %7 = vector.load %arg3[%c0_6, %c0_7] : memref<1x128xf32, #tpu.memory_space<vmem>>, vector<1x128xf32>
    %8 = vector.broadcast %7 : vector<1x128xf32> to vector<2x128xf32>
    %9 = arith.addf %6, %8 : vector<2x128xf32>
    %c0_8 = arith.constant 0 : index
    %c0_9 = arith.constant 0 : index
    %10 = vector.load %arg4[%c0_8, %c0_9] : memref<2x128xf32, #tpu.memory_space<vmem>>, vector<2x128xf32>
    tpu.vector_store %arg4[%c0_8, %c0_9], %9 {strides = array<i32>} : memref<2x128xf32, #tpu.memory_space<vmem>>, vector<2x128xf32>,
    return
  }
  func.func @transform_0(%arg0: i32) -> (i32, i32, i32) {
    %c0_i32 = arith.constant 0 : i32
    %c0_i32_0 = arith.constant 0 : i32
    %c0_i32_1 = arith.constant 0 : i32
    %c0_i32_2 = arith.constant 0 : i32
    return %c0_i32, %c0_i32_0, %c0_i32_1 : i32, i32, i32
  }
  func.func @transform_1(%arg0: i32) -> (i32, i32) {
    %c0_i32 = arith.constant 0 : i32
    %c0_i32_0 = arith.constant 0 : i32
    %c0_i32_1 = arith.constant 0 : i32
    return %c0_i32, %c0_i32_0 : i32, i32
  }
  func.func @transform_2(%arg0: i32) -> (i32, i32) {
    %c0_i32 = arith.constant 0 : i32
    %c0_i32_0 = arith.constant 0 : i32
    %c0_i32_1 = arith.constant 0 : i32
    return %c0_i32, %c0_i32_0 : i32, i32
  }
  func.func @transform_3(%arg0: i32) -> (i32, i32) {
    %c0_i32 = arith.constant 0 : i32
    %c0_i32_0 = arith.constant 0 : i32
    %c0_i32_1 = arith.constant 0 : i32
    return %c0_i32, %c0_i32_0 : i32, i32
  }
}

</mosaic_0001>

<llo_original>
// kernel: div.7
$region0: #{div.7}
  #allocation0 [shape = 's32[1]{0}', space=sflag, size = 0x4, scoped, tag = 'scoped memory for div.7']
  %s0 = inlined_call_operand.<no memory space> [shape: f32[], index: 0, kind: input, shape index: {}]
  %s1 = inlined_call_operand.vmem [shape: f32[32], index: 1, kind: output, shape index: {}]
  %v2 = vstv %s0
  %3 = vst [vmem:[%s1] sm:$0x1] %v2

// kernel: _lambda_.6
$region0: #{_lambda_.6}
  #allocation0 [shape = 'u32[]', space=smem, size = 0x4, offset = 0x4, fixed_abs, tag = 'smem constant byte address 0x4 - core index']
  #allocation1 [shape = 'u32[144,128]{1,0:T(1,128)}', space=vmem, size = 0x12000, scoped, tag = 'internal scratch']
  %s0 = inlined_call_operand.vmem [shape: bf16[2048,256], index: 0, kind: input, shape index: {}]
  %s1 = inlined_call_operand.vmem [shape: bf16[256,128], index: 1, kind: input, shape index: {}]
  %s2 = inlined_call_operand.vmem [shape: f32[1,128], index: 2, kind: input, shape index: {}]
  %s3 = inlined_call_operand.vmem [shape: f32[1,128], index: 3, kind: input, shape index: {}]
  %s4 = inlined_call_operand.vmem [shape: bf16[2048,128], index: 4, kind: output, shape index: {}]
  %s5 = sld [smem:[#allocation0]]
  $region49: #{_lambda_.6} parent=0
    _
  %s7 = ssub.s32 1, %s5
  %s8 = scalar_select 0, %s7, %s5
  loop: start=0, step=1, limit=6
  $region2: #{_lambda_.6} parent=0 // loop_pre_header
    _
  $region3: #{_lambda_.6} parent=0 // loop_header
    %s10 = sphi 0, %s14
    %p11 = scmp.ge.s32.totalorder %s10, 6
    %s20 = sphi 0, %s22
    %s23 = sphi 0, %s20
    %s24 = sphi 0, %s23
    %s40 = sphi 0, %s24
    %s44 = sphi 0, %s44
    %s46 = sphi 0, %s44
    %s47 = sphi 0, %s46
    %s61 = sphi 0, %s47
    %s65 = sphi 0, %s65
    %s67 = sphi 0, %s65
    %s68 = sphi 0, %s67
    %s82 = sphi 0, %s68
    %s86 = sphi 0, %s86
    %s88 = sphi 0, %s86
    %s89 = sphi 0, %s88
    %s103 = sphi 0, %s89
    %s109 = sphi 0, %s111
    %s112 = sphi 0, %s109
    %s113 = sphi 0, %s112
    %s129 = sphi 0, %s113
  $region4: #{_lambda_.6} parent=0 // loop_header_branch
    %13 = sbr.rel (%p11) target = $region8
  $region5: #{_lambda_.6} parent=0 // loop_body
    %s15 = ssub.s32 %s10, 1
    %s16 = ssub.s32 %s10, 2
    %s17 = sadd.s32 %s10, 1
    %s18 = ssub.s32 %s10, %s17
    %p19 = scmp.eq.s32.totalorder %s18, 0
    %s21 = sadd.s32 %s20, 1
    %s22 = scalar_select %p19, %s20, %s21
    %p25 = pneg %p19
    %p26 = scmp.eq.s32.totalorder %s10, 3
    %p27 = por %p25, %p26
    %p28 = scmp.ne.s32.totalorder %s20, %s23
    %p29 = scmp.eq.s32.totalorder %s10, 0
    %p30 = por %p28, %p29
    %p31 = scmp.ne.s32.totalorder %s20, %s23
    %p32 = scmp.eq.s32.totalorder %s15, 3
    %p33 = por %p31, %p32
    %p34 = scmp.ne.s32.totalorder %s23, %s24
    %p35 = scmp.eq.s32.totalorder %s15, 0
    %p36 = por %p34, %p35
    %p37 = scmp.ne.s32.totalorder %s23, %s24
    %p38 = scmp.eq.s32.totalorder %s16, 3
    %p39 = por %p37, %p38
    %p41 = scmp.ne.s32.totalorder %s24, %s40
    %p42 = scmp.eq.s32.totalorder %s16, 0
    %p43 = por %p41, %p42
    %s45 = sadd.s32 %s44, 1
    %p48 = scmp.eq.s32.totalorder %s10, 3
    %p49 = scmp.ne.s32.totalorder %s44, %s46
    %p50 = scmp.eq.s32.totalorder %s10, 0
    %p51 = por %p49, %p50
    %p52 = scmp.ne.s32.totalorder %s44, %s46
    %p53 = scmp.eq.s32.totalorder %s15, 3
    %p54 = por %p52, %p53
    %p55 = scmp.ne.s32.totalorder %s46, %s47
    %p56 = scmp.eq.s32.totalorder %s15, 0
    %p57 = por %p55, %p56
    %p58 = scmp.ne.s32.totalorder %s46, %s47
    %p59 = scmp.eq.s32.totalorder %s16, 3
    %p60 = por %p58, %p59
    %p62 = scmp.ne.s32.totalorder %s47, %s61
    %p63 = scmp.eq.s32.totalorder %s16, 0
    %p64 = por %p62, %p63
    %s66 = sadd.s32 %s65, 1
    %p69 = scmp.eq.s32.totalorder %s10, 3
    %p70 = scmp.ne.s32.totalorder %s65, %s67
    %p71 = scmp.eq.s32.totalorder %s10, 0
    %p72 = por %p70, %p71
    %p73 = scmp.ne.s32.totalorder %s65, %s67
    %p74 = scmp.eq.s32.totalorder %s15, 3
    %p75 = por %p73, %p74
    %p76 = scmp.ne.s32.totalorder %s67, %s68
    %p77 = scmp.eq.s32.totalorder %s15, 0
    %p78 = por %p76, %p77
    %p79 = scmp.ne.s32.totalorder %s67, %s68
    %p80 = scmp.eq.s32.totalorder %s16, 3
    %p81 = por %p79, %p80
    %p83 = scmp.ne.s32.totalorder %s68, %s82
    %p84 = scmp.eq.s32.totalorder %s16, 0
    %p85 = por %p83, %p84
    %s87 = sadd.s32 %s86, 1
    %p90 = scmp.eq.s32.totalorder %s10, 3
    %p91 = scmp.ne.s32.totalorder %s86, %s88
    %p92 = scmp.eq.s32.totalorder %s10, 0
    %p93 = por %p91, %p92
    %p94 = scmp.ne.s32.totalorder %s86, %s88
    %p95 = scmp.eq.s32.totalorder %s15, 3
    %p96 = por %p94, %p95
    %p97 = scmp.ne.s32.totalorder %s88, %s89
    %p98 = scmp.eq.s32.totalorder %s15, 0
    %p99 = por %p97, %p98
    %p100 = scmp.ne.s32.totalorder %s88, %s89
    %p101 = scmp.eq.s32.totalorder %s16, 3
    %p102 = por %p100, %p101
    %p104 = scmp.ne.s32.totalorder %s89, %s103
    %p105 = scmp.eq.s32.totalorder %s16, 0
    %p106 = por %p104, %p105
    %s107 = ssub.s32 %s10, %s17
    %p108 = scmp.eq.s32.totalorder %s107, 0
    %s110 = sadd.s32 %s109, 1
    %s111 = scalar_select %p108, %s109, %s110
    %p114 = pneg %p108
    %p115 = scmp.eq.s32.totalorder %s10, 3
    %p116 = por %p114, %p115
    %p117 = scmp.ne.s32.totalorder %s109, %s112
    %p118 = scmp.eq.s32.totalorder %s10, 0
    %p119 = por %p117, %p118
    %p120 = scmp.ne.s32.totalorder %s109, %s112
    %p121 = scmp.eq.s32.totalorder %s15, 3
    %p122 = por %p120, %p121
    %p123 = scmp.ne.s32.totalorder %s112, %s113
    %p124 = scmp.eq.s32.totalorder %s15, 0
    %p125 = por %p123, %p124
    %p126 = scmp.ne.s32.totalorder %s112, %s113
    %p127 = scmp.eq.s32.totalorder %s16, 3
    %p128 = por %p126, %p127
    %p130 = scmp.ne.s32.totalorder %s113, %s129
    %p131 = scmp.eq.s32.totalorder %s16, 0
    %p132 = por %p130, %p131
    %p133 = scmp.le.s32.totalorder 1, %s10
    %p134 = scmp.lt.s32.totalorder %s10, 5
    %p135 = pnand %p133, %p134
    %p136 = pneg %p135
    // Predicated region
    $region9: #{_lambda_.6} parent=5 // pred_check
      _
    $region10: #{_lambda_.6} parent=5 // pred_check_branch
      %138 = sbr.rel (%p135) target = $region12
    $region11: #{_lambda_.6} parent=5 // pred_region
      %s139 = ssub.s32 %s10, 1
      // Predicated region
      $region13: #{_lambda_.6} parent=11 // pred_check
        %p140 = pneg %p57
      $region14: #{_lambda_.6} parent=11 // pred_check_branch
        %142 = sbr.rel (%p140) target = $region16
      $region15: #{_lambda_.6} parent=11 // pred_region
        _
      $region16: #{_lambda_.6} parent=11 // pred_fallthru
        _
      // Predicated region
      $region17: #{_lambda_.6} parent=11 // pred_check
        %p143 = pneg %p78
      $region18: #{_lambda_.6} parent=11 // pred_check_branch
        %145 = sbr.rel (%p143) target = $region20
      $region19: #{_lambda_.6} parent=11 // pred_region
        _
      $region20: #{_lambda_.6} parent=11 // pred_fallthru
        _
      // Predicated region
      $region21: #{_lambda_.6} parent=11 // pred_check
        %p146 = pneg %p99
      $region22: #{_lambda_.6} parent=11 // pred_check_branch
        %148 = sbr.rel (%p146) target = $region24
      $region23: #{_lambda_.6} parent=11 // pred_region
        _
      $region24: #{_lambda_.6} parent=11 // pred_fallthru
        _
    $region12: #{_lambda_.6} parent=5 // pred_fallthru
      _
    %p149 = scmp.lt.s32.totalorder %s10, 4
    // Predicated region
    $region25: #{_lambda_.6} parent=5 // pred_check
      %p150 = pneg %p149
    $region26: #{_lambda_.6} parent=5 // pred_check_branch
      %152 = sbr.rel (%p150) target = $region28
    $region27: #{_lambda_.6} parent=5 // pred_region
      // Predicated region
      $region29: #{_lambda_.6} parent=27 // pred_check
        %p153 = pneg %p30
      $region30: #{_lambda_.6} parent=27 // pred_check_branch
        %155 = sbr.rel (%p153) target = $region32
      $region31: #{_lambda_.6} parent=27 // pred_region
        %s156 = smul.u32 64, %s10
        %p157 = scmp.lt.s32.totalorder %s156, 255
        %s158 = scalar_select %p157, %s156, 255
        %s159 = smul.addr %s158, 2
        %s160 = smul.addr %s159, 4
        %s161 = scalar_lea.vmem %s0, %s160
        %s162 = smul.u32 64, %s10
      $region32: #{_lambda_.6} parent=27 // pred_fallthru
        _
    $region28: #{_lambda_.6} parent=5 // pred_fallthru
      _
    %p163 = scmp.le.s32.totalorder 1, %s10
    %p164 = scmp.lt.s32.totalorder %s10, 5
    %p165 = pnand %p163, %p164
    %p166 = pneg %p165
    // Predicated region
    $region33: #{_lambda_.6} parent=5 // pred_check
      _
    $region34: #{_lambda_.6} parent=5 // pred_check_branch
      %168 = sbr.rel (%p165) target = $region36
    $region35: #{_lambda_.6} parent=5 // pred_region
      %s169 = ssub.s32 %s10, 1
      %s170 = smul.u32 64, %s15
      %p171 = scmp.lt.s32.totalorder %s170, 255
      %s172 = scalar_select %p171, %s170, 255
      %s173 = smul.addr %s172, 2
      %s174 = smul.addr %s173, 4
      %s175 = scalar_lea.vmem %s0, %s174
      %p176 = pneg %p36
      %p177 = pneg %p33
      %p178 = pneg %p57
      %p179 = pneg %p54
      %p180 = pneg %p78
      %p181 = pneg %p75
      %p182 = pneg %p99
      %p183 = pneg %p96
      %p184 = pneg %p125
      %p185 = pneg %p122
      %s186 = smul.u32 64, %s15
      %p187 = scmp.lt.s32.totalorder %s186, 255
      %s188 = scalar_select %p187, %s186, 255
      %s189 = smul.addr %s188, 4
      %s190 = scalar_lea.vmem %s4, %s189
      %s191 = smul.u32 64, %s15
      %p192 = scmp.lt.s32.totalorder %s191, 255
      %s193 = scalar_select %p192, %s191, 255
      %s194 = smul.addr %s193, 2
      %s195 = smul.addr %s194, 4
      %s196 = scalar_lea.vmem %s0, %s195
      %s197 = smul.u32 64, %s15
      %s198 = smul.u32 64, %s15
      %p199 = scmp.lt.s32.totalorder %s198, 255
      %s200 = scalar_select %p199, %s198, 255
      %s201 = smul.addr %s200, 4
      %s202 = scalar_lea.vmem %s4, %s201
      %s203 = smul.u32 64, %s15
      %v205 = vld [vmem:[%s196] sm:$0xff]
      %v206 = vld [vmem:[%s196 + $0x8] sm:$0xff]
      %v207 = vld [vmem:[%s196 + $0x10] sm:$0xff]
      %v208 = vld [vmem:[%s196 + $0x18] sm:$0xff]
      %v209 = vld [vmem:[%s196 + $0x20] sm:$0xff]
      %v210 = vld [vmem:[%s196 + $0x28] sm:$0xff]
      %v211 = vld [vmem:[%s196 + $0x30] sm:$0xff]
      %v212 = vld [vmem:[%s196 + $0x38] sm:$0xff]
      %v213 = vld [vmem:[%s196 + $0x40] sm:$0xff]
      %v214 = vld [vmem:[%s196 + $0x48] sm:$0xff]
      %v215 = vld [vmem:[%s196 + $0x50] sm:$0xff]
      %v216 = vld [vmem:[%s196 + $0x58] sm:$0xff]
      %v217 = vld [vmem:[%s196 + $0x60] sm:$0xff]
      %v218 = vld [vmem:[%s196 + $0x68] sm:$0xff]
      %v219 = vld [vmem:[%s196 + $0x70] sm:$0xff]
      %v220 = vld [vmem:[%s196 + $0x78] sm:$0xff]
      %v221 = vld [vmem:[%s196 + $0x80] sm:$0xff]
      %v222 = vld [vmem:[%s196 + $0x88] sm:$0xff]
      %v223 = vld [vmem:[%s196 + $0x90] sm:$0xff]
      %v224 = vld [vmem:[%s196 + $0x98] sm:$0xff]
      %v225 = vld [vmem:[%s196 + $0xa0] sm:$0xff]
      %v226 = vld [vmem:[%s196 + $0xa8] sm:$0xff]
      %v227 = vld [vmem:[%s196 + $0xb0] sm:$0xff]
      %v228 = vld [vmem:[%s196 + $0xb8] sm:$0xff]
      %v229 = vld [vmem:[%s196 + $0xc0] sm:$0xff]
      %v230 = vld [vmem:[%s196 + $0xc8] sm:$0xff]
      %v231 = vld [vmem:[%s196 + $0xd0] sm:$0xff]
      %v232 = vld [vmem:[%s196 + $0xd8] sm:$0xff]
      %v233 = vld [vmem:[%s196 + $0xe0] sm:$0xff]
      %v234 = vld [vmem:[%s196 + $0xe8] sm:$0xff]
      %v235 = vld [vmem:[%s196 + $0xf0] sm:$0xff]
      %v236 = vld [vmem:[%s196 + $0xf8] sm:$0xff]
      %v237 = vld [vmem:[%s196 + $0x100] sm:$0xff]
      %v238 = vld [vmem:[%s196 + $0x108] sm:$0xff]
      %v239 = vld [vmem:[%s196 + $0x110] sm:$0xff]
      %v240 = vld [vmem:[%s196 + $0x118] sm:$0xff]
      %v241 = vld [vmem:[%s196 + $0x120] sm:$0xff]
      %v242 = vld [vmem:[%s196 + $0x128] sm:$0xff]
      %v243 = vld [vmem:[%s196 + $0x130] sm:$0xff]
      %v244 = vld [vmem:[%s196 + $0x138] sm:$0xff]
      %v245 = vld [vmem:[%s196 + $0x140] sm:$0xff]
      %v246 = vld [vmem:[%s196 + $0x148] sm:$0xff]
      %v247 = vld [vmem:[%s196 + $0x150] sm:$0xff]
      %v248 = vld [vmem:[%s196 + $0x158] sm:$0xff]
      %v249 = vld [vmem:[%s196 + $0x160] sm:$0xff]
      %v250 = vld [vmem:[%s196 + $0x168] sm:$0xff]
      %v251 = vld [vmem:[%s196 + $0x170] sm:$0xff]
      %v252 = vld [vmem:[%s196 + $0x178] sm:$0xff]
      %v253 = vld [vmem:[%s196 + $0x180] sm:$0xff]
      %v254 = vld [vmem:[%s196 + $0x188] sm:$0xff]
      %v255 = vld [vmem:[%s196 + $0x190] sm:$0xff]
      %v256 = vld [vmem:[%s196 + $0x198] sm:$0xff]
      %v257 = vld [vmem:[%s196 + $0x1a0] sm:$0xff]
      %v258 = vld [vmem:[%s196 + $0x1a8] sm:$0xff]
      %v259 = vld [vmem:[%s196 + $0x1b0] sm:$0xff]
      %v260 = vld [vmem:[%s196 + $0x1b8] sm:$0xff]
      %v261 = vld [vmem:[%s196 + $0x1c0] sm:$0xff]
      %v262 = vld [vmem:[%s196 + $0x1c8] sm:$0xff]
      %v263 = vld [vmem:[%s196 + $0x1d0] sm:$0xff]
      %v264 = vld [vmem:[%s196 + $0x1d8] sm:$0xff]
      %v265 = vld [vmem:[%s196 + $0x1e0] sm:$0xff]
      %v266 = vld [vmem:[%s196 + $0x1e8] sm:$0xff]
      %v267 = vld [vmem:[%s196 + $0x1f0] sm:$0xff]
      %v268 = vld [vmem:[%s196 + $0x1f8] sm:$0xff]
      %v269 = vld [vmem:[%s1] sm:$0xf]
      %v270 = vld [vmem:[%s1 + $0x4] sm:$0xf]
      %v271 = vld [vmem:[%s1 + $0x8] sm:$0xf]
      %v272 = vld [vmem:[%s1 + $0xc] sm:$0xf]
      %v273 = vld [vmem:[%s1 + $0x10] sm:$0xf]
      %v274 = vld [vmem:[%s1 + $0x14] sm:$0xf]
      %v275 = vld [vmem:[%s1 + $0x18] sm:$0xf]
      %v276 = vld [vmem:[%s1 + $0x1c] sm:$0xf]
      %v277 = vld [vmem:[%s1 + $0x20] sm:$0xf]
      %v278 = vld [vmem:[%s1 + $0x24] sm:$0xf]
      %v279 = vld [vmem:[%s1 + $0x28] sm:$0xf]
      %v280 = vld [vmem:[%s1 + $0x2c] sm:$0xf]
      %v281 = vld [vmem:[%s1 + $0x30] sm:$0xf]
      %v282 = vld [vmem:[%s1 + $0x34] sm:$0xf]
      %v283 = vld [vmem:[%s1 + $0x38] sm:$0xf]
      %v284 = vld [vmem:[%s1 + $0x3c] sm:$0xf]
      %v285 = vld [vmem:[%s1 + $0x40] sm:$0xf]
      %v286 = vld [vmem:[%s1 + $0x44] sm:$0xf]
      %v287 = vld [vmem:[%s1 + $0x48] sm:$0xf]
      %v288 = vld [vmem:[%s1 + $0x4c] sm:$0xf]
      %v289 = vld [vmem:[%s1 + $0x50] sm:$0xf]
      %v290 = vld [vmem:[%s1 + $0x54] sm:$0xf]
      %v291 = vld [vmem:[%s1 + $0x58] sm:$0xf]
      %v292 = vld [vmem:[%s1 + $0x5c] sm:$0xf]
      %v293 = vld [vmem:[%s1 + $0x60] sm:$0xf]
      %v294 = vld [vmem:[%s1 + $0x64] sm:$0xf]
      %v295 = vld [vmem:[%s1 + $0x68] sm:$0xf]
      %v296 = vld [vmem:[%s1 + $0x6c] sm:$0xf]
      %v297 = vld [vmem:[%s1 + $0x70] sm:$0xf]
      %v298 = vld [vmem:[%s1 + $0x74] sm:$0xf]
      %v299 = vld [vmem:[%s1 + $0x78] sm:$0xf]
      %v300 = vld [vmem:[%s1 + $0x7c] sm:$0xf]
      %v365 = vunpack.c.l.b16 %v205
      %v366 = vunpack.c.h.b16 %v205
      %v367 = vunpack.c.l.b16 %v206
      %v368 = vunpack.c.h.b16 %v206
      %v369 = vunpack.c.l.b16 %v207
      %v370 = vunpack.c.h.b16 %v207
      %v371 = vunpack.c.l.b16 %v208
      %v372 = vunpack.c.h.b16 %v208
      %v373 = vunpack.c.l.b16 %v209
      %v374 = vunpack.c.h.b16 %v209
      %v375 = vunpack.c.l.b16 %v210
      %v376 = vunpack.c.h.b16 %v210
      %v377 = vunpack.c.l.b16 %v211
      %v378 = vunpack.c.h.b16 %v211
      %v379 = vunpack.c.l.b16 %v212
      %v380 = vunpack.c.h.b16 %v212
      %v381 = vunpack.c.l.b16 %v213
      %v382 = vunpack.c.h.b16 %v213
      %v383 = vunpack.c.l.b16 %v214
      %v384 = vunpack.c.h.b16 %v214
      %v385 = vunpack.c.l.b16 %v215
      %v386 = vunpack.c.h.b16 %v215
      %v387 = vunpack.c.l.b16 %v216
      %v388 = vunpack.c.h.b16 %v216
      %v389 = vunpack.c.l.b16 %v217
      %v390 = vunpack.c.h.b16 %v217
      %v391 = vunpack.c.l.b16 %v218
      %v392 = vunpack.c.h.b16 %v218
      %v393 = vunpack.c.l.b16 %v219
      %v394 = vunpack.c.h.b16 %v219
      %v395 = vunpack.c.l.b16 %v220
      %v396 = vunpack.c.h.b16 %v220
      %v397 = vunpack.c.l.b16 %v221
      %v398 = vunpack.c.h.b16 %v221
      %v399 = vunpack.c.l.b16 %v222
      %v400 = vunpack.c.h.b16 %v222
      %v401 = vunpack.c.l.b16 %v223
      %v402 = vunpack.c.h.b16 %v223
      %v403 = vunpack.c.l.b16 %v224
      %v404 = vunpack.c.h.b16 %v224
      %v405 = vunpack.c.l.b16 %v225
      %v406 = vunpack.c.h.b16 %v225
      %v407 = vunpack.c.l.b16 %v226
      %v408 = vunpack.c.h.b16 %v226
      %v409 = vunpack.c.l.b16 %v227
      %v410 = vunpack.c.h.b16 %v227
      %v411 = vunpack.c.l.b16 %v228
      %v412 = vunpack.c.h.b16 %v228
      %v413 = vunpack.c.l.b16 %v229
      %v414 = vunpack.c.h.b16 %v229
      %v415 = vunpack.c.l.b16 %v230
      %v416 = vunpack.c.h.b16 %v230
      %v417 = vunpack.c.l.b16 %v231
      %v418 = vunpack.c.h.b16 %v231
      %v419 = vunpack.c.l.b16 %v232
      %v420 = vunpack.c.h.b16 %v232
      %v421 = vunpack.c.l.b16 %v233
      %v422 = vunpack.c.h.b16 %v233
      %v423 = vunpack.c.l.b16 %v234
      %v424 = vunpack.c.h.b16 %v234
      %v425 = vunpack.c.l.b16 %v235
      %v426 = vunpack.c.h.b16 %v235
      %v427 = vunpack.c.l.b16 %v236
      %v428 = vunpack.c.h.b16 %v236
      %v429 = vunpack.c.l.b16 %v237
      %v430 = vunpack.c.h.b16 %v237
      %v431 = vunpack.c.l.b16 %v238
      %v432 = vunpack.c.h.b16 %v238
      %v433 = vunpack.c.l.b16 %v239
      %v434 = vunpack.c.h.b16 %v239
      %v435 = vunpack.c.l.b16 %v240
      %v436 = vunpack.c.h.b16 %v240
      %v437 = vunpack.c.l.b16 %v241
      %v438 = vunpack.c.h.b16 %v241
      %v439 = vunpack.c.l.b16 %v242
      %v440 = vunpack.c.h.b16 %v242
      %v441 = vunpack.c.l.b16 %v243
      %v442 = vunpack.c.h.b16 %v243
      %v443 = vunpack.c.l.b16 %v244
      %v444 = vunpack.c.h.b16 %v244
      %v445 = vunpack.c.l.b16 %v245
      %v446 = vunpack.c.h.b16 %v245
      %v447 = vunpack.c.l.b16 %v246
      %v448 = vunpack.c.h.b16 %v246
      %v449 = vunpack.c.l.b16 %v247
      %v450 = vunpack.c.h.b16 %v247
      %v451 = vunpack.c.l.b16 %v248
      %v452 = vunpack.c.h.b16 %v248
      %v453 = vunpack.c.l.b16 %v249
      %v454 = vunpack.c.h.b16 %v249
      %v455 = vunpack.c.l.b16 %v250
      %v456 = vunpack.c.h.b16 %v250
      %v457 = vunpack.c.l.b16 %v251
      %v458 = vunpack.c.h.b16 %v251
      %v459 = vunpack.c.l.b16 %v252
      %v460 = vunpack.c.h.b16 %v252
      %v461 = vunpack.c.l.b16 %v253
      %v462 = vunpack.c.h.b16 %v253
      %v463 = vunpack.c.l.b16 %v254
      %v464 = vunpack.c.h.b16 %v254
      %v465 = vunpack.c.l.b16 %v255
      %v466 = vunpack.c.h.b16 %v255
      %v467 = vunpack.c.l.b16 %v256
      %v468 = vunpack.c.h.b16 %v256
      %v469 = vunpack.c.l.b16 %v257
      %v470 = vunpack.c.h.b16 %v257
      %v471 = vunpack.c.l.b16 %v258
      %v472 = vunpack.c.h.b16 %v258
      %v473 = vunpack.c.l.b16 %v259
      %v474 = vunpack.c.h.b16 %v259
      %v475 = vunpack.c.l.b16 %v260
      %v476 = vunpack.c.h.b16 %v260
      %v477 = vunpack.c.l.b16 %v261
      %v478 = vunpack.c.h.b16 %v261
      %v479 = vunpack.c.l.b16 %v262
      %v480 = vunpack.c.h.b16 %v262
      %v481 = vunpack.c.l.b16 %v263
      %v482 = vunpack.c.h.b16 %v263
      %v483 = vunpack.c.l.b16 %v264
      %v484 = vunpack.c.h.b16 %v264
      %v485 = vunpack.c.l.b16 %v265
      %v486 = vunpack.c.h.b16 %v265
      %v487 = vunpack.c.l.b16 %v266
      %v488 = vunpack.c.h.b16 %v266
      %v489 = vunpack.c.l.b16 %v267
      %v490 = vunpack.c.h.b16 %v267
      %v491 = vunpack.c.l.b16 %v268
      %v492 = vunpack.c.h.b16 %v268
      %v493 = vpack.c.b16 %v367, %v365
      %v494 = vpack.c.b16 %v368, %v366
      %v495 = vpack.c.b16 %v371, %v369
      %v496 = vpack.c.b16 %v372, %v370
      %v497 = vpack.c.b16 %v375, %v373
      %v498 = vpack.c.b16 %v376, %v374
      %v499 = vpack.c.b16 %v379, %v377
      %v500 = vpack.c.b16 %v380, %v378
      %v501 = vpack.c.b16 %v383, %v381
      %v502 = vpack.c.b16 %v384, %v382
      %v503 = vpack.c.b16 %v387, %v385
      %v504 = vpack.c.b16 %v388, %v386
      %v505 = vpack.c.b16 %v391, %v389
      %v506 = vpack.c.b16 %v392, %v390
      %v507 = vpack.c.b16 %v395, %v393
      %v508 = vpack.c.b16 %v396, %v394
      %v509 = vpack.c.b16 %v399, %v397
      %v510 = vpack.c.b16 %v400, %v398
      %v511 = vpack.c.b16 %v403, %v401
      %v512 = vpack.c.b16 %v404, %v402
      %v513 = vpack.c.b16 %v407, %v405
      %v514 = vpack.c.b16 %v408, %v406
      %v515 = vpack.c.b16 %v411, %v409
      %v516 = vpack.c.b16 %v412, %v410
      %v517 = vpack.c.b16 %v415, %v413
      %v518 = vpack.c.b16 %v416, %v414
      %v519 = vpack.c.b16 %v419, %v417
      %v520 = vpack.c.b16 %v420, %v418
      %v521 = vpack.c.b16 %v423, %v421
      %v522 = vpack.c.b16 %v424, %v422
      %v523 = vpack.c.b16 %v427, %v425
      %v524 = vpack.c.b16 %v428, %v426
      %v525 = vpack.c.b16 %v431, %v429
      %v526 = vpack.c.b16 %v432, %v430
      %v527 = vpack.c.b16 %v435, %v433
      %v528 = vpack.c.b16 %v436, %v434
      %v529 = vpack.c.b16 %v439, %v437
      %v530 = vpack.c.b16 %v440, %v438
      %v531 = vpack.c.b16 %v443, %v441
      %v532 = vpack.c.b16 %v444, %v442
      %v533 = vpack.c.b16 %v447, %v445
      %v534 = vpack.c.b16 %v448, %v446
      %v535 = vpack.c.b16 %v451, %v449
      %v536 = vpack.c.b16 %v452, %v450
      %v537 = vpack.c.b16 %v455, %v453
      %v538 = vpack.c.b16 %v456, %v454
      %v539 = vpack.c.b16 %v459, %v457
      %v540 = vpack.c.b16 %v460, %v458
      %v541 = vpack.c.b16 %v463, %v461
      %v542 = vpack.c.b16 %v464, %v462
      %v543 = vpack.c.b16 %v467, %v465
      %v544 = vpack.c.b16 %v468, %v466
      %v545 = vpack.c.b16 %v471, %v469
      %v546 = vpack.c.b16 %v472, %v470
      %v547 = vpack.c.b16 %v475, %v473
      %v548 = vpack.c.b16 %v476, %v474
      %v549 = vpack.c.b16 %v479, %v477
      %v550 = vpack.c.b16 %v480, %v478
      %v551 = vpack.c.b16 %v483, %v481
      %v552 = vpack.c.b16 %v484, %v482
      %v553 = vpack.c.b16 %v487, %v485
      %v554 = vpack.c.b16 %v488, %v486
      %v555 = vpack.c.b16 %v491, %v489
      %v556 = vpack.c.b16 %v492, %v490
      %v653 = vunpack.c.l.b16 %v269
      %v654 = vunpack.c.l.b16 %v270
      %v655 = vunpack.c.l.b16 %v271
      %v656 = vunpack.c.l.b16 %v272
      %v657 = vunpack.c.l.b16 %v273
      %v658 = vunpack.c.l.b16 %v274
      %v659 = vunpack.c.l.b16 %v275
      %v660 = vunpack.c.l.b16 %v276
      %v661 = vunpack.c.l.b16 %v277
      %v662 = vunpack.c.l.b16 %v278
      %v663 = vunpack.c.l.b16 %v279
      %v664 = vunpack.c.l.b16 %v280
      %v665 = vunpack.c.l.b16 %v281
      %v666 = vunpack.c.l.b16 %v282
      %v667 = vunpack.c.l.b16 %v283
      %v668 = vunpack.c.l.b16 %v284
      %v669 = vunpack.c.l.b16 %v285
      %v670 = vunpack.c.l.b16 %v286
      %v671 = vunpack.c.l.b16 %v287
      %v672 = vunpack.c.l.b16 %v288
      %v673 = vunpack.c.l.b16 %v289
      %v674 = vunpack.c.l.b16 %v290
      %v675 = vunpack.c.l.b16 %v291
      %v676 = vunpack.c.l.b16 %v292
      %v677 = vunpack.c.l.b16 %v293
      %v678 = vunpack.c.l.b16 %v294
      %v679 = vunpack.c.l.b16 %v295
      %v680 = vunpack.c.l.b16 %v296
      %v681 = vunpack.c.l.b16 %v297
      %v682 = vunpack.c.l.b16 %v298
      %v683 = vunpack.c.l.b16 %v299
      %v684 = vunpack.c.l.b16 %v300
      %v685 = vpack.c.b16 %v654, %v653
      %v686 = vpack.c.b16 %v656, %v655
      %v687 = vpack.c.b16 %v658, %v657
      %v688 = vpack.c.b16 %v660, %v659
      %v689 = vpack.c.b16 %v662, %v661
      %v690 = vpack.c.b16 %v664, %v663
      %v691 = vpack.c.b16 %v666, %v665
      %v692 = vpack.c.b16 %v668, %v667
      %v693 = vpack.c.b16 %v670, %v669
      %v694 = vpack.c.b16 %v672, %v671
      %v695 = vpack.c.b16 %v674, %v673
      %v696 = vpack.c.b16 %v676, %v675
      %v697 = vpack.c.b16 %v678, %v677
      %v698 = vpack.c.b16 %v680, %v679
      %v699 = vpack.c.b16 %v682, %v681
      %v700 = vpack.c.b16 %v684, %v683
      %717 = vmatprep.subr.bf16.mxu0 0
      %718 = vmatpush1.bf16.msra.mxu0 %v685
      %719 = vmatprep.subr.bf16.mxu0 0
      %720 = vmatpush1.bf16.msra.mxu0 %v686
      %721 = vmatprep.subr.bf16.mxu0 0
      %722 = vmatpush1.bf16.msra.mxu0 %v687
      %723 = vmatprep.subr.bf16.mxu0 0
      %724 = vmatpush1.bf16.msra.mxu0 %v688
      %725 = vmatprep.subr.bf16.mxu0 0
      %726 = vmatpush1.bf16.msra.mxu0 %v689
      %727 = vmatprep.subr.bf16.mxu0 0
      %728 = vmatpush1.bf16.msra.mxu0 %v690
      %729 = vmatprep.subr.bf16.mxu0 0
      %730 = vmatpush1.bf16.msra.mxu0 %v691
      %731 = vmatprep.subr.bf16.mxu0 0
      %732 = vmatpush1.bf16.msra.mxu0 %v692
      %733 = vmatprep.subr.bf16.mxu0 0
      %734 = vmatpush1.bf16.msra.mxu0 %v693
      %735 = vmatprep.subr.bf16.mxu0 0
      %736 = vmatpush1.bf16.msra.mxu0 %v694
      %737 = vmatprep.subr.bf16.mxu0 0
      %738 = vmatpush1.bf16.msra.mxu0 %v695
      %739 = vmatprep.subr.bf16.mxu0 0
      %740 = vmatpush1.bf16.msra.mxu0 %v696
      %741 = vmatprep.subr.bf16.mxu0 0
      %742 = vmatpush1.bf16.msra.mxu0 %v697
      %743 = vmatprep.subr.bf16.mxu0 0
      %744 = vmatpush1.bf16.msra.mxu0 %v698
      %745 = vmatprep.subr.bf16.mxu0 0
      %746 = vmatpush1.bf16.msra.mxu0 %v699
      %747 = vmatprep.subr.bf16.mxu0 0
      %748 = vmatpush1.bf16.msra.mxu0 %v700
      %749 = vmatprep.mubr.bf16.mxu0 %v494
      %750 = vmatmul.mubr.bf16.gmra.mrb[0].mxu0 %v493
      %v751 = vpop.f32.mrb[0].mxu0
      %v752 = vadd.f32 0.0, %v751
      %v753 = vpop.f32.mrb[0].mxu0
      %v754 = vpop.f32.mrb[0].mxu0
      %v755 = vadd.f32 0.0, %v754
      %v756 = vpop.f32.mrb[0].mxu0
      %757 = vmatprep.mubr.bf16.mxu0 %v496
      %758 = vmatmul.mubr.bf16.gmra.mrb[0].mxu0 %v495
      %v759 = vpop.f32.mrb[0].mxu0
      %v760 = vadd.f32 0.0, %v759
      %v761 = vpop.f32.mrb[0].mxu0
      %v762 = vpop.f32.mrb[0].mxu0
      %v763 = vadd.f32 0.0, %v762
      %v764 = vpop.f32.mrb[0].mxu0
      %765 = vmatprep.mubr.bf16.mxu0 %v498
      %766 = vmatmul.mubr.bf16.gmra.mrb[0].mxu0 %v497
      %v767 = vpop.f32.mrb[0].mxu0
      %v768 = vadd.f32 0.0, %v767
      %v769 = vpop.f32.mrb[0].mxu0
      %v770 = vpop.f32.mrb[0].mxu0
      %v771 = vadd.f32 0.0, %v770
      %v772 = vpop.f32.mrb[0].mxu0
      %773 = vmatprep.mubr.bf16.mxu0 %v500
      %774 = vmatmul.mubr.bf16.gmra.mrb[0].mxu0 %v499
      %v775 = vpop.f32.mrb[0].mxu0
      %v776 = vadd.f32 0.0, %v775
      %v777 = vpop.f32.mrb[0].mxu0
      %v778 = vpop.f32.mrb[0].mxu0
      %v779 = vadd.f32 0.0, %v778
      %v780 = vpop.f32.mrb[0].mxu0
      %781 = vmatprep.mubr.bf16.mxu0 %v502
      %782 = vmatmul.mubr.bf16.gmra.mrb[0].mxu0 %v501
      %v783 = vpop.f32.mrb[0].mxu0
      %v784 = vadd.f32 0.0, %v783
      %v785 = vpop.f32.mrb[0].mxu0
      %v786 = vpop.f32.mrb[0].mxu0
      %v787 = vadd.f32 0.0, %v786
      %v788 = vpop.f32.mrb[0].mxu0
      %789 = vmatprep.mubr.bf16.mxu0 %v504
      %790 = vmatmul.mubr.bf16.gmra.mrb[0].mxu0 %v503
      %v791 = vpop.f32.mrb[0].mxu0
      %v792 = vadd.f32 0.0, %v791
      %v793 = vpop.f32.mrb[0].mxu0
      %v794 = vpop.f32.mrb[0].mxu0
      %v795 = vadd.f32 0.0, %v794
      %v796 = vpop.f32.mrb[0].mxu0
      %797 = vmatprep.mubr.bf16.mxu0 %v506
      %798 = vmatmul.mubr.bf16.gmra.mrb[0].mxu0 %v505
      %v799 = vpop.f32.mrb[0].mxu0
      %v800 = vadd.f32 0.0, %v799
      %v801 = vpop.f32.mrb[0].mxu0
      %v802 = vpop.f32.mrb[0].mxu0
      %v803 = vadd.f32 0.0, %v802
      %v804 = vpop.f32.mrb[0].mxu0
      %805 = vmatprep.mubr.bf16.mxu0 %v508
      %806 = vmatmul.mubr.bf16.gmra.mrb[0].mxu0 %v507
      %v807 = vpop.f32.mrb[0].mxu0
      %v808 = vadd.f32 0.0, %v807
      %v809 = vpop.f32.mrb[0].mxu0
      %v810 = vpop.f32.mrb[0].mxu0
      %v811 = vadd.f32 0.0, %v810
      %v812 = vpop.f32.mrb[0].mxu0
      %813 = vmatprep.mubr.bf16.mxu0 %v510
      %814 = vmatmul.mubr.bf16.gmra.mrb[0].mxu0 %v509
      %v815 = vpop.f32.mrb[0].mxu0
      %v816 = vadd.f32 0.0, %v815
      %v817 = vpop.f32.mrb[0].mxu0
      %v818 = vpop.f32.mrb[0].mxu0
      %v819 = vadd.f32 0.0, %v818
      %v820 = vpop.f32.mrb[0].mxu0
      %821 = vmatprep.mubr.bf16.mxu0 %v512
      %822 = vmatmul.mubr.bf16.gmra.mrb[0].mxu0 %v511
      %v823 = vpop.f32.mrb[0].mxu0
      %v824 = vadd.f32 0.0, %v823
      %v825 = vpop.f32.mrb[0].mxu0
      %v826 = vpop.f32.mrb[0].mxu0
      %v827 = vadd.f32 0.0, %v826
      %v828 = vpop.f32.mrb[0].mxu0
      %829 = vmatprep.mubr.bf16.mxu0 %v514
      %830 = vmatmul.mubr.bf16.gmra.mrb[0].mxu0 %v513
      %v831 = vpop.f32.mrb[0].mxu0
      %v832 = vadd.f32 0.0, %v831
      %v833 = vpop.f32.mrb[0].mxu0
      %v834 = vpop.f32.mrb[0].mxu0
      %v835 = vadd.f32 0.0, %v834
      %v836 = vpop.f32.mrb[0].mxu0
      %837 = vmatprep.mubr.bf16.mxu0 %v516
      %838 = vmatmul.mubr.bf16.gmra.mrb[0].mxu0 %v515
      %v839 = vpop.f32.mrb[0].mxu0
      %v840 = vadd.f32 0.0, %v839
      %v841 = vpop.f32.mrb[0].mxu0
      %v842 = vpop.f32.mrb[0].mxu0
      %v843 = vadd.f32 0.0, %v842
      %v844 = vpop.f32.mrb[0].mxu0
      %845 = vmatprep.mubr.bf16.mxu0 %v518
      %846 = vmatmul.mubr.bf16.gmra.mrb[0].mxu0 %v517
      %v847 = vpop.f32.mrb[0].mxu0
      %v848 = vadd.f32 0.0, %v847
      %v849 = vpop.f32.mrb[0].mxu0
      %v850 = vpop.f32.mrb[0].mxu0
      %v851 = vadd.f32 0.0, %v850
      %v852 = vpop.f32.mrb[0].mxu0
      %853 = vmatprep.mubr.bf16.mxu0 %v520
      %854 = vmatmul.mubr.bf16.gmra.mrb[0].mxu0 %v519
      %v855 = vpop.f32.mrb[0].mxu0
      %v856 = vadd.f32 0.0, %v855
      %v857 = vpop.f32.mrb[0].mxu0
      %v858 = vpop.f32.mrb[0].mxu0
      %v859 = vadd.f32 0.0, %v858
      %v860 = vpop.f32.mrb[0].mxu0
      %861 = vmatprep.mubr.bf16.mxu0 %v522
      %862 = vmatmul.mubr.bf16.gmra.mrb[0].mxu0 %v521
      %v863 = vpop.f32.mrb[0].mxu0
      %v864 = vadd.f32 0.0, %v863
      %v865 = vpop.f32.mrb[0].mxu0
      %v866 = vpop.f32.mrb[0].mxu0
      %v867 = vadd.f32 0.0, %v866
      %v868 = vpop.f32.mrb[0].mxu0
      %869 = vmatprep.mubr.bf16.mxu0 %v524
      %870 = vmatmul.mubr.bf16.gmra.mrb[0].mxu0 %v523
      %v871 = vpop.f32.mrb[0].mxu0
      %v872 = vadd.f32 0.0, %v871
      %v873 = vpop.f32.mrb[0].mxu0
      %v874 = vpop.f32.mrb[0].mxu0
      %v875 = vadd.f32 0.0, %v874
      %v876 = vpop.f32.mrb[0].mxu0
      %877 = vmatprep.mubr.bf16.mxu0 %v526
      %878 = vmatmul.mubr.bf16.gmra.mrb[0].mxu0 %v525
      %v879 = vpop.f32.mrb[0].mxu0
      %v880 = vadd.f32 0.0, %v879
      %v881 = vpop.f32.mrb[0].mxu0
      %v882 = vpop.f32.mrb[0].mxu0
      %v883 = vadd.f32 0.0, %v882
      %v884 = vpop.f32.mrb[0].mxu0
      %885 = vmatprep.mubr.bf16.mxu0 %v528
      %886 = vmatmul.mubr.bf16.gmra.mrb[0].mxu0 %v527
      %v887 = vpop.f32.mrb[0].mxu0
      %v888 = vadd.f32 0.0, %v887
      %v889 = vpop.f32.mrb[0].mxu0
      %v890 = vpop.f32.mrb[0].mxu0
      %v891 = vadd.f32 0.0, %v890
      %v892 = vpop.f32.mrb[0].mxu0
      %893 = vmatprep.mubr.bf16.mxu0 %v530
      %894 = vmatmul.mubr.bf16.gmra.mrb[0].mxu0 %v529
      %v895 = vpop.f32.mrb[0].mxu0
      %v896 = vadd.f32 0.0, %v895
      %v897 = vpop.f32.mrb[0].mxu0
      %v898 = vpop.f32.mrb[0].mxu0
      %v899 = vadd.f32 0.0, %v898
      %v900 = vpop.f32.mrb[0].mxu0
      %901 = vmatprep.mubr.bf16.mxu0 %v532
      %902 = vmatmul.mubr.bf16.gmra.mrb[0].mxu0 %v531
      %v903 = vpop.f32.mrb[0].mxu0
      %v904 = vadd.f32 0.0, %v903
      %v905 = vpop.f32.mrb[0].mxu0
      %v906 = vpop.f32.mrb[0].mxu0
      %v907 = vadd.f32 0.0, %v906
      %v908 = vpop.f32.mrb[0].mxu0
      %909 = vmatprep.mubr.bf16.mxu0 %v534
      %910 = vmatmul.mubr.bf16.gmra.mrb[0].mxu0 %v533
      %v911 = vpop.f32.mrb[0].mxu0
      %v912 = vadd.f32 0.0, %v911
      %v913 = vpop.f32.mrb[0].mxu0
      %v914 = vpop.f32.mrb[0].mxu0
      %v915 = vadd.f32 0.0, %v914
      %v916 = vpop.f32.mrb[0].mxu0
      %917 = vmatprep.mubr.bf16.mxu0 %v536
      %918 = vmatmul.mubr.bf16.gmra.mrb[0].mxu0 %v535
      %v919 = vpop.f32.mrb[0].mxu0
      %v920 = vadd.f32 0.0, %v919
      %v921 = vpop.f32.mrb[0].mxu0
      %v922 = vpop.f32.mrb[0].mxu0
      %v923 = vadd.f32 0.0, %v922
      %v924 = vpop.f32.mrb[0].mxu0
      %925 = vmatprep.mubr.bf16.mxu0 %v538
      %926 = vmatmul.mubr.bf16.gmra.mrb[0].mxu0 %v537
      %v927 = vpop.f32.mrb[0].mxu0
      %v928 = vadd.f32 0.0, %v927
      %v929 = vpop.f32.mrb[0].mxu0
      %v930 = vpop.f32.mrb[0].mxu0
      %v931 = vadd.f32 0.0, %v930
      %v932 = vpop.f32.mrb[0].mxu0
      %933 = vmatprep.mubr.bf16.mxu0 %v540
      %934 = vmatmul.mubr.bf16.gmra.mrb[0].mxu0 %v539
      %v935 = vpop.f32.mrb[0].mxu0
      %v936 = vadd.f32 0.0, %v935
      %v937 = vpop.f32.mrb[0].mxu0
      %v938 = vpop.f32.mrb[0].mxu0
      %v939 = vadd.f32 0.0, %v938
      %v940 = vpop.f32.mrb[0].mxu0
      %941 = vmatprep.mubr.bf16.mxu0 %v542
      %942 = vmatmul.mubr.bf16.gmra.mrb[0].mxu0 %v541
      %v943 = vpop.f32.mrb[0].mxu0
      %v944 = vadd.f32 0.0, %v943
      %v945 = vpop.f32.mrb[0].mxu0
      %v946 = vpop.f32.mrb[0].mxu0
      %v947 = vadd.f32 0.0, %v946
      %v948 = vpop.f32.mrb[0].mxu0
      %949 = vmatprep.mubr.bf16.mxu0 %v544
      %950 = vmatmul.mubr.bf16.gmra.mrb[0].mxu0 %v543
      %v951 = vpop.f32.mrb[0].mxu0
      %v952 = vadd.f32 0.0, %v951
      %v953 = vpop.f32.mrb[0].mxu0
      %v954 = vpop.f32.mrb[0].mxu0
      %v955 = vadd.f32 0.0, %v954
      %v956 = vpop.f32.mrb[0].mxu0
      %957 = vmatprep.mubr.bf16.mxu0 %v546
      %958 = vmatmul.mubr.bf16.gmra.mrb[0].mxu0 %v545
      %v959 = vpop.f32.mrb[0].mxu0
      %v960 = vadd.f32 0.0, %v959
      %v961 = vpop.f32.mrb[0].mxu0
      %v962 = vpop.f32.mrb[0].mxu0
      %v963 = vadd.f32 0.0, %v962
      %v964 = vpop.f32.mrb[0].mxu0
      %965 = vmatprep.mubr.bf16.mxu0 %v548
      %966 = vmatmul.mubr.bf16.gmra.mrb[0].mxu0 %v547
      %v967 = vpop.f32.mrb[0].mxu0
      %v968 = vadd.f32 0.0, %v967
      %v969 = vpop.f32.mrb[0].mxu0
      %v970 = vpop.f32.mrb[0].mxu0
      %v971 = vadd.f32 0.0, %v970
      %v972 = vpop.f32.mrb[0].mxu0
      %973 = vmatprep.mubr.bf16.mxu0 %v550
      %974 = vmatmul.mubr.bf16.gmra.mrb[0].mxu0 %v549
      %v975 = vpop.f32.mrb[0].mxu0
      %v976 = vadd.f32 0.0, %v975
      %v977 = vpop.f32.mrb[0].mxu0
      %v978 = vpop.f32.mrb[0].mxu0
      %v979 = vadd.f32 0.0, %v978
      %v980 = vpop.f32.mrb[0].mxu0
      %981 = vmatprep.mubr.bf16.mxu0 %v552
      %982 = vmatmul.mubr.bf16.gmra.mrb[0].mxu0 %v551
      %v983 = vpop.f32.mrb[0].mxu0
      %v984 = vadd.f32 0.0, %v983
      %v985 = vpop.f32.mrb[0].mxu0
      %v986 = vpop.f32.mrb[0].mxu0
      %v987 = vadd.f32 0.0, %v986
      %v988 = vpop.f32.mrb[0].mxu0
      %989 = vmatprep.mubr.bf16.mxu0 %v554
      %990 = vmatmul.mubr.bf16.gmra.mrb[0].mxu0 %v553
      %v991 = vpop.f32.mrb[0].mxu0
      %v992 = vadd.f32 0.0, %v991
      %v993 = vpop.f32.mrb[0].mxu0
      %v994 = vpop.f32.mrb[0].mxu0
      %v995 = vadd.f32 0.0, %v994
      %v996 = vpop.f32.mrb[0].mxu0
      %997 = vmatprep.mubr.bf16.mxu0 %v556
      %998 = vmatmul.mubr.bf16.gmra.mrb[0].mxu0 %v555
      %v999 = vpop.f32.mrb[0].mxu0
      %v1000 = vadd.f32 0.0, %v999
      %v1001 = vpop.f32.mrb[0].mxu0
      %v1002 = vpop.f32.mrb[0].mxu0
      %v1003 = vadd.f32 0.0, %v1002
      %v1004 = vpop.f32.mrb[0].mxu0
      %1005 = vdwg.mxu0
      %v1006 = vld [vmem:[%s2] sm:$0x1]
      %v1008 = vlaneseq
      %v1009 = vshrl.u32 %v1008, 7
      %v1010 = vsub.s32 0, %v1009
      %v1011 = vrot.slane %v1006, %v1010
      %v1013 = vmul.f32 %v752, %v1011
      %v1014 = vmul.f32 %v755, %v1011
      %v1015 = vmul.f32 %v760, %v1011
      %v1016 = vmul.f32 %v763, %v1011
      %v1017 = vmul.f32 %v768, %v1011
      %v1018 = vmul.f32 %v771, %v1011
      %v1019 = vmul.f32 %v776, %v1011
      %v1020 = vmul.f32 %v779, %v1011
      %v1021 = vmul.f32 %v784, %v1011
      %v1022 = vmul.f32 %v787, %v1011
      %v1023 = vmul.f32 %v792, %v1011
      %v1024 = vmul.f32 %v795, %v1011
      %v1025 = vmul.f32 %v800, %v1011
      %v1026 = vmul.f32 %v803, %v1011
      %v1027 = vmul.f32 %v808, %v1011
      %v1028 = vmul.f32 %v811, %v1011
      %v1029 = vmul.f32 %v816, %v1011
      %v1030 = vmul.f32 %v819, %v1011
      %v1031 = vmul.f32 %v824, %v1011
      %v1032 = vmul.f32 %v827, %v1011
      %v1033 = vmul.f32 %v832, %v1011
      %v1034 = vmul.f32 %v835, %v1011
      %v1035 = vmul.f32 %v840, %v1011
      %v1036 = vmul.f32 %v843, %v1011
      %v1037 = vmul.f32 %v848, %v1011
      %v1038 = vmul.f32 %v851, %v1011
      %v1039 = vmul.f32 %v856, %v1011
      %v1040 = vmul.f32 %v859, %v1011
      %v1041 = vmul.f32 %v864, %v1011
      %v1042 = vmul.f32 %v867, %v1011
      %v1043 = vmul.f32 %v872, %v1011
      %v1044 = vmul.f32 %v875, %v1011
      %v1045 = vmul.f32 %v880, %v1011
      %v1046 = vmul.f32 %v883, %v1011
      %v1047 = vmul.f32 %v888, %v1011
      %v1048 = vmul.f32 %v891, %v1011
      %v1049 = vmul.f32 %v896, %v1011
      %v1050 = vmul.f32 %v899, %v1011
      %v1051 = vmul.f32 %v904, %v1011
      %v1052 = vmul.f32 %v907, %v1011
      %v1053 = vmul.f32 %v912, %v1011
      %v1054 = vmul.f32 %v915, %v1011
      %v1055 = vmul.f32 %v920, %v1011
      %v1056 = vmul.f32 %v923, %v1011
      %v1057 = vmul.f32 %v928, %v1011
      %v1058 = vmul.f32 %v931, %v1011
      %v1059 = vmul.f32 %v936, %v1011
      %v1060 = vmul.f32 %v939, %v1011
      %v1061 = vmul.f32 %v944, %v1011
      %v1062 = vmul.f32 %v947, %v1011
      %v1063 = vmul.f32 %v952, %v1011
      %v1064 = vmul.f32 %v955, %v1011
      %v1065 = vmul.f32 %v960, %v1011
      %v1066 = vmul.f32 %v963, %v1011
      %v1067 = vmul.f32 %v968, %v1011
      %v1068 = vmul.f32 %v971, %v1011
      %v1069 = vmul.f32 %v976, %v1011
      %v1070 = vmul.f32 %v979, %v1011
      %v1071 = vmul.f32 %v984, %v1011
      %v1072 = vmul.f32 %v987, %v1011
      %v1073 = vmul.f32 %v992, %v1011
      %v1074 = vmul.f32 %v995, %v1011
      %v1075 = vmul.f32 %v1000, %v1011
      %v1076 = vmul.f32 %v1003, %v1011
      %v1077 = vld [vmem:[%s3] sm:$0x1]
      %v1079 = vlaneseq
      %v1080 = vshrl.u32 %v1079, 7
      %v1081 = vsub.s32 0, %v1080
      %v1082 = vrot.slane %v1077, %v1081
      %v1084 = vadd.f32 %v1013, %v1082
      %v1085 = vadd.f32 %v1014, %v1082
      %v1086 = vadd.f32 %v1015, %v1082
      %v1087 = vadd.f32 %v1016, %v1082
      %v1088 = vadd.f32 %v1017, %v1082
      %v1089 = vadd.f32 %v1018, %v1082
      %v1090 = vadd.f32 %v1019, %v1082
      %v1091 = vadd.f32 %v1020, %v1082
      %v1092 = vadd.f32 %v1021, %v1082
      %v1093 = vadd.f32 %v1022, %v1082
      %v1094 = vadd.f32 %v1023, %v1082
      %v1095 = vadd.f32 %v1024, %v1082
      %v1096 = vadd.f32 %v1025, %v1082
      %v1097 = vadd.f32 %v1026, %v1082
      %v1098 = vadd.f32 %v1027, %v1082
      %v1099 = vadd.f32 %v1028, %v1082
      %v1100 = vadd.f32 %v1029, %v1082
      %v1101 = vadd.f32 %v1030, %v1082
      %v1102 = vadd.f32 %v1031, %v1082
      %v1103 = vadd.f32 %v1032, %v1082
      %v1104 = vadd.f32 %v1033, %v1082
      %v1105 = vadd.f32 %v1034, %v1082
      %v1106 = vadd.f32 %v1035, %v1082
      %v1107 = vadd.f32 %v1036, %v1082
      %v1108 = vadd.f32 %v1037, %v1082
      %v1109 = vadd.f32 %v1038, %v1082
      %v1110 = vadd.f32 %v1039, %v1082
      %v1111 = vadd.f32 %v1040, %v1082
      %v1112 = vadd.f32 %v1041, %v1082
      %v1113 = vadd.f32 %v1042, %v1082
      %v1114 = vadd.f32 %v1043, %v1082
      %v1115 = vadd.f32 %v1044, %v1082
      %v1116 = vadd.f32 %v1045, %v1082
      %v1117 = vadd.f32 %v1046, %v1082
      %v1118 = vadd.f32 %v1047, %v1082
      %v1119 = vadd.f32 %v1048, %v1082
      %v1120 = vadd.f32 %v1049, %v1082
      %v1121 = vadd.f32 %v1050, %v1082
      %v1122 = vadd.f32 %v1051, %v1082
      %v1123 = vadd.f32 %v1052, %v1082
      %v1124 = vadd.f32 %v1053, %v1082
      %v1125 = vadd.f32 %v1054, %v1082
      %v1126 = vadd.f32 %v1055, %v1082
      %v1127 = vadd.f32 %v1056, %v1082
      %v1128 = vadd.f32 %v1057, %v1082
      %v1129 = vadd.f32 %v1058, %v1082
      %v1130 = vadd.f32 %v1059, %v1082
      %v1131 = vadd.f32 %v1060, %v1082
      %v1132 = vadd.f32 %v1061, %v1082
      %v1133 = vadd.f32 %v1062, %v1082
      %v1134 = vadd.f32 %v1063, %v1082
      %v1135 = vadd.f32 %v1064, %v1082
      %v1136 = vadd.f32 %v1065, %v1082
      %v1137 = vadd.f32 %v1066, %v1082
      %v1138 = vadd.f32 %v1067, %v1082
      %v1139 = vadd.f32 %v1068, %v1082
      %v1140 = vadd.f32 %v1069, %v1082
      %v1141 = vadd.f32 %v1070, %v1082
      %v1142 = vadd.f32 %v1071, %v1082
      %v1143 = vadd.f32 %v1072, %v1082
      %v1144 = vadd.f32 %v1073, %v1082
      %v1145 = vadd.f32 %v1074, %v1082
      %v1146 = vadd.f32 %v1075, %v1082
      %v1147 = vadd.f32 %v1076, %v1082
      %v1148 = vmax.f32 %v1084, 0.0
      %v1149 = vmax.f32 %v1085, 0.0
      %v1150 = vmax.f32 %v1086, 0.0
      %v1151 = vmax.f32 %v1087, 0.0
      %v1152 = vmax.f32 %v1088, 0.0
      %v1153 = vmax.f32 %v1089, 0.0
      %v1154 = vmax.f32 %v1090, 0.0
      %v1155 = vmax.f32 %v1091, 0.0
      %v1156 = vmax.f32 %v1092, 0.0
      %v1157 = vmax.f32 %v1093, 0.0
      %v1158 = vmax.f32 %v1094, 0.0
      %v1159 = vmax.f32 %v1095, 0.0
      %v1160 = vmax.f32 %v1096, 0.0
      %v1161 = vmax.f32 %v1097, 0.0
      %v1162 = vmax.f32 %v1098, 0.0
      %v1163 = vmax.f32 %v1099, 0.0
      %v1164 = vmax.f32 %v1100, 0.0
      %v1165 = vmax.f32 %v1101, 0.0
      %v1166 = vmax.f32 %v1102, 0.0
      %v1167 = vmax.f32 %v1103, 0.0
      %v1168 = vmax.f32 %v1104, 0.0
      %v1169 = vmax.f32 %v1105, 0.0
      %v1170 = vmax.f32 %v1106, 0.0
      %v1171 = vmax.f32 %v1107, 0.0
      %v1172 = vmax.f32 %v1108, 0.0
      %v1173 = vmax.f32 %v1109, 0.0
      %v1174 = vmax.f32 %v1110, 0.0
      %v1175 = vmax.f32 %v1111, 0.0
      %v1176 = vmax.f32 %v1112, 0.0
      %v1177 = vmax.f32 %v1113, 0.0
      %v1178 = vmax.f32 %v1114, 0.0
      %v1179 = vmax.f32 %v1115, 0.0
      %v1180 = vmax.f32 %v1116, 0.0
      %v1181 = vmax.f32 %v1117, 0.0
      %v1182 = vmax.f32 %v1118, 0.0
      %v1183 = vmax.f32 %v1119, 0.0
      %v1184 = vmax.f32 %v1120, 0.0
      %v1185 = vmax.f32 %v1121, 0.0
      %v1186 = vmax.f32 %v1122, 0.0
      %v1187 = vmax.f32 %v1123, 0.0
      %v1188 = vmax.f32 %v1124, 0.0
      %v1189 = vmax.f32 %v1125, 0.0
      %v1190 = vmax.f32 %v1126, 0.0
      %v1191 = vmax.f32 %v1127, 0.0
      %v1192 = vmax.f32 %v1128, 0.0
      %v1193 = vmax.f32 %v1129, 0.0
      %v1194 = vmax.f32 %v1130, 0.0
      %v1195 = vmax.f32 %v1131, 0.0
      %v1196 = vmax.f32 %v1132, 0.0
      %v1197 = vmax.f32 %v1133, 0.0
      %v1198 = vmax.f32 %v1134, 0.0
      %v1199 = vmax.f32 %v1135, 0.0
      %v1200 = vmax.f32 %v1136, 0.0
      %v1201 = vmax.f32 %v1137, 0.0
      %v1202 = vmax.f32 %v1138, 0.0
      %v1203 = vmax.f32 %v1139, 0.0
      %v1204 = vmax.f32 %v1140, 0.0
      %v1205 = vmax.f32 %v1141, 0.0
      %v1206 = vmax.f32 %v1142, 0.0
      %v1207 = vmax.f32 %v1143, 0.0
      %v1208 = vmax.f32 %v1144, 0.0
      %v1209 = vmax.f32 %v1145, 0.0
      %v1210 = vmax.f32 %v1146, 0.0
      %v1211 = vmax.f32 %v1147, 0.0
      %v1212 = vpack.c.bf16 %v1149, %v1148
      %v1213 = vpack.c.bf16 %v1151, %v1150
      %v1214 = vpack.c.bf16 %v1153, %v1152
      %v1215 = vpack.c.bf16 %v1155, %v1154
      %v1216 = vpack.c.bf16 %v1157, %v1156
      %v1217 = vpack.c.bf16 %v1159, %v1158
      %v1218 = vpack.c.bf16 %v1161, %v1160
      %v1219 = vpack.c.bf16 %v1163, %v1162
      %v1220 = vpack.c.bf16 %v1165, %v1164
      %v1221 = vpack.c.bf16 %v1167, %v1166
      %v1222 = vpack.c.bf16 %v1169, %v1168
      %v1223 = vpack.c.bf16 %v1171, %v1170
      %v1224 = vpack.c.bf16 %v1173, %v1172
      %v1225 = vpack.c.bf16 %v1175, %v1174
      %v1226 = vpack.c.bf16 %v1177, %v1176
      %v1227 = vpack.c.bf16 %v1179, %v1178
      %v1228 = vpack.c.bf16 %v1181, %v1180
      %v1229 = vpack.c.bf16 %v1183, %v1182
      %v1230 = vpack.c.bf16 %v1185, %v1184
      %v1231 = vpack.c.bf16 %v1187, %v1186
      %v1232 = vpack.c.bf16 %v1189, %v1188
      %v1233 = vpack.c.bf16 %v1191, %v1190
      %v1234 = vpack.c.bf16 %v1193, %v1192
      %v1235 = vpack.c.bf16 %v1195, %v1194
      %v1236 = vpack.c.bf16 %v1197, %v1196
      %v1237 = vpack.c.bf16 %v1199, %v1198
      %v1238 = vpack.c.bf16 %v1201, %v1200
      %v1239 = vpack.c.bf16 %v1203, %v1202
      %v1240 = vpack.c.bf16 %v1205, %v1204
      %v1241 = vpack.c.bf16 %v1207, %v1206
      %v1242 = vpack.c.bf16 %v1209, %v1208
      %v1243 = vpack.c.bf16 %v1211, %v1210
      %v1276 = vunpack.c.l.b16 %v1212
      %v1277 = vunpack.c.h.b16 %v1212
      %v1278 = vunpack.c.l.b16 %v1213
      %v1279 = vunpack.c.h.b16 %v1213
      %v1280 = vunpack.c.l.b16 %v1214
      %v1281 = vunpack.c.h.b16 %v1214
      %v1282 = vunpack.c.l.b16 %v1215
      %v1283 = vunpack.c.h.b16 %v1215
      %v1284 = vunpack.c.l.b16 %v1216
      %v1285 = vunpack.c.h.b16 %v1216
      %v1286 = vunpack.c.l.b16 %v1217
      %v1287 = vunpack.c.h.b16 %v1217
      %v1288 = vunpack.c.l.b16 %v1218
      %v1289 = vunpack.c.h.b16 %v1218
      %v1290 = vunpack.c.l.b16 %v1219
      %v1291 = vunpack.c.h.b16 %v1219
      %v1292 = vunpack.c.l.b16 %v1220
      %v1293 = vunpack.c.h.b16 %v1220
      %v1294 = vunpack.c.l.b16 %v1221
      %v1295 = vunpack.c.h.b16 %v1221
      %v1296 = vunpack.c.l.b16 %v1222
      %v1297 = vunpack.c.h.b16 %v1222
      %v1298 = vunpack.c.l.b16 %v1223
      %v1299 = vunpack.c.h.b16 %v1223
      %v1300 = vunpack.c.l.b16 %v1224
      %v1301 = vunpack.c.h.b16 %v1224
      %v1302 = vunpack.c.l.b16 %v1225
      %v1303 = vunpack.c.h.b16 %v1225
      %v1304 = vunpack.c.l.b16 %v1226
      %v1305 = vunpack.c.h.b16 %v1226
      %v1306 = vunpack.c.l.b16 %v1227
      %v1307 = vunpack.c.h.b16 %v1227
      %v1308 = vunpack.c.l.b16 %v1228
      %v1309 = vunpack.c.h.b16 %v1228
      %v1310 = vunpack.c.l.b16 %v1229
      %v1311 = vunpack.c.h.b16 %v1229
      %v1312 = vunpack.c.l.b16 %v1230
      %v1313 = vunpack.c.h.b16 %v1230
      %v1314 = vunpack.c.l.b16 %v1231
      %v1315 = vunpack.c.h.b16 %v1231
      %v1316 = vunpack.c.l.b16 %v1232
      %v1317 = vunpack.c.h.b16 %v1232
      %v1318 = vunpack.c.l.b16 %v1233
      %v1319 = vunpack.c.h.b16 %v1233
      %v1320 = vunpack.c.l.b16 %v1234
      %v1321 = vunpack.c.h.b16 %v1234
      %v1322 = vunpack.c.l.b16 %v1235
      %v1323 = vunpack.c.h.b16 %v1235
      %v1324 = vunpack.c.l.b16 %v1236
      %v1325 = vunpack.c.h.b16 %v1236
      %v1326 = vunpack.c.l.b16 %v1237
      %v1327 = vunpack.c.h.b16 %v1237
      %v1328 = vunpack.c.l.b16 %v1238
      %v1329 = vunpack.c.h.b16 %v1238
      %v1330 = vunpack.c.l.b16 %v1239
      %v1331 = vunpack.c.h.b16 %v1239
      %v1332 = vunpack.c.l.b16 %v1240
      %v1333 = vunpack.c.h.b16 %v1240
      %v1334 = vunpack.c.l.b16 %v1241
      %v1335 = vunpack.c.h.b16 %v1241
      %v1336 = vunpack.c.l.b16 %v1242
      %v1337 = vunpack.c.h.b16 %v1242
      %v1338 = vunpack.c.l.b16 %v1243
      %v1339 = vunpack.c.h.b16 %v1243
      %v1340 = vpack.c.b16 %v1276, %v1276
      %v1341 = vpack.c.b16 %v1277, %v1277
      %v1342 = vpack.c.b16 %v1278, %v1278
      %v1343 = vpack.c.b16 %v1279, %v1279
      %v1344 = vpack.c.b16 %v1280, %v1280
      %v1345 = vpack.c.b16 %v1281, %v1281
      %v1346 = vpack.c.b16 %v1282, %v1282
      %v1347 = vpack.c.b16 %v1283, %v1283
      %v1348 = vpack.c.b16 %v1284, %v1284
      %v1349 = vpack.c.b16 %v1285, %v1285
      %v1350 = vpack.c.b16 %v1286, %v1286
      %v1351 = vpack.c.b16 %v1287, %v1287
      %v1352 = vpack.c.b16 %v1288, %v1288
      %v1353 = vpack.c.b16 %v1289, %v1289
      %v1354 = vpack.c.b16 %v1290, %v1290
      %v1355 = vpack.c.b16 %v1291, %v1291
      %v1356 = vpack.c.b16 %v1292, %v1292
      %v1357 = vpack.c.b16 %v1293, %v1293
      %v1358 = vpack.c.b16 %v1294, %v1294
      %v1359 = vpack.c.b16 %v1295, %v1295
      %v1360 = vpack.c.b16 %v1296, %v1296
      %v1361 = vpack.c.b16 %v1297, %v1297
      %v1362 = vpack.c.b16 %v1298, %v1298
      %v1363 = vpack.c.b16 %v1299, %v1299
      %v1364 = vpack.c.b16 %v1300, %v1300
      %v1365 = vpack.c.b16 %v1301, %v1301
      %v1366 = vpack.c.b16 %v1302, %v1302
      %v1367 = vpack.c.b16 %v1303, %v1303
      %v1368 = vpack.c.b16 %v1304, %v1304
      %v1369 = vpack.c.b16 %v1305, %v1305
      %v1370 = vpack.c.b16 %v1306, %v1306
      %v1371 = vpack.c.b16 %v1307, %v1307
      %v1372 = vpack.c.b16 %v1308, %v1308
      %v1373 = vpack.c.b16 %v1309, %v1309
      %v1374 = vpack.c.b16 %v1310, %v1310
      %v1375 = vpack.c.b16 %v1311, %v1311
      %v1376 = vpack.c.b16 %v1312, %v1312
      %v1377 = vpack.c.b16 %v1313, %v1313
      %v1378 = vpack.c.b16 %v1314, %v1314
      %v1379 = vpack.c.b16 %v1315, %v1315
      %v1380 = vpack.c.b16 %v1316, %v1316
      %v1381 = vpack.c.b16 %v1317, %v1317
      %v1382 = vpack.c.b16 %v1318, %v1318
      %v1383 = vpack.c.b16 %v1319, %v1319
      %v1384 = vpack.c.b16 %v1320, %v1320
      %v1385 = vpack.c.b16 %v1321, %v1321
      %v1386 = vpack.c.b16 %v1322, %v1322
      %v1387 = vpack.c.b16 %v1323, %v1323
      %v1388 = vpack.c.b16 %v1324, %v1324
      %v1389 = vpack.c.b16 %v1325, %v1325
      %v1390 = vpack.c.b16 %v1326, %v1326
      %v1391 = vpack.c.b16 %v1327, %v1327
      %v1392 = vpack.c.b16 %v1328, %v1328
      %v1393 = vpack.c.b16 %v1329, %v1329
      %v1394 = vpack.c.b16 %v1330, %v1330
      %v1395 = vpack.c.b16 %v1331, %v1331
      %v1396 = vpack.c.b16 %v1332, %v1332
      %v1397 = vpack.c.b16 %v1333, %v1333
      %v1398 = vpack.c.b16 %v1334, %v1334
      %v1399 = vpack.c.b16 %v1335, %v1335
      %v1400 = vpack.c.b16 %v1336, %v1336
      %v1401 = vpack.c.b16 %v1337, %v1337
      %v1402 = vpack.c.b16 %v1338, %v1338
      %v1403 = vpack.c.b16 %v1339, %v1339
      %1468 = vst [vmem:[%s202] sm:$0xf] %v1340
      %1469 = vst [vmem:[%s202 + $0x4] sm:$0xf] %v1341
      %1470 = vst [vmem:[%s202 + $0x8] sm:$0xf] %v1342
      %1471 = vst [vmem:[%s202 + $0xc] sm:$0xf] %v1343
      %1472 = vst [vmem:[%s202 + $0x10] sm:$0xf] %v1344
      %1473 = vst [vmem:[%s202 + $0x14] sm:$0xf] %v1345
      %1474 = vst [vmem:[%s202 + $0x18] sm:$0xf] %v1346
      %1475 = vst [vmem:[%s202 + $0x1c] sm:$0xf] %v1347
      %1476 = vst [vmem:[%s202 + $0x20] sm:$0xf] %v1348
      %1477 = vst [vmem:[%s202 + $0x24] sm:$0xf] %v1349
      %1478 = vst [vmem:[%s202 + $0x28] sm:$0xf] %v1350
      %1479 = vst [vmem:[%s202 + $0x2c] sm:$0xf] %v1351
      %1480 = vst [vmem:[%s202 + $0x30] sm:$0xf] %v1352
      %1481 = vst [vmem:[%s202 + $0x34] sm:$0xf] %v1353
      %1482 = vst [vmem:[%s202 + $0x38] sm:$0xf] %v1354
      %1483 = vst [vmem:[%s202 + $0x3c] sm:$0xf] %v1355
      %1484 = vst [vmem:[%s202 + $0x40] sm:$0xf] %v1356
      %1485 = vst [vmem:[%s202 + $0x44] sm:$0xf] %v1357
      %1486 = vst [vmem:[%s202 + $0x48] sm:$0xf] %v1358
      %1487 = vst [vmem:[%s202 + $0x4c] sm:$0xf] %v1359
      %1488 = vst [vmem:[%s202 + $0x50] sm:$0xf] %v1360
      %1489 = vst [vmem:[%s202 + $0x54] sm:$0xf] %v1361
      %1490 = vst [vmem:[%s202 + $0x58] sm:$0xf] %v1362
      %1491 = vst [vmem:[%s202 + $0x5c] sm:$0xf] %v1363
      %1492 = vst [vmem:[%s202 + $0x60] sm:$0xf] %v1364
      %1493 = vst [vmem:[%s202 + $0x64] sm:$0xf] %v1365
      %1494 = vst [vmem:[%s202 + $0x68] sm:$0xf] %v1366
      %1495 = vst [vmem:[%s202 + $0x6c] sm:$0xf] %v1367
      %1496 = vst [vmem:[%s202 + $0x70] sm:$0xf] %v1368
      %1497 = vst [vmem:[%s202 + $0x74] sm:$0xf] %v1369
      %1498 = vst [vmem:[%s202 + $0x78] sm:$0xf] %v1370
      %1499 = vst [vmem:[%s202 + $0x7c] sm:$0xf] %v1371
      %1500 = vst [vmem:[%s202 + $0x80] sm:$0xf] %v1372
      %1501 = vst [vmem:[%s202 + $0x84] sm:$0xf] %v1373
      %1502 = vst [vmem:[%s202 + $0x88] sm:$0xf] %v1374
      %1503 = vst [vmem:[%s202 + $0x8c] sm:$0xf] %v1375
      %1504 = vst [vmem:[%s202 + $0x90] sm:$0xf] %v1376
      %1505 = vst [vmem:[%s202 + $0x94] sm:$0xf] %v1377
      %1506 = vst [vmem:[%s202 + $0x98] sm:$0xf] %v1378
      %1507 = vst [vmem:[%s202 + $0x9c] sm:$0xf] %v1379
      %1508 = vst [vmem:[%s202 + $0xa0] sm:$0xf] %v1380
      %1509 = vst [vmem:[%s202 + $0xa4] sm:$0xf] %v1381
      %1510 = vst [vmem:[%s202 + $0xa8] sm:$0xf] %v1382
      %1511 = vst [vmem:[%s202 + $0xac] sm:$0xf] %v1383
      %1512 = vst [vmem:[%s202 + $0xb0] sm:$0xf] %v1384
      %1513 = vst [vmem:[%s202 + $0xb4] sm:$0xf] %v1385
      %1514 = vst [vmem:[%s202 + $0xb8] sm:$0xf] %v1386
      %1515 = vst [vmem:[%s202 + $0xbc] sm:$0xf] %v1387
      %1516 = vst [vmem:[%s202 + $0xc0] sm:$0xf] %v1388
      %1517 = vst [vmem:[%s202 + $0xc4] sm:$0xf] %v1389
      %1518 = vst [vmem:[%s202 + $0xc8] sm:$0xf] %v1390
      %1519 = vst [vmem:[%s202 + $0xcc] sm:$0xf] %v1391
      %1520 = vst [vmem:[%s202 + $0xd0] sm:$0xf] %v1392
      %1521 = vst [vmem:[%s202 + $0xd4] sm:$0xf] %v1393
      %1522 = vst [vmem:[%s202 + $0xd8] sm:$0xf] %v1394
      %1523 = vst [vmem:[%s202 + $0xdc] sm:$0xf] %v1395
      %1524 = vst [vmem:[%s202 + $0xe0] sm:$0xf] %v1396
      %1525 = vst [vmem:[%s202 + $0xe4] sm:$0xf] %v1397
      %1526 = vst [vmem:[%s202 + $0xe8] sm:$0xf] %v1398
      %1527 = vst [vmem:[%s202 + $0xec] sm:$0xf] %v1399
      %1528 = vst [vmem:[%s202 + $0xf0] sm:$0xf] %v1400
      %1529 = vst [vmem:[%s202 + $0xf4] sm:$0xf] %v1401
      %1530 = vst [vmem:[%s202 + $0xf8] sm:$0xf] %v1402
      %1531 = vst [vmem:[%s202 + $0xfc] sm:$0xf] %v1403
      %s1532 = smul.u32 64, %s15
      %p1533 = scmp.lt.s32.totalorder %s1532, 255
      %s1534 = scalar_select %p1533, %s1532, 255
      %s1535 = smul.addr %s1534, 4
      %s1536 = scalar_lea.vmem %s4, %s1535
      // Predicated region
      $region37: #{_lambda_.6} parent=35 // pred_check
        %p1537 = pneg %p122
      $region38: #{_lambda_.6} parent=35 // pred_check_branch
        %1539 = sbr.rel (%p1537) target = $region40
      $region39: #{_lambda_.6} parent=35 // pred_region
        %s1540 = smul.u32 64, %s15
      $region40: #{_lambda_.6} parent=35 // pred_fallthru
        _
    $region36: #{_lambda_.6} parent=5 // pred_fallthru
      _
    %p1541 = scmp.le.s32.totalorder 2, %s10
    // Predicated region
    $region41: #{_lambda_.6} parent=5 // pred_check
      %p1542 = pneg %p1541
    $region42: #{_lambda_.6} parent=5 // pred_check_branch
      %1544 = sbr.rel (%p1542) target = $region44
    $region43: #{_lambda_.6} parent=5 // pred_region
      %s1545 = ssub.s32 %s10, 2
      // Predicated region
      $region45: #{_lambda_.6} parent=43 // pred_check
        %p1546 = pneg %p128
      $region46: #{_lambda_.6} parent=43 // pred_check_branch
        %1548 = sbr.rel (%p1546) target = $region48
      $region47: #{_lambda_.6} parent=43 // pred_region
        %s1549 = smul.u32 64, %s16
        %p1550 = scmp.lt.s32.totalorder %s1549, 255
        %s1551 = scalar_select %p1550, %s1549, 255
        %s1552 = smul.addr %s1551, 4
        %s1553 = scalar_lea.vmem %s4, %s1552
      $region48: #{_lambda_.6} parent=43 // pred_fallthru
        _
    $region44: #{_lambda_.6} parent=5 // pred_fallthru
      _
  $region6: #{_lambda_.6} parent=0 // loop_footer
    %s14 = sadd.s32 1, %s10
  $region7: #{_lambda_.6} parent=0 // loop_footer_branch
    %9 = sbr.rel target = $region3
  $region8: #{_lambda_.6} parent=0 // loop_exit
    _

// kernel: _lambda_.7
$region0: #{_lambda_.7}
  #allocation0 [shape = 'u32[]', space=smem, size = 0x4, offset = 0x4, fixed_abs, tag = 'smem constant byte address 0x4 - core index']
  #allocation1 [shape = 'u32[144,128]{1,0:T(1,128)}', space=vmem, size = 0x12000, scoped, tag = 'internal scratch']
  %s0 = inlined_call_operand.vmem [shape: bf16[9,32,512], index: 0, kind: input, shape index: {}]
  %s1 = inlined_call_operand.vmem [shape: bf16[32,512], index: 1, kind: output, shape index: {}]
  %s2 = sld [smem:[#allocation0]]
  $region14: #{_lambda_.7} parent=0
    _
  %s4 = ssub.s32 1, %s2
  %s5 = scalar_select 0, %s4, %s2
  // Predicated region
  $region2: #{_lambda_.7} parent=0 // pred_check
    _
  $region3: #{_lambda_.7} parent=0 // pred_check_branch
    %7 = sbr.rel (0) target = $region5
  $region4: #{_lambda_.7} parent=0 // pred_region
    _
  $region5: #{_lambda_.7} parent=0 // pred_fallthru
    _
  %v8 = vld [vmem:[%s0] sm:$0xff]
  %v9 = vld [vmem:[%s0 + $0x8] sm:$0xff]
  %v10 = vld [vmem:[%s0 + $0x10] sm:$0xff]
  %v11 = vld [vmem:[%s0 + $0x18] sm:$0xff]
  %v12 = vld [vmem:[%s0 + $0x20] sm:$0xff]
  %v13 = vld [vmem:[%s0 + $0x28] sm:$0xff]
  %v14 = vld [vmem:[%s0 + $0x30] sm:$0xff]
  %v15 = vld [vmem:[%s0 + $0x38] sm:$0xff]
  %s16 = scalar_lea.vmem %s0, 64
  %v17 = vld [vmem:[%s16] sm:$0xff]
  %v18 = vld [vmem:[%s16 + $0x8] sm:$0xff]
  %v19 = vld [vmem:[%s16 + $0x10] sm:$0xff]
  %v20 = vld [vmem:[%s16 + $0x18] sm:$0xff]
  %v21 = vld [vmem:[%s16 + $0x20] sm:$0xff]
  %v22 = vld [vmem:[%s16 + $0x28] sm:$0xff]
  %v23 = vld [vmem:[%s16 + $0x30] sm:$0xff]
  %v24 = vld [vmem:[%s16 + $0x38] sm:$0xff]
  %v25 = vmax.bf16 %v8, %v17
  %v26 = vmax.bf16 %v9, %v18
  %v27 = vmax.bf16 %v10, %v19
  %v28 = vmax.bf16 %v11, %v20
  %v29 = vmax.bf16 %v12, %v21
  %v30 = vmax.bf16 %v13, %v22
  %v31 = vmax.bf16 %v14, %v23
  %v32 = vmax.bf16 %v15, %v24
  %s33 = scalar_lea.vmem %s0, 128
  %v34 = vld [vmem:[%s33] sm:$0xff]
  %v35 = vld [vmem:[%s33 + $0x8] sm:$0xff]
  %v36 = vld [vmem:[%s33 + $0x10] sm:$0xff]
  %v37 = vld [vmem:[%s33 + $0x18] sm:$0xff]
  %v38 = vld [vmem:[%s33 + $0x20] sm:$0xff]
  %v39 = vld [vmem:[%s33 + $0x28] sm:$0xff]
  %v40 = vld [vmem:[%s33 + $0x30] sm:$0xff]
  %v41 = vld [vmem:[%s33 + $0x38] sm:$0xff]
  %v42 = vmax.bf16 %v25, %v34
  %v43 = vmax.bf16 %v26, %v35
  %v44 = vmax.bf16 %v27, %v36
  %v45 = vmax.bf16 %v28, %v37
  %v46 = vmax.bf16 %v29, %v38
  %v47 = vmax.bf16 %v30, %v39
  %v48 = vmax.bf16 %v31, %v40
  %v49 = vmax.bf16 %v32, %v41
  %s50 = scalar_lea.vmem %s0, 192
  %v51 = vld [vmem:[%s50] sm:$0xff]
  %v52 = vld [vmem:[%s50 + $0x8] sm:$0xff]
  %v53 = vld [vmem:[%s50 + $0x10] sm:$0xff]
  %v54 = vld [vmem:[%s50 + $0x18] sm:$0xff]
  %v55 = vld [vmem:[%s50 + $0x20] sm:$0xff]
  %v56 = vld [vmem:[%s50 + $0x28] sm:$0xff]
  %v57 = vld [vmem:[%s50 + $0x30] sm:$0xff]
  %v58 = vld [vmem:[%s50 + $0x38] sm:$0xff]
  %v59 = vmax.bf16 %v42, %v51
  %v60 = vmax.bf16 %v43, %v52
  %v61 = vmax.bf16 %v44, %v53
  %v62 = vmax.bf16 %v45, %v54
  %v63 = vmax.bf16 %v46, %v55
  %v64 = vmax.bf16 %v47, %v56
  %v65 = vmax.bf16 %v48, %v57
  %v66 = vmax.bf16 %v49, %v58
  %s67 = scalar_lea.vmem %s0, 256
  %v68 = vld [vmem:[%s67] sm:$0xff]
  %v69 = vld [vmem:[%s67 + $0x8] sm:$0xff]
  %v70 = vld [vmem:[%s67 + $0x10] sm:$0xff]
  %v71 = vld [vmem:[%s67 + $0x18] sm:$0xff]
  %v72 = vld [vmem:[%s67 + $0x20] sm:$0xff]
  %v73 = vld [vmem:[%s67 + $0x28] sm:$0xff]
  %v74 = vld [vmem:[%s67 + $0x30] sm:$0xff]
  %v75 = vld [vmem:[%s67 + $0x38] sm:$0xff]
  %v76 = vmax.bf16 %v59, %v68
  %v77 = vmax.bf16 %v60, %v69
  %v78 = vmax.bf16 %v61, %v70
  %v79 = vmax.bf16 %v62, %v71
  %v80 = vmax.bf16 %v63, %v72
  %v81 = vmax.bf16 %v64, %v73
  %v82 = vmax.bf16 %v65, %v74
  %v83 = vmax.bf16 %v66, %v75
  %s84 = scalar_lea.vmem %s0, 320
  %v85 = vld [vmem:[%s84] sm:$0xff]
  %v86 = vld [vmem:[%s84 + $0x8] sm:$0xff]
  %v87 = vld [vmem:[%s84 + $0x10] sm:$0xff]
  %v88 = vld [vmem:[%s84 + $0x18] sm:$0xff]
  %v89 = vld [vmem:[%s84 + $0x20] sm:$0xff]
  %v90 = vld [vmem:[%s84 + $0x28] sm:$0xff]
  %v91 = vld [vmem:[%s84 + $0x30] sm:$0xff]
  %v92 = vld [vmem:[%s84 + $0x38] sm:$0xff]
  %v93 = vmax.bf16 %v76, %v85
  %v94 = vmax.bf16 %v77, %v86
  %v95 = vmax.bf16 %v78, %v87
  %v96 = vmax.bf16 %v79, %v88
  %v97 = vmax.bf16 %v80, %v89
  %v98 = vmax.bf16 %v81, %v90
  %v99 = vmax.bf16 %v82, %v91
  %v100 = vmax.bf16 %v83, %v92
  %s101 = scalar_lea.vmem %s0, 384
  %v102 = vld [vmem:[%s101] sm:$0xff]
  %v103 = vld [vmem:[%s101 + $0x8] sm:$0xff]
  %v104 = vld [vmem:[%s101 + $0x10] sm:$0xff]
  %v105 = vld [vmem:[%s101 + $0x18] sm:$0xff]
  %v106 = vld [vmem:[%s101 + $0x20] sm:$0xff]
  %v107 = vld [vmem:[%s101 + $0x28] sm:$0xff]
  %v108 = vld [vmem:[%s101 + $0x30] sm:$0xff]
  %v109 = vld [vmem:[%s101 + $0x38] sm:$0xff]
  %v110 = vmax.bf16 %v93, %v102
  %v111 = vmax.bf16 %v94, %v103
  %v112 = vmax.bf16 %v95, %v104
  %v113 = vmax.bf16 %v96, %v105
  %v114 = vmax.bf16 %v97, %v106
  %v115 = vmax.bf16 %v98, %v107
  %v116 = vmax.bf16 %v99, %v108
  %v117 = vmax.bf16 %v100, %v109
  %s118 = scalar_lea.vmem %s0, 448
  %v119 = vld [vmem:[%s118] sm:$0xff]
  %v120 = vld [vmem:[%s118 + $0x8] sm:$0xff]
  %v121 = vld [vmem:[%s118 + $0x10] sm:$0xff]
  %v122 = vld [vmem:[%s118 + $0x18] sm:$0xff]
  %v123 = vld [vmem:[%s118 + $0x20] sm:$0xff]
  %v124 = vld [vmem:[%s118 + $0x28] sm:$0xff]
  %v125 = vld [vmem:[%s118 + $0x30] sm:$0xff]
  %v126 = vld [vmem:[%s118 + $0x38] sm:$0xff]
  %v127 = vmax.bf16 %v110, %v119
  %v128 = vmax.bf16 %v111, %v120
  %v129 = vmax.bf16 %v112, %v121
  %v130 = vmax.bf16 %v113, %v122
  %v131 = vmax.bf16 %v114, %v123
  %v132 = vmax.bf16 %v115, %v124
  %v133 = vmax.bf16 %v116, %v125
  %v134 = vmax.bf16 %v117, %v126
  %s135 = scalar_lea.vmem %s0, 512
  %v136 = vld [vmem:[%s135] sm:$0xff]
  %v137 = vld [vmem:[%s135 + $0x8] sm:$0xff]
  %v138 = vld [vmem:[%s135 + $0x10] sm:$0xff]
  %v139 = vld [vmem:[%s135 + $0x18] sm:$0xff]
  %v140 = vld [vmem:[%s135 + $0x20] sm:$0xff]
  %v141 = vld [vmem:[%s135 + $0x28] sm:$0xff]
  %v142 = vld [vmem:[%s135 + $0x30] sm:$0xff]
  %v143 = vld [vmem:[%s135 + $0x38] sm:$0xff]
  %v144 = vmax.bf16 %v127, %v136
  %v145 = vmax.bf16 %v128, %v137
  %v146 = vmax.bf16 %v129, %v138
  %v147 = vmax.bf16 %v130, %v139
  %v148 = vmax.bf16 %v131, %v140
  %v149 = vmax.bf16 %v132, %v141
  %v150 = vmax.bf16 %v133, %v142
  %v151 = vmax.bf16 %v134, %v143
  %152 = vst [vmem:[%s1] sm:$0xff] %v144
  %153 = vst [vmem:[%s1 + $0x8] sm:$0xff] %v145
  %154 = vst [vmem:[%s1 + $0x10] sm:$0xff] %v146
  %155 = vst [vmem:[%s1 + $0x18] sm:$0xff] %v147
  %156 = vst [vmem:[%s1 + $0x20] sm:$0xff] %v148
  %157 = vst [vmem:[%s1 + $0x28] sm:$0xff] %v149
  %158 = vst [vmem:[%s1 + $0x30] sm:$0xff] %v150
  %159 = vst [vmem:[%s1 + $0x38] sm:$0xff] %v151
  // Predicated region
  $region6: #{_lambda_.7} parent=0 // pred_check
    _
  $region7: #{_lambda_.7} parent=0 // pred_check_branch
    %161 = sbr.rel (0) target = $region9
  $region8: #{_lambda_.7} parent=0 // pred_region
    _
  $region9: #{_lambda_.7} parent=0 // pred_fallthru
    _
  // Predicated region
  $region10: #{_lambda_.7} parent=0 // pred_check
    _
  $region11: #{_lambda_.7} parent=0 // pred_check_branch
    %163 = sbr.rel (0) target = $region13
  $region12: #{_lambda_.7} parent=0 // pred_region
    _
  $region13: #{_lambda_.7} parent=0 // pred_fallthru
    _

// kernel: div.6
$region0: #{div.6}
  #allocation0 [shape = 's32[1]{0}', space=sflag, size = 0x4, scoped, tag = 'scoped memory for div.6']
  %s0 = inlined_call_operand.<no memory space> [shape: f32[], index: 0, kind: input, shape index: {}]
  %s1 = inlined_call_operand.vmem [shape: f32[64], index: 1, kind: output, shape index: {}]
  %v2 = vstv %s0
  %3 = vst [vmem:[%s1] sm:$0x1] %v2

// kernel: _lambda_.8
$region0: #{_lambda_.8}
  #allocation0 [shape = 'u32[]', space=smem, size = 0x4, offset = 0x4, fixed_abs, tag = 'smem constant byte address 0x4 - core index']
  #allocation1 [shape = 'u32[144,128]{1,0:T(1,128)}', space=vmem, size = 0x12000, scoped, tag = 'internal scratch']
  %s0 = inlined_call_operand.vmem [shape: bf16[128,384], index: 0, kind: input, shape index: {}]
  %s1 = inlined_call_operand.vmem [shape: bf16[384,128], index: 1, kind: input, shape index: {}]
  %s2 = inlined_call_operand.vmem [shape: f32[1,128], index: 2, kind: input, shape index: {}]
  %s3 = inlined_call_operand.vmem [shape: f32[1,128], index: 3, kind: input, shape index: {}]
  %s4 = inlined_call_operand.vmem [shape: bf16[128,128], index: 4, kind: output, shape index: {}]
  %s5 = sld [smem:[#allocation0]]
  $region26: #{_lambda_.8} parent=0
    _
  %s7 = ssub.s32 1, %s5
  %s8 = scalar_select 0, %s7, %s5
  // Predicated region
  $region2: #{_lambda_.8} parent=0 // pred_check
    _
  $region3: #{_lambda_.8} parent=0 // pred_check_branch
    %10 = sbr.rel (0) target = $region5
  $region4: #{_lambda_.8} parent=0 // pred_region
    _
  $region5: #{_lambda_.8} parent=0 // pred_fallthru
    _
  // Predicated region
  $region6: #{_lambda_.8} parent=0 // pred_check
    _
  $region7: #{_lambda_.8} parent=0 // pred_check_branch
    %12 = sbr.rel (0) target = $region9
  $region8: #{_lambda_.8} parent=0 // pred_region
    _
  $region9: #{_lambda_.8} parent=0 // pred_fallthru
    _
  // Predicated region
  $region10: #{_lambda_.8} parent=0 // pred_check
    _
  $region11: #{_lambda_.8} parent=0 // pred_check_branch
    %14 = sbr.rel (0) target = $region13
  $region12: #{_lambda_.8} parent=0 // pred_region
    _
  $region13: #{_lambda_.8} parent=0 // pred_fallthru
    _
  // Predicated region
  $region14: #{_lambda_.8} parent=0 // pred_check
    _
  $region15: #{_lambda_.8} parent=0 // pred_check_branch
    %16 = sbr.rel (0) target = $region17
  $region16: #{_lambda_.8} parent=0 // pred_region
    _
  $region17: #{_lambda_.8} parent=0 // pred_fallthru
    _
  %v18 = vld [vmem:[%s0] sm:$0xff]
  %v19 = vld [vmem:[%s0 + $0x8] sm:$0xf]
  %v20 = vld [vmem:[%s0 + $0xc] sm:$0xff]
  %v21 = vld [vmem:[%s0 + $0x14] sm:$0xf]
  %v22 = vld [vmem:[%s0 + $0x18] sm:$0xff]
  %v23 = vld [vmem:[%s0 + $0x20] sm:$0xf]
  %v24 = vld [vmem:[%s0 + $0x24] sm:$0xff]
  %v25 = vld [vmem:[%s0 + $0x2c] sm:$0xf]
  %v26 = vld [vmem:[%s0 + $0x30] sm:$0xff]
  %v27 = vld [vmem:[%s0 + $0x38] sm:$0xf]
  %v28 = vld [vmem:[%s0 + $0x3c] sm:$0xff]
  %v29 = vld [vmem:[%s0 + $0x44] sm:$0xf]
  %v30 = vld [vmem:[%s0 + $0x48] sm:$0xff]
  %v31 = vld [vmem:[%s0 + $0x50] sm:$0xf]
  %v32 = vld [vmem:[%s0 + $0x54] sm:$0xff]
  %v33 = vld [vmem:[%s0 + $0x5c] sm:$0xf]
  %v34 = vld [vmem:[%s0 + $0x60] sm:$0xff]
  %v35 = vld [vmem:[%s0 + $0x68] sm:$0xf]
  %v36 = vld [vmem:[%s0 + $0x6c] sm:$0xff]
  %v37 = vld [vmem:[%s0 + $0x74] sm:$0xf]
  %v38 = vld [vmem:[%s0 + $0x78] sm:$0xff]
  %v39 = vld [vmem:[%s0 + $0x80] sm:$0xf]
  %v40 = vld [vmem:[%s0 + $0x84] sm:$0xff]
  %v41 = vld [vmem:[%s0 + $0x8c] sm:$0xf]
  %v42 = vld [vmem:[%s0 + $0x90] sm:$0xff]
  %v43 = vld [vmem:[%s0 + $0x98] sm:$0xf]
  %v44 = vld [vmem:[%s0 + $0x9c] sm:$0xff]
  %v45 = vld [vmem:[%s0 + $0xa4] sm:$0xf]
  %v46 = vld [vmem:[%s0 + $0xa8] sm:$0xff]
  %v47 = vld [vmem:[%s0 + $0xb0] sm:$0xf]
  %v48 = vld [vmem:[%s0 + $0xb4] sm:$0xff]
  %v49 = vld [vmem:[%s0 + $0xbc] sm:$0xf]
  %v50 = vld [vmem:[%s1] sm:$0xf]
  %v51 = vld [vmem:[%s1 + $0x4] sm:$0xf]
  %v52 = vld [vmem:[%s1 + $0x8] sm:$0xf]
  %v53 = vld [vmem:[%s1 + $0xc] sm:$0xf]
  %v54 = vld [vmem:[%s1 + $0x10] sm:$0xf]
  %v55 = vld [vmem:[%s1 + $0x14] sm:$0xf]
  %v56 = vld [vmem:[%s1 + $0x18] sm:$0xf]
  %v57 = vld [vmem:[%s1 + $0x1c] sm:$0xf]
  %v58 = vld [vmem:[%s1 + $0x20] sm:$0xf]
  %v59 = vld [vmem:[%s1 + $0x24] sm:$0xf]
  %v60 = vld [vmem:[%s1 + $0x28] sm:$0xf]
  %v61 = vld [vmem:[%s1 + $0x2c] sm:$0xf]
  %v62 = vld [vmem:[%s1 + $0x30] sm:$0xf]
  %v63 = vld [vmem:[%s1 + $0x34] sm:$0xf]
  %v64 = vld [vmem:[%s1 + $0x38] sm:$0xf]
  %v65 = vld [vmem:[%s1 + $0x3c] sm:$0xf]
  %v66 = vld [vmem:[%s1 + $0x40] sm:$0xf]
  %v67 = vld [vmem:[%s1 + $0x44] sm:$0xf]
  %v68 = vld [vmem:[%s1 + $0x48] sm:$0xf]
  %v69 = vld [vmem:[%s1 + $0x4c] sm:$0xf]
  %v70 = vld [vmem:[%s1 + $0x50] sm:$0xf]
  %v71 = vld [vmem:[%s1 + $0x54] sm:$0xf]
  %v72 = vld [vmem:[%s1 + $0x58] sm:$0xf]
  %v73 = vld [vmem:[%s1 + $0x5c] sm:$0xf]
  %v74 = vld [vmem:[%s1 + $0x60] sm:$0xf]
  %v75 = vld [vmem:[%s1 + $0x64] sm:$0xf]
  %v76 = vld [vmem:[%s1 + $0x68] sm:$0xf]
  %v77 = vld [vmem:[%s1 + $0x6c] sm:$0xf]
  %v78 = vld [vmem:[%s1 + $0x70] sm:$0xf]
  %v79 = vld [vmem:[%s1 + $0x74] sm:$0xf]
  %v80 = vld [vmem:[%s1 + $0x78] sm:$0xf]
  %v81 = vld [vmem:[%s1 + $0x7c] sm:$0xf]
  %v82 = vld [vmem:[%s1 + $0x80] sm:$0xf]
  %v83 = vld [vmem:[%s1 + $0x84] sm:$0xf]
  %v84 = vld [vmem:[%s1 + $0x88] sm:$0xf]
  %v85 = vld [vmem:[%s1 + $0x8c] sm:$0xf]
  %v86 = vld [vmem:[%s1 + $0x90] sm:$0xf]
  %v87 = vld [vmem:[%s1 + $0x94] sm:$0xf]
  %v88 = vld [vmem:[%s1 + $0x98] sm:$0xf]
  %v89 = vld [vmem:[%s1 + $0x9c] sm:$0xf]
  %v90 = vld [vmem:[%s1 + $0xa0] sm:$0xf]
  %v91 = vld [vmem:[%s1 + $0xa4] sm:$0xf]
  %v92 = vld [vmem:[%s1 + $0xa8] sm:$0xf]
  %v93 = vld [vmem:[%s1 + $0xac] sm:$0xf]
  %v94 = vld [vmem:[%s1 + $0xb0] sm:$0xf]
  %v95 = vld [vmem:[%s1 + $0xb4] sm:$0xf]
  %v96 = vld [vmem:[%s1 + $0xb8] sm:$0xf]
  %v97 = vld [vmem:[%s1 + $0xbc] sm:$0xf]
  %v130 = vunpack.c.l.b16 %v18
  %v131 = vunpack.c.h.b16 %v18
  %v132 = vunpack.c.l.b16 %v19
  %v133 = vunpack.c.l.b16 %v20
  %v134 = vunpack.c.h.b16 %v20
  %v135 = vunpack.c.l.b16 %v21
  %v136 = vunpack.c.l.b16 %v22
  %v137 = vunpack.c.h.b16 %v22
  %v138 = vunpack.c.l.b16 %v23
  %v139 = vunpack.c.l.b16 %v24
  %v140 = vunpack.c.h.b16 %v24
  %v141 = vunpack.c.l.b16 %v25
  %v142 = vunpack.c.l.b16 %v26
  %v143 = vunpack.c.h.b16 %v26
  %v144 = vunpack.c.l.b16 %v27
  %v145 = vunpack.c.l.b16 %v28
  %v146 = vunpack.c.h.b16 %v28
  %v147 = vunpack.c.l.b16 %v29
  %v148 = vunpack.c.l.b16 %v30
  %v149 = vunpack.c.h.b16 %v30
  %v150 = vunpack.c.l.b16 %v31
  %v151 = vunpack.c.l.b16 %v32
  %v152 = vunpack.c.h.b16 %v32
  %v153 = vunpack.c.l.b16 %v33
  %v154 = vunpack.c.l.b16 %v34
  %v155 = vunpack.c.h.b16 %v34
  %v156 = vunpack.c.l.b16 %v35
  %v157 = vunpack.c.l.b16 %v36
  %v158 = vunpack.c.h.b16 %v36
  %v159 = vunpack.c.l.b16 %v37
  %v160 = vunpack.c.l.b16 %v38
  %v161 = vunpack.c.h.b16 %v38
  %v162 = vunpack.c.l.b16 %v39
  %v163 = vunpack.c.l.b16 %v40
  %v164 = vunpack.c.h.b16 %v40
  %v165 = vunpack.c.l.b16 %v41
  %v166 = vunpack.c.l.b16 %v42
  %v167 = vunpack.c.h.b16 %v42
  %v168 = vunpack.c.l.b16 %v43
  %v169 = vunpack.c.l.b16 %v44
  %v170 = vunpack.c.h.b16 %v44
  %v171 = vunpack.c.l.b16 %v45
  %v172 = vunpack.c.l.b16 %v46
  %v173 = vunpack.c.h.b16 %v46
  %v174 = vunpack.c.l.b16 %v47
  %v175 = vunpack.c.l.b16 %v48
  %v176 = vunpack.c.h.b16 %v48
  %v177 = vunpack.c.l.b16 %v49
  %v178 = vpack.c.b16 %v133, %v130
  %v179 = vpack.c.b16 %v134, %v131
  %v180 = vpack.c.b16 %v135, %v132
  %v181 = vpack.c.b16 %v139, %v136
  %v182 = vpack.c.b16 %v140, %v137
  %v183 = vpack.c.b16 %v141, %v138
  %v184 = vpack.c.b16 %v145, %v142
  %v185 = vpack.c.b16 %v146, %v143
  %v186 = vpack.c.b16 %v147, %v144
  %v187 = vpack.c.b16 %v151, %v148
  %v188 = vpack.c.b16 %v152, %v149
  %v189 = vpack.c.b16 %v153, %v150
  %v190 = vpack.c.b16 %v157, %v154
  %v191 = vpack.c.b16 %v158, %v155
  %v192 = vpack.c.b16 %v159, %v156
  %v193 = vpack.c.b16 %v163, %v160
  %v194 = vpack.c.b16 %v164, %v161
  %v195 = vpack.c.b16 %v165, %v162
  %v196 = vpack.c.b16 %v169, %v166
  %v197 = vpack.c.b16 %v170, %v167
  %v198 = vpack.c.b16 %v171, %v168
  %v199 = vpack.c.b16 %v175, %v172
  %v200 = vpack.c.b16 %v176, %v173
  %v201 = vpack.c.b16 %v177, %v174
  %v274 = vunpack.c.l.b16 %v50
  %v275 = vunpack.c.l.b16 %v51
  %v276 = vunpack.c.l.b16 %v52
  %v277 = vunpack.c.l.b16 %v53
  %v278 = vunpack.c.l.b16 %v54
  %v279 = vunpack.c.l.b16 %v55
  %v280 = vunpack.c.l.b16 %v56
  %v281 = vunpack.c.l.b16 %v57
  %v282 = vunpack.c.l.b16 %v58
  %v283 = vunpack.c.l.b16 %v59
  %v284 = vunpack.c.l.b16 %v60
  %v285 = vunpack.c.l.b16 %v61
  %v286 = vunpack.c.l.b16 %v62
  %v287 = vunpack.c.l.b16 %v63
  %v288 = vunpack.c.l.b16 %v64
  %v289 = vunpack.c.l.b16 %v65
  %v290 = vunpack.c.l.b16 %v66
  %v291 = vunpack.c.l.b16 %v67
  %v292 = vunpack.c.l.b16 %v68
  %v293 = vunpack.c.l.b16 %v69
  %v294 = vunpack.c.l.b16 %v70
  %v295 = vunpack.c.l.b16 %v71
  %v296 = vunpack.c.l.b16 %v72
  %v297 = vunpack.c.l.b16 %v73
  %v298 = vunpack.c.l.b16 %v74
  %v299 = vunpack.c.l.b16 %v75
  %v300 = vunpack.c.l.b16 %v76
  %v301 = vunpack.c.l.b16 %v77
  %v302 = vunpack.c.l.b16 %v78
  %v303 = vunpack.c.l.b16 %v79
  %v304 = vunpack.c.l.b16 %v80
  %v305 = vunpack.c.l.b16 %v81
  %v306 = vunpack.c.l.b16 %v82
  %v307 = vunpack.c.l.b16 %v83
  %v308 = vunpack.c.l.b16 %v84
  %v309 = vunpack.c.l.b16 %v85
  %v310 = vunpack.c.l.b16 %v86
  %v311 = vunpack.c.l.b16 %v87
  %v312 = vunpack.c.l.b16 %v88
  %v313 = vunpack.c.l.b16 %v89
  %v314 = vunpack.c.l.b16 %v90
  %v315 = vunpack.c.l.b16 %v91
  %v316 = vunpack.c.l.b16 %v92
  %v317 = vunpack.c.l.b16 %v93
  %v318 = vunpack.c.l.b16 %v94
  %v319 = vunpack.c.l.b16 %v95
  %v320 = vunpack.c.l.b16 %v96
  %v321 = vunpack.c.l.b16 %v97
  %v322 = vpack.c.b16 %v275, %v274
  %v323 = vpack.c.b16 %v277, %v276
  %v324 = vpack.c.b16 %v279, %v278
  %v325 = vpack.c.b16 %v281, %v280
  %v326 = vpack.c.b16 %v283, %v282
  %v327 = vpack.c.b16 %v285, %v284
  %v328 = vpack.c.b16 %v287, %v286
  %v329 = vpack.c.b16 %v289, %v288
  %v330 = vpack.c.b16 %v291, %v290
  %v331 = vpack.c.b16 %v293, %v292
  %v332 = vpack.c.b16 %v295, %v294
  %v333 = vpack.c.b16 %v297, %v296
  %v334 = vpack.c.b16 %v299, %v298
  %v335 = vpack.c.b16 %v301, %v300
  %v336 = vpack.c.b16 %v303, %v302
  %v337 = vpack.c.b16 %v305, %v304
  %v338 = vpack.c.b16 %v307, %v306
  %v339 = vpack.c.b16 %v309, %v308
  %v340 = vpack.c.b16 %v311, %v310
  %v341 = vpack.c.b16 %v313, %v312
  %v342 = vpack.c.b16 %v315, %v314
  %v343 = vpack.c.b16 %v317, %v316
  %v344 = vpack.c.b16 %v319, %v318
  %v345 = vpack.c.b16 %v321, %v320
  %370 = vmatprep.subr.bf16.mxu0 0
  %371 = vmatpush1.bf16.msra.mxu0 %v322
  %372 = vmatprep.subr.bf16.mxu0 0
  %373 = vmatpush1.bf16.msra.mxu0 %v323
  %374 = vmatprep.subr.bf16.mxu0 0
  %375 = vmatpush1.bf16.msra.mxu0 %v324
  %376 = vmatprep.subr.bf16.mxu0 0
  %377 = vmatpush1.bf16.msra.mxu0 %v325
  %378 = vmatprep.subr.bf16.mxu0 0
  %379 = vmatpush1.bf16.msra.mxu0 %v326
  %380 = vmatprep.subr.bf16.mxu0 0
  %381 = vmatpush1.bf16.msra.mxu0 %v327
  %382 = vmatprep.subr.bf16.mxu0 0
  %383 = vmatpush1.bf16.msra.mxu0 %v328
  %384 = vmatprep.subr.bf16.mxu0 0
  %385 = vmatpush1.bf16.msra.mxu0 %v329
  %386 = vmatprep.subr.bf16.mxu0 0
  %387 = vmatpush1.bf16.msra.mxu0 %v330
  %388 = vmatprep.subr.bf16.mxu0 0
  %389 = vmatpush1.bf16.msra.mxu0 %v331
  %390 = vmatprep.subr.bf16.mxu0 0
  %391 = vmatpush1.bf16.msra.mxu0 %v332
  %392 = vmatprep.subr.bf16.mxu0 0
  %393 = vmatpush1.bf16.msra.mxu0 %v333
  %394 = vmatprep.subr.bf16.mxu0 0
  %395 = vmatpush1.bf16.msra.mxu0 %v334
  %396 = vmatprep.subr.bf16.mxu0 0
  %397 = vmatpush1.bf16.msra.mxu0 %v335
  %398 = vmatprep.subr.bf16.mxu0 0
  %399 = vmatpush1.bf16.msra.mxu0 %v336
  %400 = vmatprep.subr.bf16.mxu0 0
  %401 = vmatpush1.bf16.msra.mxu0 %v337
  %402 = vmatprep.mubr.bf16.mxu0 %v179
  %403 = vmatmul.mubr.bf16.gmra.mrb[0].mxu0 %v178
  %v404 = vpop.f32.mrb[0].mxu0
  %v405 = vadd.f32 0.0, %v404
  %v406 = vpop.f32.mrb[0].mxu0
  %v407 = vpop.f32.mrb[0].mxu0
  %v408 = vadd.f32 0.0, %v407
  %v409 = vpop.f32.mrb[0].mxu0
  %410 = vmatprep.mubr.bf16.mxu0 %v182
  %411 = vmatmul.mubr.bf16.gmra.mrb[0].mxu0 %v181
  %v412 = vpop.f32.mrb[0].mxu0
  %v413 = vadd.f32 0.0, %v412
  %v414 = vpop.f32.mrb[0].mxu0
  %v415 = vpop.f32.mrb[0].mxu0
  %v416 = vadd.f32 0.0, %v415
  %v417 = vpop.f32.mrb[0].mxu0
  %418 = vmatprep.mubr.bf16.mxu0 %v185
  %419 = vmatmul.mubr.bf16.gmra.mrb[0].mxu0 %v184
  %v420 = vpop.f32.mrb[0].mxu0
  %v421 = vadd.f32 0.0, %v420
  %v422 = vpop.f32.mrb[0].mxu0
  %v423 = vpop.f32.mrb[0].mxu0
  %v424 = vadd.f32 0.0, %v423
  %v425 = vpop.f32.mrb[0].mxu0
  %426 = vmatprep.mubr.bf16.mxu0 %v188
  %427 = vmatmul.mubr.bf16.gmra.mrb[0].mxu0 %v187
  %v428 = vpop.f32.mrb[0].mxu0
  %v429 = vadd.f32 0.0, %v428
  %v430 = vpop.f32.mrb[0].mxu0
  %v431 = vpop.f32.mrb[0].mxu0
  %v432 = vadd.f32 0.0, %v431
  %v433 = vpop.f32.mrb[0].mxu0
  %434 = vmatprep.mubr.bf16.mxu0 %v191
  %435 = vmatmul.mubr.bf16.gmra.mrb[0].mxu0 %v190
  %v436 = vpop.f32.mrb[0].mxu0
  %v437 = vadd.f32 0.0, %v436
  %v438 = vpop.f32.mrb[0].mxu0
  %v439 = vpop.f32.mrb[0].mxu0
  %v440 = vadd.f32 0.0, %v439
  %v441 = vpop.f32.mrb[0].mxu0
  %442 = vmatprep.mubr.bf16.mxu0 %v194
  %443 = vmatmul.mubr.bf16.gmra.mrb[0].mxu0 %v193
  %v444 = vpop.f32.mrb[0].mxu0
  %v445 = vadd.f32 0.0, %v444
  %v446 = vpop.f32.mrb[0].mxu0
  %v447 = vpop.f32.mrb[0].mxu0
  %v448 = vadd.f32 0.0, %v447
  %v449 = vpop.f32.mrb[0].mxu0
  %450 = vmatprep.mubr.bf16.mxu0 %v197
  %451 = vmatmul.mubr.bf16.gmra.mrb[0].mxu0 %v196
  %v452 = vpop.f32.mrb[0].mxu0
  %v453 = vadd.f32 0.0, %v452
  %v454 = vpop.f32.mrb[0].mxu0
  %v455 = vpop.f32.mrb[0].mxu0
  %v456 = vadd.f32 0.0, %v455
  %v457 = vpop.f32.mrb[0].mxu0
  %458 = vmatprep.mubr.bf16.mxu0 %v200
  %459 = vmatmul.mubr.bf16.gmra.mrb[0].mxu0 %v199
  %v460 = vpop.f32.mrb[0].mxu0
  %v461 = vadd.f32 0.0, %v460
  %v462 = vpop.f32.mrb[0].mxu0
  %v463 = vpop.f32.mrb[0].mxu0
  %v464 = vadd.f32 0.0, %v463
  %v465 = vpop.f32.mrb[0].mxu0
  %466 = vdwg.mxu0
  %467 = vmatprep.subr.bf16.mxu0 0
  %468 = vmatpush1.bf16.msra.mxu0 %v338
  %469 = vmatprep.subr.bf16.mxu0 0
  %470 = vmatpush1.bf16.msra.mxu0 %v339
  %471 = vmatprep.subr.bf16.mxu0 0
  %472 = vmatpush1.bf16.msra.mxu0 %v340
  %473 = vmatprep.subr.bf16.mxu0 0
  %474 = vmatpush1.bf16.msra.mxu0 %v341
  %475 = vmatprep.subr.bf16.mxu0 0
  %476 = vmatpush1.bf16.msra.mxu0 %v342
  %477 = vmatprep.subr.bf16.mxu0 0
  %478 = vmatpush1.bf16.msra.mxu0 %v343
  %479 = vmatprep.subr.bf16.mxu0 0
  %480 = vmatpush1.bf16.msra.mxu0 %v344
  %481 = vmatprep.subr.bf16.mxu0 0
  %482 = vmatpush1.bf16.msra.mxu0 %v345
  %483 = vmatprep.subr.bf16.mxu0 0
  %484 = vmatpush1.bf16.msra.mxu0 0
  %485 = vmatprep.subr.bf16.mxu0 0
  %486 = vmatpush1.bf16.msra.mxu0 0
  %487 = vmatprep.subr.bf16.mxu0 0
  %488 = vmatpush1.bf16.msra.mxu0 0
  %489 = vmatprep.subr.bf16.mxu0 0
  %490 = vmatpush1.bf16.msra.mxu0 0
  %491 = vmatprep.subr.bf16.mxu0 0
  %492 = vmatpush1.bf16.msra.mxu0 0
  %493 = vmatprep.subr.bf16.mxu0 0
  %494 = vmatpush1.bf16.msra.mxu0 0
  %495 = vmatprep.subr.bf16.mxu0 0
  %496 = vmatpush1.bf16.msra.mxu0 0
  %497 = vmatprep.subr.bf16.mxu0 0
  %498 = vmatpush1.bf16.msra.mxu0 0
  %499 = vmatprep.mubr.bf16.mxu0 0
  %500 = vmatmul.mubr.bf16.gmra.mrb[0].mxu0 %v180
  %v501 = vpop.f32.mrb[0].mxu0
  %v502 = vadd.f32 %v405, %v501
  %v503 = vpop.f32.mrb[0].mxu0
  %v504 = vpop.f32.mrb[0].mxu0
  %v505 = vadd.f32 %v408, %v504
  %v506 = vpop.f32.mrb[0].mxu0
  %507 = vmatprep.mubr.bf16.mxu0 0
  %508 = vmatmul.mubr.bf16.gmra.mrb[0].mxu0 %v183
  %v509 = vpop.f32.mrb[0].mxu0
  %v510 = vadd.f32 %v413, %v509
  %v511 = vpop.f32.mrb[0].mxu0
  %v512 = vpop.f32.mrb[0].mxu0
  %v513 = vadd.f32 %v416, %v512
  %v514 = vpop.f32.mrb[0].mxu0
  %515 = vmatprep.mubr.bf16.mxu0 0
  %516 = vmatmul.mubr.bf16.gmra.mrb[0].mxu0 %v186
  %v517 = vpop.f32.mrb[0].mxu0
  %v518 = vadd.f32 %v421, %v517
  %v519 = vpop.f32.mrb[0].mxu0
  %v520 = vpop.f32.mrb[0].mxu0
  %v521 = vadd.f32 %v424, %v520
  %v522 = vpop.f32.mrb[0].mxu0
  %523 = vmatprep.mubr.bf16.mxu0 0
  %524 = vmatmul.mubr.bf16.gmra.mrb[0].mxu0 %v189
  %v525 = vpop.f32.mrb[0].mxu0
  %v526 = vadd.f32 %v429, %v525
  %v527 = vpop.f32.mrb[0].mxu0
  %v528 = vpop.f32.mrb[0].mxu0
  %v529 = vadd.f32 %v432, %v528
  %v530 = vpop.f32.mrb[0].mxu0
  %531 = vmatprep.mubr.bf16.mxu0 0
  %532 = vmatmul.mubr.bf16.gmra.mrb[0].mxu0 %v192
  %v533 = vpop.f32.mrb[0].mxu0
  %v534 = vadd.f32 %v437, %v533
  %v535 = vpop.f32.mrb[0].mxu0
  %v536 = vpop.f32.mrb[0].mxu0
  %v537 = vadd.f32 %v440, %v536
  %v538 = vpop.f32.mrb[0].mxu0
  %539 = vmatprep.mubr.bf16.mxu0 0
  %540 = vmatmul.mubr.bf16.gmra.mrb[0].mxu0 %v195
  %v541 = vpop.f32.mrb[0].mxu0
  %v542 = vadd.f32 %v445, %v541
  %v543 = vpop.f32.mrb[0].mxu0
  %v544 = vpop.f32.mrb[0].mxu0
  %v545 = vadd.f32 %v448, %v544
  %v546 = vpop.f32.mrb[0].mxu0
  %547 = vmatprep.mubr.bf16.mxu0 0
  %548 = vmatmul.mubr.bf16.gmra.mrb[0].mxu0 %v198
  %v549 = vpop.f32.mrb[0].mxu0
  %v550 = vadd.f32 %v453, %v549
  %v551 = vpop.f32.mrb[0].mxu0
  %v552 = vpop.f32.mrb[0].mxu0
  %v553 = vadd.f32 %v456, %v552
  %v554 = vpop.f32.mrb[0].mxu0
  %555 = vmatprep.mubr.bf16.mxu0 0
  %556 = vmatmul.mubr.bf16.gmra.mrb[0].mxu0 %v201
  %v557 = vpop.f32.mrb[0].mxu0
  %v558 = vadd.f32 %v461, %v557
  %v559 = vpop.f32.mrb[0].mxu0
  %v560 = vpop.f32.mrb[0].mxu0
  %v561 = vadd.f32 %v464, %v560
  %v562 = vpop.f32.mrb[0].mxu0
  %563 = vdwg.mxu0
  %v564 = vld [vmem:[%s2] sm:$0x1]
  %v566 = vlaneseq
  %v567 = vshrl.u32 %v566, 7
  %v568 = vsub.s32 0, %v567
  %v569 = vrot.slane %v564, %v568
  %v571 = vmul.f32 %v502, %v569
  %v572 = vmul.f32 %v505, %v569
  %v573 = vmul.f32 %v510, %v569
  %v574 = vmul.f32 %v513, %v569
  %v575 = vmul.f32 %v518, %v569
  %v576 = vmul.f32 %v521, %v569
  %v577 = vmul.f32 %v526, %v569
  %v578 = vmul.f32 %v529, %v569
  %v579 = vmul.f32 %v534, %v569
  %v580 = vmul.f32 %v537, %v569
  %v581 = vmul.f32 %v542, %v569
  %v582 = vmul.f32 %v545, %v569
  %v583 = vmul.f32 %v550, %v569
  %v584 = vmul.f32 %v553, %v569
  %v585 = vmul.f32 %v558, %v569
  %v586 = vmul.f32 %v561, %v569
  %v587 = vld [vmem:[%s3] sm:$0x1]
  %v589 = vlaneseq
  %v590 = vshrl.u32 %v589, 7
  %v591 = vsub.s32 0, %v590
  %v592 = vrot.slane %v587, %v591
  %v594 = vadd.f32 %v571, %v592
  %v595 = vadd.f32 %v572, %v592
  %v596 = vadd.f32 %v573, %v592
  %v597 = vadd.f32 %v574, %v592
  %v598 = vadd.f32 %v575, %v592
  %v599 = vadd.f32 %v576, %v592
  %v600 = vadd.f32 %v577, %v592
  %v601 = vadd.f32 %v578, %v592
  %v602 = vadd.f32 %v579, %v592
  %v603 = vadd.f32 %v580, %v592
  %v604 = vadd.f32 %v581, %v592
  %v605 = vadd.f32 %v582, %v592
  %v606 = vadd.f32 %v583, %v592
  %v607 = vadd.f32 %v584, %v592
  %v608 = vadd.f32 %v585, %v592
  %v609 = vadd.f32 %v586, %v592
  %v610 = vmax.f32 %v594, 0.0
  %v611 = vmax.f32 %v595, 0.0
  %v612 = vmax.f32 %v596, 0.0
  %v613 = vmax.f32 %v597, 0.0
  %v614 = vmax.f32 %v598, 0.0
  %v615 = vmax.f32 %v599, 0.0
  %v616 = vmax.f32 %v600, 0.0
  %v617 = vmax.f32 %v601, 0.0
  %v618 = vmax.f32 %v602, 0.0
  %v619 = vmax.f32 %v603, 0.0
  %v620 = vmax.f32 %v604, 0.0
  %v621 = vmax.f32 %v605, 0.0
  %v622 = vmax.f32 %v606, 0.0
  %v623 = vmax.f32 %v607, 0.0
  %v624 = vmax.f32 %v608, 0.0
  %v625 = vmax.f32 %v609, 0.0
  %v626 = vpack.c.bf16 %v611, %v610
  %v627 = vpack.c.bf16 %v613, %v612
  %v628 = vpack.c.bf16 %v615, %v614
  %v629 = vpack.c.bf16 %v617, %v616
  %v630 = vpack.c.bf16 %v619, %v618
  %v631 = vpack.c.bf16 %v621, %v620
  %v632 = vpack.c.bf16 %v623, %v622
  %v633 = vpack.c.bf16 %v625, %v624
  %v642 = vunpack.c.l.b16 %v626
  %v643 = vunpack.c.h.b16 %v626
  %v644 = vunpack.c.l.b16 %v627
  %v645 = vunpack.c.h.b16 %v627
  %v646 = vunpack.c.l.b16 %v628
  %v647 = vunpack.c.h.b16 %v628
  %v648 = vunpack.c.l.b16 %v629
  %v649 = vunpack.c.h.b16 %v629
  %v650 = vunpack.c.l.b16 %v630
  %v651 = vunpack.c.h.b16 %v630
  %v652 = vunpack.c.l.b16 %v631
  %v653 = vunpack.c.h.b16 %v631
  %v654 = vunpack.c.l.b16 %v632
  %v655 = vunpack.c.h.b16 %v632
  %v656 = vunpack.c.l.b16 %v633
  %v657 = vunpack.c.h.b16 %v633
  %v658 = vpack.c.b16 %v642, %v642
  %v659 = vpack.c.b16 %v643, %v643
  %v660 = vpack.c.b16 %v644, %v644
  %v661 = vpack.c.b16 %v645, %v645
  %v662 = vpack.c.b16 %v646, %v646
  %v663 = vpack.c.b16 %v647, %v647
  %v664 = vpack.c.b16 %v648, %v648
  %v665 = vpack.c.b16 %v649, %v649
  %v666 = vpack.c.b16 %v650, %v650
  %v667 = vpack.c.b16 %v651, %v651
  %v668 = vpack.c.b16 %v652, %v652
  %v669 = vpack.c.b16 %v653, %v653
  %v670 = vpack.c.b16 %v654, %v654
  %v671 = vpack.c.b16 %v655, %v655
  %v672 = vpack.c.b16 %v656, %v656
  %v673 = vpack.c.b16 %v657, %v657
  %690 = vst [vmem:[%s4] sm:$0xf] %v658
  %691 = vst [vmem:[%s4 + $0x4] sm:$0xf] %v659
  %692 = vst [vmem:[%s4 + $0x8] sm:$0xf] %v660
  %693 = vst [vmem:[%s4 + $0xc] sm:$0xf] %v661
  %694 = vst [vmem:[%s4 + $0x10] sm:$0xf] %v662
  %695 = vst [vmem:[%s4 + $0x14] sm:$0xf] %v663
  %696 = vst [vmem:[%s4 + $0x18] sm:$0xf] %v664
  %697 = vst [vmem:[%s4 + $0x1c] sm:$0xf] %v665
  %698 = vst [vmem:[%s4 + $0x20] sm:$0xf] %v666
  %699 = vst [vmem:[%s4 + $0x24] sm:$0xf] %v667
  %700 = vst [vmem:[%s4 + $0x28] sm:$0xf] %v668
  %701 = vst [vmem:[%s4 + $0x2c] sm:$0xf] %v669
  %702 = vst [vmem:[%s4 + $0x30] sm:$0xf] %v670
  %703 = vst [vmem:[%s4 + $0x34] sm:$0xf] %v671
  %704 = vst [vmem:[%s4 + $0x38] sm:$0xf] %v672
  %705 = vst [vmem:[%s4 + $0x3c] sm:$0xf] %v673
  // Predicated region
  $region18: #{_lambda_.8} parent=0 // pred_check
    _
  $region19: #{_lambda_.8} parent=0 // pred_check_branch
    %707 = sbr.rel (0) target = $region21
  $region20: #{_lambda_.8} parent=0 // pred_region
    _
  $region21: #{_lambda_.8} parent=0 // pred_fallthru
    _
  // Predicated region
  $region22: #{_lambda_.8} parent=0 // pred_check
    _
  $region23: #{_lambda_.8} parent=0 // pred_check_branch
    %709 = sbr.rel (0) target = $region25
  $region24: #{_lambda_.8} parent=0 // pred_region
    _
  $region25: #{_lambda_.8} parent=0 // pred_fallthru
    _

// kernel: _lambda_.9
$region0: #{_lambda_.9}
  #allocation0 [shape = 'u32[]', space=smem, size = 0x4, offset = 0x4, fixed_abs, tag = 'smem constant byte address 0x4 - core index']
  #allocation1 [shape = 'u32[144,128]{1,0:T(1,128)}', space=vmem, size = 0x12000, scoped, tag = 'internal scratch']
  %s0 = inlined_call_operand.vmem [shape: bf16[32,640], index: 0, kind: input, shape index: {}]
  %s1 = inlined_call_operand.vmem [shape: bf16[640,128], index: 1, kind: input, shape index: {}]
  %s2 = inlined_call_operand.vmem [shape: f32[1,128], index: 2, kind: input, shape index: {}]
  %s3 = inlined_call_operand.vmem [shape: f32[1,128], index: 3, kind: input, shape index: {}]
  %s4 = inlined_call_operand.vmem [shape: bf16[32,128], index: 4, kind: output, shape index: {}]
  %s5 = sld [smem:[#allocation0]]
  $region26: #{_lambda_.9} parent=0
    _
  %s7 = ssub.s32 1, %s5
  %s8 = scalar_select 0, %s7, %s5
  // Predicated region
  $region2: #{_lambda_.9} parent=0 // pred_check
    _
  $region3: #{_lambda_.9} parent=0 // pred_check_branch
    %10 = sbr.rel (0) target = $region5
  $region4: #{_lambda_.9} parent=0 // pred_region
    _
  $region5: #{_lambda_.9} parent=0 // pred_fallthru
    _
  // Predicated region
  $region6: #{_lambda_.9} parent=0 // pred_check
    _
  $region7: #{_lambda_.9} parent=0 // pred_check_branch
    %12 = sbr.rel (0) target = $region9
  $region8: #{_lambda_.9} parent=0 // pred_region
    _
  $region9: #{_lambda_.9} parent=0 // pred_fallthru
    _
  // Predicated region
  $region10: #{_lambda_.9} parent=0 // pred_check
    _
  $region11: #{_lambda_.9} parent=0 // pred_check_branch
    %14 = sbr.rel (0) target = $region13
  $region12: #{_lambda_.9} parent=0 // pred_region
    _
  $region13: #{_lambda_.9} parent=0 // pred_fallthru
    _
  // Predicated region
  $region14: #{_lambda_.9} parent=0 // pred_check
    _
  $region15: #{_lambda_.9} parent=0 // pred_check_branch
    %16 = sbr.rel (0) target = $region17
  $region16: #{_lambda_.9} parent=0 // pred_region
    _
  $region17: #{_lambda_.9} parent=0 // pred_fallthru
    _
  %v18 = vld [vmem:[%s0] sm:$0xff]
  %v19 = vld [vmem:[%s0 + $0x8] sm:$0xff]
  %v20 = vld [vmem:[%s0 + $0x10] sm:$0xf]
  %v21 = vld [vmem:[%s0 + $0x14] sm:$0xff]
  %v22 = vld [vmem:[%s0 + $0x1c] sm:$0xff]
  %v23 = vld [vmem:[%s0 + $0x24] sm:$0xf]
  %v24 = vld [vmem:[%s0 + $0x28] sm:$0xff]
  %v25 = vld [vmem:[%s0 + $0x30] sm:$0xff]
  %v26 = vld [vmem:[%s0 + $0x38] sm:$0xf]
  %v27 = vld [vmem:[%s0 + $0x3c] sm:$0xff]
  %v28 = vld [vmem:[%s0 + $0x44] sm:$0xff]
  %v29 = vld [vmem:[%s0 + $0x4c] sm:$0xf]
  %v30 = vld [vmem:[%s1] sm:$0xf]
  %v31 = vld [vmem:[%s1 + $0x4] sm:$0xf]
  %v32 = vld [vmem:[%s1 + $0x8] sm:$0xf]
  %v33 = vld [vmem:[%s1 + $0xc] sm:$0xf]
  %v34 = vld [vmem:[%s1 + $0x10] sm:$0xf]
  %v35 = vld [vmem:[%s1 + $0x14] sm:$0xf]
  %v36 = vld [vmem:[%s1 + $0x18] sm:$0xf]
  %v37 = vld [vmem:[%s1 + $0x1c] sm:$0xf]
  %v38 = vld [vmem:[%s1 + $0x20] sm:$0xf]
  %v39 = vld [vmem:[%s1 + $0x24] sm:$0xf]
  %v40 = vld [vmem:[%s1 + $0x28] sm:$0xf]
  %v41 = vld [vmem:[%s1 + $0x2c] sm:$0xf]
  %v42 = vld [vmem:[%s1 + $0x30] sm:$0xf]
  %v43 = vld [vmem:[%s1 + $0x34] sm:$0xf]
  %v44 = vld [vmem:[%s1 + $0x38] sm:$0xf]
  %v45 = vld [vmem:[%s1 + $0x3c] sm:$0xf]
  %v46 = vld [vmem:[%s1 + $0x40] sm:$0xf]
  %v47 = vld [vmem:[%s1 + $0x44] sm:$0xf]
  %v48 = vld [vmem:[%s1 + $0x48] sm:$0xf]
  %v49 = vld [vmem:[%s1 + $0x4c] sm:$0xf]
  %v50 = vld [vmem:[%s1 + $0x50] sm:$0xf]
  %v51 = vld [vmem:[%s1 + $0x54] sm:$0xf]
  %v52 = vld [vmem:[%s1 + $0x58] sm:$0xf]
  %v53 = vld [vmem:[%s1 + $0x5c] sm:$0xf]
  %v54 = vld [vmem:[%s1 + $0x60] sm:$0xf]
  %v55 = vld [vmem:[%s1 + $0x64] sm:$0xf]
  %v56 = vld [vmem:[%s1 + $0x68] sm:$0xf]
  %v57 = vld [vmem:[%s1 + $0x6c] sm:$0xf]
  %v58 = vld [vmem:[%s1 + $0x70] sm:$0xf]
  %v59 = vld [vmem:[%s1 + $0x74] sm:$0xf]
  %v60 = vld [vmem:[%s1 + $0x78] sm:$0xf]
  %v61 = vld [vmem:[%s1 + $0x7c] sm:$0xf]
  %v62 = vld [vmem:[%s1 + $0x80] sm:$0xf]
  %v63 = vld [vmem:[%s1 + $0x84] sm:$0xf]
  %v64 = vld [vmem:[%s1 + $0x88] sm:$0xf]
  %v65 = vld [vmem:[%s1 + $0x8c] sm:$0xf]
  %v66 = vld [vmem:[%s1 + $0x90] sm:$0xf]
  %v67 = vld [vmem:[%s1 + $0x94] sm:$0xf]
  %v68 = vld [vmem:[%s1 + $0x98] sm:$0xf]
  %v69 = vld [vmem:[%s1 + $0x9c] sm:$0xf]
  %v70 = vld [vmem:[%s1 + $0xa0] sm:$0xf]
  %v71 = vld [vmem:[%s1 + $0xa4] sm:$0xf]
  %v72 = vld [vmem:[%s1 + $0xa8] sm:$0xf]
  %v73 = vld [vmem:[%s1 + $0xac] sm:$0xf]
  %v74 = vld [vmem:[%s1 + $0xb0] sm:$0xf]
  %v75 = vld [vmem:[%s1 + $0xb4] sm:$0xf]
  %v76 = vld [vmem:[%s1 + $0xb8] sm:$0xf]
  %v77 = vld [vmem:[%s1 + $0xbc] sm:$0xf]
  %v78 = vld [vmem:[%s1 + $0xc0] sm:$0xf]
  %v79 = vld [vmem:[%s1 + $0xc4] sm:$0xf]
  %v80 = vld [vmem:[%s1 + $0xc8] sm:$0xf]
  %v81 = vld [vmem:[%s1 + $0xcc] sm:$0xf]
  %v82 = vld [vmem:[%s1 + $0xd0] sm:$0xf]
  %v83 = vld [vmem:[%s1 + $0xd4] sm:$0xf]
  %v84 = vld [vmem:[%s1 + $0xd8] sm:$0xf]
  %v85 = vld [vmem:[%s1 + $0xdc] sm:$0xf]
  %v86 = vld [vmem:[%s1 + $0xe0] sm:$0xf]
  %v87 = vld [vmem:[%s1 + $0xe4] sm:$0xf]
  %v88 = vld [vmem:[%s1 + $0xe8] sm:$0xf]
  %v89 = vld [vmem:[%s1 + $0xec] sm:$0xf]
  %v90 = vld [vmem:[%s1 + $0xf0] sm:$0xf]
  %v91 = vld [vmem:[%s1 + $0xf4] sm:$0xf]
  %v92 = vld [vmem:[%s1 + $0xf8] sm:$0xf]
  %v93 = vld [vmem:[%s1 + $0xfc] sm:$0xf]
  %v94 = vld [vmem:[%s1 + $0x100] sm:$0xf]
  %v95 = vld [vmem:[%s1 + $0x104] sm:$0xf]
  %v96 = vld [vmem:[%s1 + $0x108] sm:$0xf]
  %v97 = vld [vmem:[%s1 + $0x10c] sm:$0xf]
  %v98 = vld [vmem:[%s1 + $0x110] sm:$0xf]
  %v99 = vld [vmem:[%s1 + $0x114] sm:$0xf]
  %v100 = vld [vmem:[%s1 + $0x118] sm:$0xf]
  %v101 = vld [vmem:[%s1 + $0x11c] sm:$0xf]
  %v102 = vld [vmem:[%s1 + $0x120] sm:$0xf]
  %v103 = vld [vmem:[%s1 + $0x124] sm:$0xf]
  %v104 = vld [vmem:[%s1 + $0x128] sm:$0xf]
  %v105 = vld [vmem:[%s1 + $0x12c] sm:$0xf]
  %v106 = vld [vmem:[%s1 + $0x130] sm:$0xf]
  %v107 = vld [vmem:[%s1 + $0x134] sm:$0xf]
  %v108 = vld [vmem:[%s1 + $0x138] sm:$0xf]
  %v109 = vld [vmem:[%s1 + $0x13c] sm:$0xf]
  %v122 = vunpack.c.l.b16 %v18
  %v123 = vunpack.c.h.b16 %v18
  %v124 = vunpack.c.l.b16 %v19
  %v125 = vunpack.c.h.b16 %v19
  %v126 = vunpack.c.l.b16 %v20
  %v127 = vunpack.c.l.b16 %v21
  %v128 = vunpack.c.h.b16 %v21
  %v129 = vunpack.c.l.b16 %v22
  %v130 = vunpack.c.h.b16 %v22
  %v131 = vunpack.c.l.b16 %v23
  %v132 = vunpack.c.l.b16 %v24
  %v133 = vunpack.c.h.b16 %v24
  %v134 = vunpack.c.l.b16 %v25
  %v135 = vunpack.c.h.b16 %v25
  %v136 = vunpack.c.l.b16 %v26
  %v137 = vunpack.c.l.b16 %v27
  %v138 = vunpack.c.h.b16 %v27
  %v139 = vunpack.c.l.b16 %v28
  %v140 = vunpack.c.h.b16 %v28
  %v141 = vunpack.c.l.b16 %v29
  %v142 = vpack.c.b16 %v127, %v122
  %v143 = vpack.c.b16 %v128, %v123
  %v144 = vpack.c.b16 %v129, %v124
  %v145 = vpack.c.b16 %v130, %v125
  %v146 = vpack.c.b16 %v131, %v126
  %v147 = vpack.c.b16 %v137, %v132
  %v148 = vpack.c.b16 %v138, %v133
  %v149 = vpack.c.b16 %v139, %v134
  %v150 = vpack.c.b16 %v140, %v135
  %v151 = vpack.c.b16 %v141, %v136
  %v242 = vunpack.c.l.b16 %v30
  %v243 = vunpack.c.l.b16 %v31
  %v244 = vunpack.c.l.b16 %v32
  %v245 = vunpack.c.l.b16 %v33
  %v246 = vunpack.c.l.b16 %v34
  %v247 = vunpack.c.l.b16 %v35
  %v248 = vunpack.c.l.b16 %v36
  %v249 = vunpack.c.l.b16 %v37
  %v250 = vunpack.c.l.b16 %v38
  %v251 = vunpack.c.l.b16 %v39
  %v252 = vunpack.c.l.b16 %v40
  %v253 = vunpack.c.l.b16 %v41
  %v254 = vunpack.c.l.b16 %v42
  %v255 = vunpack.c.l.b16 %v43
  %v256 = vunpack.c.l.b16 %v44
  %v257 = vunpack.c.l.b16 %v45
  %v258 = vunpack.c.l.b16 %v46
  %v259 = vunpack.c.l.b16 %v47
  %v260 = vunpack.c.l.b16 %v48
  %v261 = vunpack.c.l.b16 %v49
  %v262 = vunpack.c.l.b16 %v50
  %v263 = vunpack.c.l.b16 %v51
  %v264 = vunpack.c.l.b16 %v52
  %v265 = vunpack.c.l.b16 %v53
  %v266 = vunpack.c.l.b16 %v54
  %v267 = vunpack.c.l.b16 %v55
  %v268 = vunpack.c.l.b16 %v56
  %v269 = vunpack.c.l.b16 %v57
  %v270 = vunpack.c.l.b16 %v58
  %v271 = vunpack.c.l.b16 %v59
  %v272 = vunpack.c.l.b16 %v60
  %v273 = vunpack.c.l.b16 %v61
  %v274 = vunpack.c.l.b16 %v62
  %v275 = vunpack.c.l.b16 %v63
  %v276 = vunpack.c.l.b16 %v64
  %v277 = vunpack.c.l.b16 %v65
  %v278 = vunpack.c.l.b16 %v66
  %v279 = vunpack.c.l.b16 %v67
  %v280 = vunpack.c.l.b16 %v68
  %v281 = vunpack.c.l.b16 %v69
  %v282 = vunpack.c.l.b16 %v70
  %v283 = vunpack.c.l.b16 %v71
  %v284 = vunpack.c.l.b16 %v72
  %v285 = vunpack.c.l.b16 %v73
  %v286 = vunpack.c.l.b16 %v74
  %v287 = vunpack.c.l.b16 %v75
  %v288 = vunpack.c.l.b16 %v76
  %v289 = vunpack.c.l.b16 %v77
  %v290 = vunpack.c.l.b16 %v78
  %v291 = vunpack.c.l.b16 %v79
  %v292 = vunpack.c.l.b16 %v80
  %v293 = vunpack.c.l.b16 %v81
  %v294 = vunpack.c.l.b16 %v82
  %v295 = vunpack.c.l.b16 %v83
  %v296 = vunpack.c.l.b16 %v84
  %v297 = vunpack.c.l.b16 %v85
  %v298 = vunpack.c.l.b16 %v86
  %v299 = vunpack.c.l.b16 %v87
  %v300 = vunpack.c.l.b16 %v88
  %v301 = vunpack.c.l.b16 %v89
  %v302 = vunpack.c.l.b16 %v90
  %v303 = vunpack.c.l.b16 %v91
  %v304 = vunpack.c.l.b16 %v92
  %v305 = vunpack.c.l.b16 %v93
  %v306 = vunpack.c.l.b16 %v94
  %v307 = vunpack.c.l.b16 %v95
  %v308 = vunpack.c.l.b16 %v96
  %v309 = vunpack.c.l.b16 %v97
  %v310 = vunpack.c.l.b16 %v98
  %v311 = vunpack.c.l.b16 %v99
  %v312 = vunpack.c.l.b16 %v100
  %v313 = vunpack.c.l.b16 %v101
  %v314 = vunpack.c.l.b16 %v102
  %v315 = vunpack.c.l.b16 %v103
  %v316 = vunpack.c.l.b16 %v104
  %v317 = vunpack.c.l.b16 %v105
  %v318 = vunpack.c.l.b16 %v106
  %v319 = vunpack.c.l.b16 %v107
  %v320 = vunpack.c.l.b16 %v108
  %v321 = vunpack.c.l.b16 %v109
  %v322 = vpack.c.b16 %v243, %v242
  %v323 = vpack.c.b16 %v245, %v244
  %v324 = vpack.c.b16 %v247, %v246
  %v325 = vpack.c.b16 %v249, %v248
  %v326 = vpack.c.b16 %v251, %v250
  %v327 = vpack.c.b16 %v253, %v252
  %v328 = vpack.c.b16 %v255, %v254
  %v329 = vpack.c.b16 %v257, %v256
  %v330 = vpack.c.b16 %v259, %v258
  %v331 = vpack.c.b16 %v261, %v260
  %v332 = vpack.c.b16 %v263, %v262
  %v333 = vpack.c.b16 %v265, %v264
  %v334 = vpack.c.b16 %v267, %v266
  %v335 = vpack.c.b16 %v269, %v268
  %v336 = vpack.c.b16 %v271, %v270
  %v337 = vpack.c.b16 %v273, %v272
  %v338 = vpack.c.b16 %v275, %v274
  %v339 = vpack.c.b16 %v277, %v276
  %v340 = vpack.c.b16 %v279, %v278
  %v341 = vpack.c.b16 %v281, %v280
  %v342 = vpack.c.b16 %v283, %v282
  %v343 = vpack.c.b16 %v285, %v284
  %v344 = vpack.c.b16 %v287, %v286
  %v345 = vpack.c.b16 %v289, %v288
  %v346 = vpack.c.b16 %v291, %v290
  %v347 = vpack.c.b16 %v293, %v292
  %v348 = vpack.c.b16 %v295, %v294
  %v349 = vpack.c.b16 %v297, %v296
  %v350 = vpack.c.b16 %v299, %v298
  %v351 = vpack.c.b16 %v301, %v300
  %v352 = vpack.c.b16 %v303, %v302
  %v353 = vpack.c.b16 %v305, %v304
  %v354 = vpack.c.b16 %v307, %v306
  %v355 = vpack.c.b16 %v309, %v308
  %v356 = vpack.c.b16 %v311, %v310
  %v357 = vpack.c.b16 %v313, %v312
  %v358 = vpack.c.b16 %v315, %v314
  %v359 = vpack.c.b16 %v317, %v316
  %v360 = vpack.c.b16 %v319, %v318
  %v361 = vpack.c.b16 %v321, %v320
  %402 = vmatprep.subr.bf16.mxu0 0
  %403 = vmatpush1.bf16.msra.mxu0 %v322
  %404 = vmatprep.subr.bf16.mxu0 0
  %405 = vmatpush1.bf16.msra.mxu0 %v323
  %406 = vmatprep.subr.bf16.mxu0 0
  %407 = vmatpush1.bf16.msra.mxu0 %v324
  %408 = vmatprep.subr.bf16.mxu0 0
  %409 = vmatpush1.bf16.msra.mxu0 %v325
  %410 = vmatprep.subr.bf16.mxu0 0
  %411 = vmatpush1.bf16.msra.mxu0 %v326
  %412 = vmatprep.subr.bf16.mxu0 0
  %413 = vmatpush1.bf16.msra.mxu0 %v327
  %414 = vmatprep.subr.bf16.mxu0 0
  %415 = vmatpush1.bf16.msra.mxu0 %v328
  %416 = vmatprep.subr.bf16.mxu0 0
  %417 = vmatpush1.bf16.msra.mxu0 %v329
  %418 = vmatprep.subr.bf16.mxu0 0
  %419 = vmatpush1.bf16.msra.mxu0 %v330
  %420 = vmatprep.subr.bf16.mxu0 0
  %421 = vmatpush1.bf16.msra.mxu0 %v331
  %422 = vmatprep.subr.bf16.mxu0 0
  %423 = vmatpush1.bf16.msra.mxu0 %v332
  %424 = vmatprep.subr.bf16.mxu0 0
  %425 = vmatpush1.bf16.msra.mxu0 %v333
  %426 = vmatprep.subr.bf16.mxu0 0
  %427 = vmatpush1.bf16.msra.mxu0 %v334
  %428 = vmatprep.subr.bf16.mxu0 0
  %429 = vmatpush1.bf16.msra.mxu0 %v335
  %430 = vmatprep.subr.bf16.mxu0 0
  %431 = vmatpush1.bf16.msra.mxu0 %v336
  %432 = vmatprep.subr.bf16.mxu0 0
  %433 = vmatpush1.bf16.msra.mxu0 %v337
  %434 = vmatprep.mubr.bf16.mxu0 %v143
  %435 = vmatmul.mubr.bf16.gmra.mrb[0].mxu0 %v142
  %v436 = vpop.f32.mrb[0].mxu0
  %v437 = vadd.f32 0.0, %v436
  %v438 = vpop.f32.mrb[0].mxu0
  %v439 = vpop.f32.mrb[0].mxu0
  %v440 = vadd.f32 0.0, %v439
  %v441 = vpop.f32.mrb[0].mxu0
  %442 = vmatprep.mubr.bf16.mxu0 %v148
  %443 = vmatmul.mubr.bf16.gmra.mrb[0].mxu0 %v147
  %v444 = vpop.f32.mrb[0].mxu0
  %v445 = vadd.f32 0.0, %v444
  %v446 = vpop.f32.mrb[0].mxu0
  %v447 = vpop.f32.mrb[0].mxu0
  %v448 = vadd.f32 0.0, %v447
  %v449 = vpop.f32.mrb[0].mxu0
  %450 = vdwg.mxu0
  %451 = vmatprep.subr.bf16.mxu0 0
  %452 = vmatpush1.bf16.msra.mxu0 %v338
  %453 = vmatprep.subr.bf16.mxu0 0
  %454 = vmatpush1.bf16.msra.mxu0 %v339
  %455 = vmatprep.subr.bf16.mxu0 0
  %456 = vmatpush1.bf16.msra.mxu0 %v340
  %457 = vmatprep.subr.bf16.mxu0 0
  %458 = vmatpush1.bf16.msra.mxu0 %v341
  %459 = vmatprep.subr.bf16.mxu0 0
  %460 = vmatpush1.bf16.msra.mxu0 %v342
  %461 = vmatprep.subr.bf16.mxu0 0
  %462 = vmatpush1.bf16.msra.mxu0 %v343
  %463 = vmatprep.subr.bf16.mxu0 0
  %464 = vmatpush1.bf16.msra.mxu0 %v344
  %465 = vmatprep.subr.bf16.mxu0 0
  %466 = vmatpush1.bf16.msra.mxu0 %v345
  %467 = vmatprep.subr.bf16.mxu0 0
  %468 = vmatpush1.bf16.msra.mxu0 %v346
  %469 = vmatprep.subr.bf16.mxu0 0
  %470 = vmatpush1.bf16.msra.mxu0 %v347
  %471 = vmatprep.subr.bf16.mxu0 0
  %472 = vmatpush1.bf16.msra.mxu0 %v348
  %473 = vmatprep.subr.bf16.mxu0 0
  %474 = vmatpush1.bf16.msra.mxu0 %v349
  %475 = vmatprep.subr.bf16.mxu0 0
  %476 = vmatpush1.bf16.msra.mxu0 %v350
  %477 = vmatprep.subr.bf16.mxu0 0
  %478 = vmatpush1.bf16.msra.mxu0 %v351
  %479 = vmatprep.subr.bf16.mxu0 0
  %480 = vmatpush1.bf16.msra.mxu0 %v352
  %481 = vmatprep.subr.bf16.mxu0 0
  %482 = vmatpush1.bf16.msra.mxu0 %v353
  %483 = vmatprep.mubr.bf16.mxu0 %v145
  %484 = vmatmul.mubr.bf16.gmra.mrb[0].mxu0 %v144
  %v485 = vpop.f32.mrb[0].mxu0
  %v486 = vadd.f32 %v437, %v485
  %v487 = vpop.f32.mrb[0].mxu0
  %v488 = vpop.f32.mrb[0].mxu0
  %v489 = vadd.f32 %v440, %v488
  %v490 = vpop.f32.mrb[0].mxu0
  %491 = vmatprep.mubr.bf16.mxu0 %v150
  %492 = vmatmul.mubr.bf16.gmra.mrb[0].mxu0 %v149
  %v493 = vpop.f32.mrb[0].mxu0
  %v494 = vadd.f32 %v445, %v493
  %v495 = vpop.f32.mrb[0].mxu0
  %v496 = vpop.f32.mrb[0].mxu0
  %v497 = vadd.f32 %v448, %v496
  %v498 = vpop.f32.mrb[0].mxu0
  %499 = vdwg.mxu0
  %500 = vmatprep.subr.bf16.mxu0 0
  %501 = vmatpush1.bf16.msra.mxu0 %v354
  %502 = vmatprep.subr.bf16.mxu0 0
  %503 = vmatpush1.bf16.msra.mxu0 %v355
  %504 = vmatprep.subr.bf16.mxu0 0
  %505 = vmatpush1.bf16.msra.mxu0 %v356
  %506 = vmatprep.subr.bf16.mxu0 0
  %507 = vmatpush1.bf16.msra.mxu0 %v357
  %508 = vmatprep.subr.bf16.mxu0 0
  %509 = vmatpush1.bf16.msra.mxu0 %v358
  %510 = vmatprep.subr.bf16.mxu0 0
  %511 = vmatpush1.bf16.msra.mxu0 %v359
  %512 = vmatprep.subr.bf16.mxu0 0
  %513 = vmatpush1.bf16.msra.mxu0 %v360
  %514 = vmatprep.subr.bf16.mxu0 0
  %515 = vmatpush1.bf16.msra.mxu0 %v361
  %516 = vmatprep.subr.bf16.mxu0 0
  %517 = vmatpush1.bf16.msra.mxu0 0
  %518 = vmatprep.subr.bf16.mxu0 0
  %519 = vmatpush1.bf16.msra.mxu0 0
  %520 = vmatprep.subr.bf16.mxu0 0
  %521 = vmatpush1.bf16.msra.mxu0 0
  %522 = vmatprep.subr.bf16.mxu0 0
  %523 = vmatpush1.bf16.msra.mxu0 0
  %524 = vmatprep.subr.bf16.mxu0 0
  %525 = vmatpush1.bf16.msra.mxu0 0
  %526 = vmatprep.subr.bf16.mxu0 0
  %527 = vmatpush1.bf16.msra.mxu0 0
  %528 = vmatprep.subr.bf16.mxu0 0
  %529 = vmatpush1.bf16.msra.mxu0 0
  %530 = vmatprep.subr.bf16.mxu0 0
  %531 = vmatpush1.bf16.msra.mxu0 0
  %532 = vmatprep.mubr.bf16.mxu0 0
  %533 = vmatmul.mubr.bf16.gmra.mrb[0].mxu0 %v146
  %v534 = vpop.f32.mrb[0].mxu0
  %v535 = vadd.f32 %v486, %v534
  %v536 = vpop.f32.mrb[0].mxu0
  %v537 = vpop.f32.mrb[0].mxu0
  %v538 = vadd.f32 %v489, %v537
  %v539 = vpop.f32.mrb[0].mxu0
  %540 = vmatprep.mubr.bf16.mxu0 0
  %541 = vmatmul.mubr.bf16.gmra.mrb[0].mxu0 %v151
  %v542 = vpop.f32.mrb[0].mxu0
  %v543 = vadd.f32 %v494, %v542
  %v544 = vpop.f32.mrb[0].mxu0
  %v545 = vpop.f32.mrb[0].mxu0
  %v546 = vadd.f32 %v497, %v545
  %v547 = vpop.f32.mrb[0].mxu0
  %548 = vdwg.mxu0
  %v549 = vld [vmem:[%s2] sm:$0x1]
  %v551 = vlaneseq
  %v552 = vshrl.u32 %v551, 7
  %v553 = vsub.s32 0, %v552
  %v554 = vrot.slane %v549, %v553
  %v556 = vmul.f32 %v535, %v554
  %v557 = vmul.f32 %v538, %v554
  %v558 = vmul.f32 %v543, %v554
  %v559 = vmul.f32 %v546, %v554
  %v560 = vld [vmem:[%s3] sm:$0x1]
  %v562 = vlaneseq
  %v563 = vshrl.u32 %v562, 7
  %v564 = vsub.s32 0, %v563
  %v565 = vrot.slane %v560, %v564
  %v567 = vadd.f32 %v556, %v565
  %v568 = vadd.f32 %v557, %v565
  %v569 = vadd.f32 %v558, %v565
  %v570 = vadd.f32 %v559, %v565
  %v571 = vmax.f32 %v567, 0.0
  %v572 = vmax.f32 %v568, 0.0
  %v573 = vmax.f32 %v569, 0.0
  %v574 = vmax.f32 %v570, 0.0
  %v575 = vpack.c.bf16 %v572, %v571
  %v576 = vpack.c.bf16 %v574, %v573
  %v579 = vunpack.c.l.b16 %v575
  %v580 = vunpack.c.h.b16 %v575
  %v581 = vunpack.c.l.b16 %v576
  %v582 = vunpack.c.h.b16 %v576
  %v583 = vpack.c.b16 %v579, %v579
  %v584 = vpack.c.b16 %v580, %v580
  %v585 = vpack.c.b16 %v581, %v581
  %v586 = vpack.c.b16 %v582, %v582
  %591 = vst [vmem:[%s4] sm:$0xf] %v583
  %592 = vst [vmem:[%s4 + $0x4] sm:$0xf] %v584
  %593 = vst [vmem:[%s4 + $0x8] sm:$0xf] %v585
  %594 = vst [vmem:[%s4 + $0xc] sm:$0xf] %v586
  // Predicated region
  $region18: #{_lambda_.9} parent=0 // pred_check
    _
  $region19: #{_lambda_.9} parent=0 // pred_check_branch
    %596 = sbr.rel (0) target = $region21
  $region20: #{_lambda_.9} parent=0 // pred_region
    _
  $region21: #{_lambda_.9} parent=0 // pred_fallthru
    _
  // Predicated region
  $region22: #{_lambda_.9} parent=0 // pred_check
    _
  $region23: #{_lambda_.9} parent=0 // pred_check_branch
    %598 = sbr.rel (0) target = $region25
  $region24: #{_lambda_.9} parent=0 // pred_region
    _
  $region25: #{_lambda_.9} parent=0 // pred_fallthru
    _

// kernel: _lambda_.11
$region0: #{_lambda_.11}
  #allocation0 [shape = 'u32[]', space=smem, size = 0x4, offset = 0x4, fixed_abs, tag = 'smem constant byte address 0x4 - core index']
  #allocation1 [shape = 'u32[144,128]{1,0:T(1,128)}', space=vmem, size = 0x12000, scoped, tag = 'internal scratch']
  %s0 = inlined_call_operand.vmem [shape: bf16[2,4,256], index: 0, kind: input, shape index: {}]
  %s1 = inlined_call_operand.vmem [shape: f32[256,128], index: 1, kind: input, shape index: {}]
  %s2 = inlined_call_operand.vmem [shape: f32[1,128], index: 2, kind: input, shape index: {}]
  %s3 = inlined_call_operand.hbm [shape: f32[2,128], index: 3, kind: output, shape index: {}]
  %s4 = sld [smem:[#allocation0]]
  $region22: #{_lambda_.11} parent=0
    _
  %s6 = ssub.s32 1, %s4
  %s7 = scalar_select 0, %s6, %s4
  $region1: #{_lambda_.11} parent=0
    #allocation2 [shape = 'u8[1024]{0}', space=vmem, size = 0x400, scoped, tag = 'output window, operand 0, single buffered']
    #allocation3 [shape = 's32[1]{0}', space=sflag, size = 0x4, scoped, tag = 'scoped memory for _lambda_.11']
    %8 = vsyncpa [#allocation3], 0
    // Predicated region
    $region2: #{_lambda_.11} parent=1 // pred_check
      _
    $region3: #{_lambda_.11} parent=1 // pred_check_branch
      %10 = sbr.rel (0) target = $region5
    $region4: #{_lambda_.11} parent=1 // pred_region
      _
    $region5: #{_lambda_.11} parent=1 // pred_fallthru
      _
    // Predicated region
    $region6: #{_lambda_.11} parent=1 // pred_check
      _
    $region7: #{_lambda_.11} parent=1 // pred_check_branch
      %12 = sbr.rel (0) target = $region9
    $region8: #{_lambda_.11} parent=1 // pred_region
      _
    $region9: #{_lambda_.11} parent=1 // pred_fallthru
      _
    // Predicated region
    $region10: #{_lambda_.11} parent=1 // pred_check
      _
    $region11: #{_lambda_.11} parent=1 // pred_check_branch
      %14 = sbr.rel (0) target = $region13
    $region12: #{_lambda_.11} parent=1 // pred_region
      _
    $region13: #{_lambda_.11} parent=1 // pred_fallthru
      _
    %v15 = vld [vmem:[%s0] sm:$0xf]
    %v16 = vld [vmem:[%s0 + $0x4] sm:$0xf]
    %v17 = vunpack.c.l.bf16 %v15
    %v18 = vunpack.c.l.bf16 %v16
    %v21 = vcombine.high %v17, %v17
    %v22 = vcombine.high %v18, %v18
    %vm25 = vcmask 1043456
    %v26 = vsel %vm25, %v17, 0.0
    %v27 = vrot.slane %v26, 4
    %v28 = vadd.f32 %v26, %v27
    %v29 = vrot.slane %v28, 2
    %v30 = vadd.f32 %v28, %v29
    %v31 = vrot.slane %v30, 1
    %v32 = vadd.f32 %v30, %v31
    %v33 = vsel %vm25, %v21, 0.0
    %v34 = vrot.slane %v33, 4
    %v35 = vadd.f32 %v33, %v34
    %v36 = vrot.slane %v35, 2
    %v37 = vadd.f32 %v35, %v36
    %v38 = vrot.slane %v37, 1
    %v39 = vadd.f32 %v37, %v38
    %v40 = vsel %vm25, %v18, 0.0
    %v41 = vrot.slane %v40, 4
    %v42 = vadd.f32 %v40, %v41
    %v43 = vrot.slane %v42, 2
    %v44 = vadd.f32 %v42, %v43
    %v45 = vrot.slane %v44, 1
    %v46 = vadd.f32 %v44, %v45
    %v47 = vsel %vm25, %v22, 0.0
    %v48 = vrot.slane %v47, 4
    %v49 = vadd.f32 %v47, %v48
    %v50 = vrot.slane %v49, 2
    %v51 = vadd.f32 %v49, %v50
    %v52 = vrot.slane %v51, 1
    %v53 = vadd.f32 %v51, %v52
    %v54 = vrcp.pop 4.0
    %v55 = vmul.f32 %v32, %v54
    %v56 = vmul.f32 %v39, %v54
    %v57 = vmul.f32 %v46, %v54
    %v58 = vmul.f32 %v53, %v54
    %v59 = vld [vmem:[%s1] sm:$0xff]
    %v60 = vld [vmem:[%s1 + $0x8] sm:$0xff]
    %v61 = vld [vmem:[%s1 + $0x10] sm:$0xff]
    %v62 = vld [vmem:[%s1 + $0x18] sm:$0xff]
    %v63 = vld [vmem:[%s1 + $0x20] sm:$0xff]
    %v64 = vld [vmem:[%s1 + $0x28] sm:$0xff]
    %v65 = vld [vmem:[%s1 + $0x30] sm:$0xff]
    %v66 = vld [vmem:[%s1 + $0x38] sm:$0xff]
    %v67 = vld [vmem:[%s1 + $0x40] sm:$0xff]
    %v68 = vld [vmem:[%s1 + $0x48] sm:$0xff]
    %v69 = vld [vmem:[%s1 + $0x50] sm:$0xff]
    %v70 = vld [vmem:[%s1 + $0x58] sm:$0xff]
    %v71 = vld [vmem:[%s1 + $0x60] sm:$0xff]
    %v72 = vld [vmem:[%s1 + $0x68] sm:$0xff]
    %v73 = vld [vmem:[%s1 + $0x70] sm:$0xff]
    %v74 = vld [vmem:[%s1 + $0x78] sm:$0xff]
    %v75 = vld [vmem:[%s1 + $0x80] sm:$0xff]
    %v76 = vld [vmem:[%s1 + $0x88] sm:$0xff]
    %v77 = vld [vmem:[%s1 + $0x90] sm:$0xff]
    %v78 = vld [vmem:[%s1 + $0x98] sm:$0xff]
    %v79 = vld [vmem:[%s1 + $0xa0] sm:$0xff]
    %v80 = vld [vmem:[%s1 + $0xa8] sm:$0xff]
    %v81 = vld [vmem:[%s1 + $0xb0] sm:$0xff]
    %v82 = vld [vmem:[%s1 + $0xb8] sm:$0xff]
    %v83 = vld [vmem:[%s1 + $0xc0] sm:$0xff]
    %v84 = vld [vmem:[%s1 + $0xc8] sm:$0xff]
    %v85 = vld [vmem:[%s1 + $0xd0] sm:$0xff]
    %v86 = vld [vmem:[%s1 + $0xd8] sm:$0xff]
    %v87 = vld [vmem:[%s1 + $0xe0] sm:$0xff]
    %v88 = vld [vmem:[%s1 + $0xe8] sm:$0xff]
    %v89 = vld [vmem:[%s1 + $0xf0] sm:$0xff]
    %v90 = vld [vmem:[%s1 + $0xf8] sm:$0xff]
    %v91 = vld [vmem:[%s2] sm:$0x1]
    %v93 = vlaneseq
    %v94 = vshrl.u32 %v93, 7
    %v95 = vsub.s32 0, %v94
    %v96 = vrot.slane %v91, %v95
    %vm102 = vcmask 1041409
    %v103 = vsel %vm102, %v57, %v55
    %v104 = vsel %vm102, %v58, %v56
    %107 = vmatprep.subr.mxu0 0.0
    %108 = vmatpush1.msra.mxu0 %v59
    %109 = vmatprep.subr.mxu0 0.0
    %110 = vmatpush1.msra.mxu0 %v60
    %111 = vmatprep.subr.mxu0 0.0
    %112 = vmatpush1.msra.mxu0 %v61
    %113 = vmatprep.subr.mxu0 0.0
    %114 = vmatpush1.msra.mxu0 %v62
    %115 = vmatprep.subr.mxu0 0.0
    %116 = vmatpush1.msra.mxu0 %v63
    %117 = vmatprep.subr.mxu0 0.0
    %118 = vmatpush1.msra.mxu0 %v64
    %119 = vmatprep.subr.mxu0 0.0
    %120 = vmatpush1.msra.mxu0 %v65
    %121 = vmatprep.subr.mxu0 0.0
    %122 = vmatpush1.msra.mxu0 %v66
    %123 = vmatprep.subr.mxu0 0.0
    %124 = vmatpush1.msra.mxu0 %v67
    %125 = vmatprep.subr.mxu0 0.0
    %126 = vmatpush1.msra.mxu0 %v68
    %127 = vmatprep.subr.mxu0 0.0
    %128 = vmatpush1.msra.mxu0 %v69
    %129 = vmatprep.subr.mxu0 0.0
    %130 = vmatpush1.msra.mxu0 %v70
    %131 = vmatprep.subr.mxu0 0.0
    %132 = vmatpush1.msra.mxu0 %v71
    %133 = vmatprep.subr.mxu0 0.0
    %134 = vmatpush1.msra.mxu0 %v72
    %135 = vmatprep.subr.mxu0 0.0
    %136 = vmatpush1.msra.mxu0 %v73
    %137 = vmatprep.subr.mxu0 0.0
    %138 = vmatpush1.msra.mxu0 %v74
    %139 = vmatprep.subr.mxu0 0.0
    %140 = vmatpush1.msra.mxu0 %v75
    %141 = vmatprep.subr.mxu0 0.0
    %142 = vmatpush1.msra.mxu0 %v76
    %143 = vmatprep.subr.mxu0 0.0
    %144 = vmatpush1.msra.mxu0 %v77
    %145 = vmatprep.subr.mxu0 0.0
    %146 = vmatpush1.msra.mxu0 %v78
    %147 = vmatprep.subr.mxu0 0.0
    %148 = vmatpush1.msra.mxu0 %v79
    %149 = vmatprep.subr.mxu0 0.0
    %150 = vmatpush1.msra.mxu0 %v80
    %151 = vmatprep.subr.mxu0 0.0
    %152 = vmatpush1.msra.mxu0 %v81
    %153 = vmatprep.subr.mxu0 0.0
    %154 = vmatpush1.msra.mxu0 %v82
    %155 = vmatprep.subr.mxu0 0.0
    %156 = vmatpush1.msra.mxu0 %v83
    %157 = vmatprep.subr.mxu0 0.0
    %158 = vmatpush1.msra.mxu0 %v84
    %159 = vmatprep.subr.mxu0 0.0
    %160 = vmatpush1.msra.mxu0 %v85
    %161 = vmatprep.subr.mxu0 0.0
    %162 = vmatpush1.msra.mxu0 %v86
    %163 = vmatprep.subr.mxu0 0.0
    %164 = vmatpush1.msra.mxu0 %v87
    %165 = vmatprep.subr.mxu0 0.0
    %166 = vmatpush1.msra.mxu0 %v88
    %167 = vmatprep.subr.mxu0 0.0
    %168 = vmatpush1.msra.mxu0 %v89
    %169 = vmatprep.subr.mxu0 0.0
    %170 = vmatpush1.msra.mxu0 %v90
    %171 = vmatprep.mubr.f32.mxu0 %v104
    %172 = vmatmul.mubr.f32.gmra.mrb[0].mxu0 %v103
    %v173 = vpop.f32.mrb[0].mxu0
    %v174 = vadd.f32 %v96, %v173
    %v175 = vpop.f32.mrb[0].mxu0
    %176 = vdwg.mxu0
    %177 = vst [vmem:[#allocation2] sm:$0x3] %v174
    // Predicated region
    $region14: #{_lambda_.11} parent=1 // pred_check
      _
    $region15: #{_lambda_.11} parent=1 // pred_check_branch
      %179 = sbr.rel (0) target = $region17
    $region16: #{_lambda_.11} parent=1 // pred_region
      %s181 = ssub.s32 32, 32
      %182 = vsyncadd [#allocation3], %s181
      %s184 = sshll.u32 [#allocation2], 4
      %s185 = int_to_ptr.vmem [resolvable:$true] %s184
      %187 = dma.vmem_to_hbm [thread:$0]  %s185, 32, %s3, [#allocation3]
    $region17: #{_lambda_.11} parent=1 // pred_fallthru
      _
    // Predicated region
    $region18: #{_lambda_.11} parent=1 // pred_check
      _
    $region19: #{_lambda_.11} parent=1 // pred_check_branch
      %189 = sbr.rel (0) target = $region21
    $region20: #{_lambda_.11} parent=1 // pred_region
      %190 = dma.done [#allocation3], 32
    $region21: #{_lambda_.11} parent=1 // pred_fallthru
      _
    %191 = vsyncpa [#allocation3], 1

// kernel: _lambda_.10
$region0: #{_lambda_.10}
  #allocation0 [shape = 'u32[]', space=smem, size = 0x4, offset = 0x4, fixed_abs, tag = 'smem constant byte address 0x4 - core index']
  #allocation1 [shape = 'u32[144,128]{1,0:T(1,128)}', space=vmem, size = 0x12000, scoped, tag = 'internal scratch']
  %s0 = inlined_call_operand.vmem [shape: bf16[8,1152], index: 0, kind: input, shape index: {}]
  %s1 = inlined_call_operand.vmem [shape: bf16[1152,256], index: 1, kind: input, shape index: {}]
  %s2 = inlined_call_operand.vmem [shape: f32[1,256], index: 2, kind: input, shape index: {}]
  %s3 = inlined_call_operand.vmem [shape: f32[1,256], index: 3, kind: input, shape index: {}]
  %s4 = inlined_call_operand.vmem [shape: bf16[8,256], index: 4, kind: output, shape index: {}]
  %s5 = sld [smem:[#allocation0]]
  $region26: #{_lambda_.10} parent=0
    _
  %s7 = ssub.s32 1, %s5
  %s8 = scalar_select 0, %s7, %s5
  // Predicated region
  $region2: #{_lambda_.10} parent=0 // pred_check
    _
  $region3: #{_lambda_.10} parent=0 // pred_check_branch
    %10 = sbr.rel (0) target = $region5
  $region4: #{_lambda_.10} parent=0 // pred_region
    _
  $region5: #{_lambda_.10} parent=0 // pred_fallthru
    _
  // Predicated region
  $region6: #{_lambda_.10} parent=0 // pred_check
    _
  $region7: #{_lambda_.10} parent=0 // pred_check_branch
    %12 = sbr.rel (0) target = $region9
  $region8: #{_lambda_.10} parent=0 // pred_region
    _
  $region9: #{_lambda_.10} parent=0 // pred_fallthru
    _
  // Predicated region
  $region10: #{_lambda_.10} parent=0 // pred_check
    _
  $region11: #{_lambda_.10} parent=0 // pred_check_branch
    %14 = sbr.rel (0) target = $region13
  $region12: #{_lambda_.10} parent=0 // pred_region
    _
  $region13: #{_lambda_.10} parent=0 // pred_fallthru
    _
  // Predicated region
  $region14: #{_lambda_.10} parent=0 // pred_check
    _
  $region15: #{_lambda_.10} parent=0 // pred_check_branch
    %16 = sbr.rel (0) target = $region17
  $region16: #{_lambda_.10} parent=0 // pred_region
    _
  $region17: #{_lambda_.10} parent=0 // pred_fallthru
    _
  %v18 = vld [vmem:[%s0] sm:$0xff]
  %v19 = vld [vmem:[%s0 + $0x8] sm:$0xff]
  %v20 = vld [vmem:[%s0 + $0x10] sm:$0xff]
  %v21 = vld [vmem:[%s0 + $0x18] sm:$0xff]
  %v22 = vld [vmem:[%s0 + $0x20] sm:$0xf]
  %v23 = vld [vmem:[%s1] sm:$0xff]
  %v24 = vld [vmem:[%s1 + $0x8] sm:$0xff]
  %v25 = vld [vmem:[%s1 + $0x10] sm:$0xff]
  %v26 = vld [vmem:[%s1 + $0x18] sm:$0xff]
  %v27 = vld [vmem:[%s1 + $0x20] sm:$0xff]
  %v28 = vld [vmem:[%s1 + $0x28] sm:$0xff]
  %v29 = vld [vmem:[%s1 + $0x30] sm:$0xff]
  %v30 = vld [vmem:[%s1 + $0x38] sm:$0xff]
  %v31 = vld [vmem:[%s1 + $0x40] sm:$0xff]
  %v32 = vld [vmem:[%s1 + $0x48] sm:$0xff]
  %v33 = vld [vmem:[%s1 + $0x50] sm:$0xff]
  %v34 = vld [vmem:[%s1 + $0x58] sm:$0xff]
  %v35 = vld [vmem:[%s1 + $0x60] sm:$0xff]
  %v36 = vld [vmem:[%s1 + $0x68] sm:$0xff]
  %v37 = vld [vmem:[%s1 + $0x70] sm:$0xff]
  %v38 = vld [vmem:[%s1 + $0x78] sm:$0xff]
  %v39 = vld [vmem:[%s1 + $0x80] sm:$0xff]
  %v40 = vld [vmem:[%s1 + $0x88] sm:$0xff]
  %v41 = vld [vmem:[%s1 + $0x90] sm:$0xff]
  %v42 = vld [vmem:[%s1 + $0x98] sm:$0xff]
  %v43 = vld [vmem:[%s1 + $0xa0] sm:$0xff]
  %v44 = vld [vmem:[%s1 + $0xa8] sm:$0xff]
  %v45 = vld [vmem:[%s1 + $0xb0] sm:$0xff]
  %v46 = vld [vmem:[%s1 + $0xb8] sm:$0xff]
  %v47 = vld [vmem:[%s1 + $0xc0] sm:$0xff]
  %v48 = vld [vmem:[%s1 + $0xc8] sm:$0xff]
  %v49 = vld [vmem:[%s1 + $0xd0] sm:$0xff]
  %v50 = vld [vmem:[%s1 + $0xd8] sm:$0xff]
  %v51 = vld [vmem:[%s1 + $0xe0] sm:$0xff]
  %v52 = vld [vmem:[%s1 + $0xe8] sm:$0xff]
  %v53 = vld [vmem:[%s1 + $0xf0] sm:$0xff]
  %v54 = vld [vmem:[%s1 + $0xf8] sm:$0xff]
  %v55 = vld [vmem:[%s1 + $0x100] sm:$0xff]
  %v56 = vld [vmem:[%s1 + $0x108] sm:$0xff]
  %v57 = vld [vmem:[%s1 + $0x110] sm:$0xff]
  %v58 = vld [vmem:[%s1 + $0x118] sm:$0xff]
  %v59 = vld [vmem:[%s1 + $0x120] sm:$0xff]
  %v60 = vld [vmem:[%s1 + $0x128] sm:$0xff]
  %v61 = vld [vmem:[%s1 + $0x130] sm:$0xff]
  %v62 = vld [vmem:[%s1 + $0x138] sm:$0xff]
  %v63 = vld [vmem:[%s1 + $0x140] sm:$0xff]
  %v64 = vld [vmem:[%s1 + $0x148] sm:$0xff]
  %v65 = vld [vmem:[%s1 + $0x150] sm:$0xff]
  %v66 = vld [vmem:[%s1 + $0x158] sm:$0xff]
  %v67 = vld [vmem:[%s1 + $0x160] sm:$0xff]
  %v68 = vld [vmem:[%s1 + $0x168] sm:$0xff]
  %v69 = vld [vmem:[%s1 + $0x170] sm:$0xff]
  %v70 = vld [vmem:[%s1 + $0x178] sm:$0xff]
  %v71 = vld [vmem:[%s1 + $0x180] sm:$0xff]
  %v72 = vld [vmem:[%s1 + $0x188] sm:$0xff]
  %v73 = vld [vmem:[%s1 + $0x190] sm:$0xff]
  %v74 = vld [vmem:[%s1 + $0x198] sm:$0xff]
  %v75 = vld [vmem:[%s1 + $0x1a0] sm:$0xff]
  %v76 = vld [vmem:[%s1 + $0x1a8] sm:$0xff]
  %v77 = vld [vmem:[%s1 + $0x1b0] sm:$0xff]
  %v78 = vld [vmem:[%s1 + $0x1b8] sm:$0xff]
  %v79 = vld [vmem:[%s1 + $0x1c0] sm:$0xff]
  %v80 = vld [vmem:[%s1 + $0x1c8] sm:$0xff]
  %v81 = vld [vmem:[%s1 + $0x1d0] sm:$0xff]
  %v82 = vld [vmem:[%s1 + $0x1d8] sm:$0xff]
  %v83 = vld [vmem:[%s1 + $0x1e0] sm:$0xff]
  %v84 = vld [vmem:[%s1 + $0x1e8] sm:$0xff]
  %v85 = vld [vmem:[%s1 + $0x1f0] sm:$0xff]
  %v86 = vld [vmem:[%s1 + $0x1f8] sm:$0xff]
  %v87 = vld [vmem:[%s1 + $0x200] sm:$0xff]
  %v88 = vld [vmem:[%s1 + $0x208] sm:$0xff]
  %v89 = vld [vmem:[%s1 + $0x210] sm:$0xff]
  %v90 = vld [vmem:[%s1 + $0x218] sm:$0xff]
  %v91 = vld [vmem:[%s1 + $0x220] sm:$0xff]
  %v92 = vld [vmem:[%s1 + $0x228] sm:$0xff]
  %v93 = vld [vmem:[%s1 + $0x230] sm:$0xff]
  %v94 = vld [vmem:[%s1 + $0x238] sm:$0xff]
  %v95 = vld [vmem:[%s1 + $0x240] sm:$0xff]
  %v96 = vld [vmem:[%s1 + $0x248] sm:$0xff]
  %v97 = vld [vmem:[%s1 + $0x250] sm:$0xff]
  %v98 = vld [vmem:[%s1 + $0x258] sm:$0xff]
  %v99 = vld [vmem:[%s1 + $0x260] sm:$0xff]
  %v100 = vld [vmem:[%s1 + $0x268] sm:$0xff]
  %v101 = vld [vmem:[%s1 + $0x270] sm:$0xff]
  %v102 = vld [vmem:[%s1 + $0x278] sm:$0xff]
  %v103 = vld [vmem:[%s1 + $0x280] sm:$0xff]
  %v104 = vld [vmem:[%s1 + $0x288] sm:$0xff]
  %v105 = vld [vmem:[%s1 + $0x290] sm:$0xff]
  %v106 = vld [vmem:[%s1 + $0x298] sm:$0xff]
  %v107 = vld [vmem:[%s1 + $0x2a0] sm:$0xff]
  %v108 = vld [vmem:[%s1 + $0x2a8] sm:$0xff]
  %v109 = vld [vmem:[%s1 + $0x2b0] sm:$0xff]
  %v110 = vld [vmem:[%s1 + $0x2b8] sm:$0xff]
  %v111 = vld [vmem:[%s1 + $0x2c0] sm:$0xff]
  %v112 = vld [vmem:[%s1 + $0x2c8] sm:$0xff]
  %v113 = vld [vmem:[%s1 + $0x2d0] sm:$0xff]
  %v114 = vld [vmem:[%s1 + $0x2d8] sm:$0xff]
  %v115 = vld [vmem:[%s1 + $0x2e0] sm:$0xff]
  %v116 = vld [vmem:[%s1 + $0x2e8] sm:$0xff]
  %v117 = vld [vmem:[%s1 + $0x2f0] sm:$0xff]
  %v118 = vld [vmem:[%s1 + $0x2f8] sm:$0xff]
  %v119 = vld [vmem:[%s1 + $0x300] sm:$0xff]
  %v120 = vld [vmem:[%s1 + $0x308] sm:$0xff]
  %v121 = vld [vmem:[%s1 + $0x310] sm:$0xff]
  %v122 = vld [vmem:[%s1 + $0x318] sm:$0xff]
  %v123 = vld [vmem:[%s1 + $0x320] sm:$0xff]
  %v124 = vld [vmem:[%s1 + $0x328] sm:$0xff]
  %v125 = vld [vmem:[%s1 + $0x330] sm:$0xff]
  %v126 = vld [vmem:[%s1 + $0x338] sm:$0xff]
  %v127 = vld [vmem:[%s1 + $0x340] sm:$0xff]
  %v128 = vld [vmem:[%s1 + $0x348] sm:$0xff]
  %v129 = vld [vmem:[%s1 + $0x350] sm:$0xff]
  %v130 = vld [vmem:[%s1 + $0x358] sm:$0xff]
  %v131 = vld [vmem:[%s1 + $0x360] sm:$0xff]
  %v132 = vld [vmem:[%s1 + $0x368] sm:$0xff]
  %v133 = vld [vmem:[%s1 + $0x370] sm:$0xff]
  %v134 = vld [vmem:[%s1 + $0x378] sm:$0xff]
  %v135 = vld [vmem:[%s1 + $0x380] sm:$0xff]
  %v136 = vld [vmem:[%s1 + $0x388] sm:$0xff]
  %v137 = vld [vmem:[%s1 + $0x390] sm:$0xff]
  %v138 = vld [vmem:[%s1 + $0x398] sm:$0xff]
  %v139 = vld [vmem:[%s1 + $0x3a0] sm:$0xff]
  %v140 = vld [vmem:[%s1 + $0x3a8] sm:$0xff]
  %v141 = vld [vmem:[%s1 + $0x3b0] sm:$0xff]
  %v142 = vld [vmem:[%s1 + $0x3b8] sm:$0xff]
  %v143 = vld [vmem:[%s1 + $0x3c0] sm:$0xff]
  %v144 = vld [vmem:[%s1 + $0x3c8] sm:$0xff]
  %v145 = vld [vmem:[%s1 + $0x3d0] sm:$0xff]
  %v146 = vld [vmem:[%s1 + $0x3d8] sm:$0xff]
  %v147 = vld [vmem:[%s1 + $0x3e0] sm:$0xff]
  %v148 = vld [vmem:[%s1 + $0x3e8] sm:$0xff]
  %v149 = vld [vmem:[%s1 + $0x3f0] sm:$0xff]
  %v150 = vld [vmem:[%s1 + $0x3f8] sm:$0xff]
  %v151 = vld [vmem:[%s1 + $0x400] sm:$0xff]
  %v152 = vld [vmem:[%s1 + $0x408] sm:$0xff]
  %v153 = vld [vmem:[%s1 + $0x410] sm:$0xff]
  %v154 = vld [vmem:[%s1 + $0x418] sm:$0xff]
  %v155 = vld [vmem:[%s1 + $0x420] sm:$0xff]
  %v156 = vld [vmem:[%s1 + $0x428] sm:$0xff]
  %v157 = vld [vmem:[%s1 + $0x430] sm:$0xff]
  %v158 = vld [vmem:[%s1 + $0x438] sm:$0xff]
  %v159 = vld [vmem:[%s1 + $0x440] sm:$0xff]
  %v160 = vld [vmem:[%s1 + $0x448] sm:$0xff]
  %v161 = vld [vmem:[%s1 + $0x450] sm:$0xff]
  %v162 = vld [vmem:[%s1 + $0x458] sm:$0xff]
  %v163 = vld [vmem:[%s1 + $0x460] sm:$0xff]
  %v164 = vld [vmem:[%s1 + $0x468] sm:$0xff]
  %v165 = vld [vmem:[%s1 + $0x470] sm:$0xff]
  %v166 = vld [vmem:[%s1 + $0x478] sm:$0xff]
  %v172 = vunpack.c.l.b16 %v18
  %v173 = vunpack.c.h.b16 %v18
  %v174 = vunpack.c.l.b16 %v19
  %v175 = vunpack.c.h.b16 %v19
  %v176 = vunpack.c.l.b16 %v20
  %v177 = vunpack.c.h.b16 %v20
  %v178 = vunpack.c.l.b16 %v21
  %v179 = vunpack.c.h.b16 %v21
  %v180 = vunpack.c.l.b16 %v22
  %v181 = vpack.c.b16 %v172, %v172
  %v182 = vpack.c.b16 %v173, %v173
  %v183 = vpack.c.b16 %v174, %v174
  %v184 = vpack.c.b16 %v175, %v175
  %v185 = vpack.c.b16 %v176, %v176
  %v186 = vpack.c.b16 %v177, %v177
  %v187 = vpack.c.b16 %v178, %v178
  %v188 = vpack.c.b16 %v179, %v179
  %v189 = vpack.c.b16 %v180, %v180
  %v343 = vunpack.c.l.b16 %v23
  %v344 = vunpack.c.h.b16 %v23
  %v345 = vunpack.c.l.b16 %v24
  %v346 = vunpack.c.h.b16 %v24
  %v347 = vunpack.c.l.b16 %v25
  %v348 = vunpack.c.h.b16 %v25
  %v349 = vunpack.c.l.b16 %v26
  %v350 = vunpack.c.h.b16 %v26
  %v351 = vunpack.c.l.b16 %v27
  %v352 = vunpack.c.h.b16 %v27
  %v353 = vunpack.c.l.b16 %v28
  %v354 = vunpack.c.h.b16 %v28
  %v355 = vunpack.c.l.b16 %v29
  %v356 = vunpack.c.h.b16 %v29
  %v357 = vunpack.c.l.b16 %v30
  %v358 = vunpack.c.h.b16 %v30
  %v359 = vunpack.c.l.b16 %v31
  %v360 = vunpack.c.h.b16 %v31
  %v361 = vunpack.c.l.b16 %v32
  %v362 = vunpack.c.h.b16 %v32
  %v363 = vunpack.c.l.b16 %v33
  %v364 = vunpack.c.h.b16 %v33
  %v365 = vunpack.c.l.b16 %v34
  %v366 = vunpack.c.h.b16 %v34
  %v367 = vunpack.c.l.b16 %v35
  %v368 = vunpack.c.h.b16 %v35
  %v369 = vunpack.c.l.b16 %v36
  %v370 = vunpack.c.h.b16 %v36
  %v371 = vunpack.c.l.b16 %v37
  %v372 = vunpack.c.h.b16 %v37
  %v373 = vunpack.c.l.b16 %v38
  %v374 = vunpack.c.h.b16 %v38
  %v375 = vunpack.c.l.b16 %v39
  %v376 = vunpack.c.h.b16 %v39
  %v377 = vunpack.c.l.b16 %v40
  %v378 = vunpack.c.h.b16 %v40
  %v379 = vunpack.c.l.b16 %v41
  %v380 = vunpack.c.h.b16 %v41
  %v381 = vunpack.c.l.b16 %v42
  %v382 = vunpack.c.h.b16 %v42
  %v383 = vunpack.c.l.b16 %v43
  %v384 = vunpack.c.h.b16 %v43
  %v385 = vunpack.c.l.b16 %v44
  %v386 = vunpack.c.h.b16 %v44
  %v387 = vunpack.c.l.b16 %v45
  %v388 = vunpack.c.h.b16 %v45
  %v389 = vunpack.c.l.b16 %v46
  %v390 = vunpack.c.h.b16 %v46
  %v391 = vunpack.c.l.b16 %v47
  %v392 = vunpack.c.h.b16 %v47
  %v393 = vunpack.c.l.b16 %v48
  %v394 = vunpack.c.h.b16 %v48
  %v395 = vunpack.c.l.b16 %v49
  %v396 = vunpack.c.h.b16 %v49
  %v397 = vunpack.c.l.b16 %v50
  %v398 = vunpack.c.h.b16 %v50
  %v399 = vunpack.c.l.b16 %v51
  %v400 = vunpack.c.h.b16 %v51
  %v401 = vunpack.c.l.b16 %v52
  %v402 = vunpack.c.h.b16 %v52
  %v403 = vunpack.c.l.b16 %v53
  %v404 = vunpack.c.h.b16 %v53
  %v405 = vunpack.c.l.b16 %v54
  %v406 = vunpack.c.h.b16 %v54
  %v407 = vunpack.c.l.b16 %v55
  %v408 = vunpack.c.h.b16 %v55
  %v409 = vunpack.c.l.b16 %v56
  %v410 = vunpack.c.h.b16 %v56
  %v411 = vunpack.c.l.b16 %v57
  %v412 = vunpack.c.h.b16 %v57
  %v413 = vunpack.c.l.b16 %v58
  %v414 = vunpack.c.h.b16 %v58
  %v415 = vunpack.c.l.b16 %v59
  %v416 = vunpack.c.h.b16 %v59
  %v417 = vunpack.c.l.b16 %v60
  %v418 = vunpack.c.h.b16 %v60
  %v419 = vunpack.c.l.b16 %v61
  %v420 = vunpack.c.h.b16 %v61
  %v421 = vunpack.c.l.b16 %v62
  %v422 = vunpack.c.h.b16 %v62
  %v423 = vunpack.c.l.b16 %v63
  %v424 = vunpack.c.h.b16 %v63
  %v425 = vunpack.c.l.b16 %v64
  %v426 = vunpack.c.h.b16 %v64
  %v427 = vunpack.c.l.b16 %v65
  %v428 = vunpack.c.h.b16 %v65
  %v429 = vunpack.c.l.b16 %v66
  %v430 = vunpack.c.h.b16 %v66
  %v431 = vunpack.c.l.b16 %v67
  %v432 = vunpack.c.h.b16 %v67
  %v433 = vunpack.c.l.b16 %v68
  %v434 = vunpack.c.h.b16 %v68
  %v435 = vunpack.c.l.b16 %v69
  %v436 = vunpack.c.h.b16 %v69
  %v437 = vunpack.c.l.b16 %v70
  %v438 = vunpack.c.h.b16 %v70
  %v439 = vunpack.c.l.b16 %v71
  %v440 = vunpack.c.h.b16 %v71
  %v441 = vunpack.c.l.b16 %v72
  %v442 = vunpack.c.h.b16 %v72
  %v443 = vunpack.c.l.b16 %v73
  %v444 = vunpack.c.h.b16 %v73
  %v445 = vunpack.c.l.b16 %v74
  %v446 = vunpack.c.h.b16 %v74
  %v447 = vunpack.c.l.b16 %v75
  %v448 = vunpack.c.h.b16 %v75
  %v449 = vunpack.c.l.b16 %v76
  %v450 = vunpack.c.h.b16 %v76
  %v451 = vunpack.c.l.b16 %v77
  %v452 = vunpack.c.h.b16 %v77
  %v453 = vunpack.c.l.b16 %v78
  %v454 = vunpack.c.h.b16 %v78
  %v455 = vunpack.c.l.b16 %v79
  %v456 = vunpack.c.h.b16 %v79
  %v457 = vunpack.c.l.b16 %v80
  %v458 = vunpack.c.h.b16 %v80
  %v459 = vunpack.c.l.b16 %v81
  %v460 = vunpack.c.h.b16 %v81
  %v461 = vunpack.c.l.b16 %v82
  %v462 = vunpack.c.h.b16 %v82
  %v463 = vunpack.c.l.b16 %v83
  %v464 = vunpack.c.h.b16 %v83
  %v465 = vunpack.c.l.b16 %v84
  %v466 = vunpack.c.h.b16 %v84
  %v467 = vunpack.c.l.b16 %v85
  %v468 = vunpack.c.h.b16 %v85
  %v469 = vunpack.c.l.b16 %v86
  %v470 = vunpack.c.h.b16 %v86
  %v471 = vunpack.c.l.b16 %v87
  %v472 = vunpack.c.h.b16 %v87
  %v473 = vunpack.c.l.b16 %v88
  %v474 = vunpack.c.h.b16 %v88
  %v475 = vunpack.c.l.b16 %v89
  %v476 = vunpack.c.h.b16 %v89
  %v477 = vunpack.c.l.b16 %v90
  %v478 = vunpack.c.h.b16 %v90
  %v479 = vunpack.c.l.b16 %v91
  %v480 = vunpack.c.h.b16 %v91
  %v481 = vunpack.c.l.b16 %v92
  %v482 = vunpack.c.h.b16 %v92
  %v483 = vunpack.c.l.b16 %v93
  %v484 = vunpack.c.h.b16 %v93
  %v485 = vunpack.c.l.b16 %v94
  %v486 = vunpack.c.h.b16 %v94
  %v487 = vunpack.c.l.b16 %v95
  %v488 = vunpack.c.h.b16 %v95
  %v489 = vunpack.c.l.b16 %v96
  %v490 = vunpack.c.h.b16 %v96
  %v491 = vunpack.c.l.b16 %v97
  %v492 = vunpack.c.h.b16 %v97
  %v493 = vunpack.c.l.b16 %v98
  %v494 = vunpack.c.h.b16 %v98
  %v495 = vunpack.c.l.b16 %v99
  %v496 = vunpack.c.h.b16 %v99
  %v497 = vunpack.c.l.b16 %v100
  %v498 = vunpack.c.h.b16 %v100
  %v499 = vunpack.c.l.b16 %v101
  %v500 = vunpack.c.h.b16 %v101
  %v501 = vunpack.c.l.b16 %v102
  %v502 = vunpack.c.h.b16 %v102
  %v503 = vunpack.c.l.b16 %v103
  %v504 = vunpack.c.h.b16 %v103
  %v505 = vunpack.c.l.b16 %v104
  %v506 = vunpack.c.h.b16 %v104
  %v507 = vunpack.c.l.b16 %v105
  %v508 = vunpack.c.h.b16 %v105
  %v509 = vunpack.c.l.b16 %v106
  %v510 = vunpack.c.h.b16 %v106
  %v511 = vunpack.c.l.b16 %v107
  %v512 = vunpack.c.h.b16 %v107
  %v513 = vunpack.c.l.b16 %v108
  %v514 = vunpack.c.h.b16 %v108
  %v515 = vunpack.c.l.b16 %v109
  %v516 = vunpack.c.h.b16 %v109
  %v517 = vunpack.c.l.b16 %v110
  %v518 = vunpack.c.h.b16 %v110
  %v519 = vunpack.c.l.b16 %v111
  %v520 = vunpack.c.h.b16 %v111
  %v521 = vunpack.c.l.b16 %v112
  %v522 = vunpack.c.h.b16 %v112
  %v523 = vunpack.c.l.b16 %v113
  %v524 = vunpack.c.h.b16 %v113
  %v525 = vunpack.c.l.b16 %v114
  %v526 = vunpack.c.h.b16 %v114
  %v527 = vunpack.c.l.b16 %v115
  %v528 = vunpack.c.h.b16 %v115
  %v529 = vunpack.c.l.b16 %v116
  %v530 = vunpack.c.h.b16 %v116
  %v531 = vunpack.c.l.b16 %v117
  %v532 = vunpack.c.h.b16 %v117
  %v533 = vunpack.c.l.b16 %v118
  %v534 = vunpack.c.h.b16 %v118
  %v535 = vunpack.c.l.b16 %v119
  %v536 = vunpack.c.h.b16 %v119
  %v537 = vunpack.c.l.b16 %v120
  %v538 = vunpack.c.h.b16 %v120
  %v539 = vunpack.c.l.b16 %v121
  %v540 = vunpack.c.h.b16 %v121
  %v541 = vunpack.c.l.b16 %v122
  %v542 = vunpack.c.h.b16 %v122
  %v543 = vunpack.c.l.b16 %v123
  %v544 = vunpack.c.h.b16 %v123
  %v545 = vunpack.c.l.b16 %v124
  %v546 = vunpack.c.h.b16 %v124
  %v547 = vunpack.c.l.b16 %v125
  %v548 = vunpack.c.h.b16 %v125
  %v549 = vunpack.c.l.b16 %v126
  %v550 = vunpack.c.h.b16 %v126
  %v551 = vunpack.c.l.b16 %v127
  %v552 = vunpack.c.h.b16 %v127
  %v553 = vunpack.c.l.b16 %v128
  %v554 = vunpack.c.h.b16 %v128
  %v555 = vunpack.c.l.b16 %v129
  %v556 = vunpack.c.h.b16 %v129
  %v557 = vunpack.c.l.b16 %v130
  %v558 = vunpack.c.h.b16 %v130
  %v559 = vunpack.c.l.b16 %v131
  %v560 = vunpack.c.h.b16 %v131
  %v561 = vunpack.c.l.b16 %v132
  %v562 = vunpack.c.h.b16 %v132
  %v563 = vunpack.c.l.b16 %v133
  %v564 = vunpack.c.h.b16 %v133
  %v565 = vunpack.c.l.b16 %v134
  %v566 = vunpack.c.h.b16 %v134
  %v567 = vunpack.c.l.b16 %v135
  %v568 = vunpack.c.h.b16 %v135
  %v569 = vunpack.c.l.b16 %v136
  %v570 = vunpack.c.h.b16 %v136
  %v571 = vunpack.c.l.b16 %v137
  %v572 = vunpack.c.h.b16 %v137
  %v573 = vunpack.c.l.b16 %v138
  %v574 = vunpack.c.h.b16 %v138
  %v575 = vunpack.c.l.b16 %v139
  %v576 = vunpack.c.h.b16 %v139
  %v577 = vunpack.c.l.b16 %v140
  %v578 = vunpack.c.h.b16 %v140
  %v579 = vunpack.c.l.b16 %v141
  %v580 = vunpack.c.h.b16 %v141
  %v581 = vunpack.c.l.b16 %v142
  %v582 = vunpack.c.h.b16 %v142
  %v583 = vunpack.c.l.b16 %v143
  %v584 = vunpack.c.h.b16 %v143
  %v585 = vunpack.c.l.b16 %v144
  %v586 = vunpack.c.h.b16 %v144
  %v587 = vunpack.c.l.b16 %v145
  %v588 = vunpack.c.h.b16 %v145
  %v589 = vunpack.c.l.b16 %v146
  %v590 = vunpack.c.h.b16 %v146
  %v591 = vunpack.c.l.b16 %v147
  %v592 = vunpack.c.h.b16 %v147
  %v593 = vunpack.c.l.b16 %v148
  %v594 = vunpack.c.h.b16 %v148
  %v595 = vunpack.c.l.b16 %v149
  %v596 = vunpack.c.h.b16 %v149
  %v597 = vunpack.c.l.b16 %v150
  %v598 = vunpack.c.h.b16 %v150
  %v599 = vunpack.c.l.b16 %v151
  %v600 = vunpack.c.h.b16 %v151
  %v601 = vunpack.c.l.b16 %v152
  %v602 = vunpack.c.h.b16 %v152
  %v603 = vunpack.c.l.b16 %v153
  %v604 = vunpack.c.h.b16 %v153
  %v605 = vunpack.c.l.b16 %v154
  %v606 = vunpack.c.h.b16 %v154
  %v607 = vunpack.c.l.b16 %v155
  %v608 = vunpack.c.h.b16 %v155
  %v609 = vunpack.c.l.b16 %v156
  %v610 = vunpack.c.h.b16 %v156
  %v611 = vunpack.c.l.b16 %v157
  %v612 = vunpack.c.h.b16 %v157
  %v613 = vunpack.c.l.b16 %v158
  %v614 = vunpack.c.h.b16 %v158
  %v615 = vunpack.c.l.b16 %v159
  %v616 = vunpack.c.h.b16 %v159
  %v617 = vunpack.c.l.b16 %v160
  %v618 = vunpack.c.h.b16 %v160
  %v619 = vunpack.c.l.b16 %v161
  %v620 = vunpack.c.h.b16 %v161
  %v621 = vunpack.c.l.b16 %v162
  %v622 = vunpack.c.h.b16 %v162
  %v623 = vunpack.c.l.b16 %v163
  %v624 = vunpack.c.h.b16 %v163
  %v625 = vunpack.c.l.b16 %v164
  %v626 = vunpack.c.h.b16 %v164
  %v627 = vunpack.c.l.b16 %v165
  %v628 = vunpack.c.h.b16 %v165
  %v629 = vunpack.c.l.b16 %v166
  %v630 = vunpack.c.h.b16 %v166
  %v631 = vpack.c.b16 %v345, %v343
  %v632 = vpack.c.b16 %v346, %v344
  %v633 = vpack.c.b16 %v349, %v347
  %v634 = vpack.c.b16 %v350, %v348
  %v635 = vpack.c.b16 %v353, %v351
  %v636 = vpack.c.b16 %v354, %v352
  %v637 = vpack.c.b16 %v357, %v355
  %v638 = vpack.c.b16 %v358, %v356
  %v639 = vpack.c.b16 %v361, %v359
  %v640 = vpack.c.b16 %v362, %v360
  %v641 = vpack.c.b16 %v365, %v363
  %v642 = vpack.c.b16 %v366, %v364
  %v643 = vpack.c.b16 %v369, %v367
  %v644 = vpack.c.b16 %v370, %v368
  %v645 = vpack.c.b16 %v373, %v371
  %v646 = vpack.c.b16 %v374, %v372
  %v647 = vpack.c.b16 %v377, %v375
  %v648 = vpack.c.b16 %v378, %v376
  %v649 = vpack.c.b16 %v381, %v379
  %v650 = vpack.c.b16 %v382, %v380
  %v651 = vpack.c.b16 %v385, %v383
  %v652 = vpack.c.b16 %v386, %v384
  %v653 = vpack.c.b16 %v389, %v387
  %v654 = vpack.c.b16 %v390, %v388
  %v655 = vpack.c.b16 %v393, %v391
  %v656 = vpack.c.b16 %v394, %v392
  %v657 = vpack.c.b16 %v397, %v395
  %v658 = vpack.c.b16 %v398, %v396
  %v659 = vpack.c.b16 %v401, %v399
  %v660 = vpack.c.b16 %v402, %v400
  %v661 = vpack.c.b16 %v405, %v403
  %v662 = vpack.c.b16 %v406, %v404
  %v663 = vpack.c.b16 %v409, %v407
  %v664 = vpack.c.b16 %v410, %v408
  %v665 = vpack.c.b16 %v413, %v411
  %v666 = vpack.c.b16 %v414, %v412
  %v667 = vpack.c.b16 %v417, %v415
  %v668 = vpack.c.b16 %v418, %v416
  %v669 = vpack.c.b16 %v421, %v419
  %v670 = vpack.c.b16 %v422, %v420
  %v671 = vpack.c.b16 %v425, %v423
  %v672 = vpack.c.b16 %v426, %v424
  %v673 = vpack.c.b16 %v429, %v427
  %v674 = vpack.c.b16 %v430, %v428
  %v675 = vpack.c.b16 %v433, %v431
  %v676 = vpack.c.b16 %v434, %v432
  %v677 = vpack.c.b16 %v437, %v435
  %v678 = vpack.c.b16 %v438, %v436
  %v679 = vpack.c.b16 %v441, %v439
  %v680 = vpack.c.b16 %v442, %v440
  %v681 = vpack.c.b16 %v445, %v443
  %v682 = vpack.c.b16 %v446, %v444
  %v683 = vpack.c.b16 %v449, %v447
  %v684 = vpack.c.b16 %v450, %v448
  %v685 = vpack.c.b16 %v453, %v451
  %v686 = vpack.c.b16 %v454, %v452
  %v687 = vpack.c.b16 %v457, %v455
  %v688 = vpack.c.b16 %v458, %v456
  %v689 = vpack.c.b16 %v461, %v459
  %v690 = vpack.c.b16 %v462, %v460
  %v691 = vpack.c.b16 %v465, %v463
  %v692 = vpack.c.b16 %v466, %v464
  %v693 = vpack.c.b16 %v469, %v467
  %v694 = vpack.c.b16 %v470, %v468
  %v695 = vpack.c.b16 %v473, %v471
  %v696 = vpack.c.b16 %v474, %v472
  %v697 = vpack.c.b16 %v477, %v475
  %v698 = vpack.c.b16 %v478, %v476
  %v699 = vpack.c.b16 %v481, %v479
  %v700 = vpack.c.b16 %v482, %v480
  %v701 = vpack.c.b16 %v485, %v483
  %v702 = vpack.c.b16 %v486, %v484
  %v703 = vpack.c.b16 %v489, %v487
  %v704 = vpack.c.b16 %v490, %v488
  %v705 = vpack.c.b16 %v493, %v491
  %v706 = vpack.c.b16 %v494, %v492
  %v707 = vpack.c.b16 %v497, %v495
  %v708 = vpack.c.b16 %v498, %v496
  %v709 = vpack.c.b16 %v501, %v499
  %v710 = vpack.c.b16 %v502, %v500
  %v711 = vpack.c.b16 %v505, %v503
  %v712 = vpack.c.b16 %v506, %v504
  %v713 = vpack.c.b16 %v509, %v507
  %v714 = vpack.c.b16 %v510, %v508
  %v715 = vpack.c.b16 %v513, %v511
  %v716 = vpack.c.b16 %v514, %v512
  %v717 = vpack.c.b16 %v517, %v515
  %v718 = vpack.c.b16 %v518, %v516
  %v719 = vpack.c.b16 %v521, %v519
  %v720 = vpack.c.b16 %v522, %v520
  %v721 = vpack.c.b16 %v525, %v523
  %v722 = vpack.c.b16 %v526, %v524
  %v723 = vpack.c.b16 %v529, %v527
  %v724 = vpack.c.b16 %v530, %v528
  %v725 = vpack.c.b16 %v533, %v531
  %v726 = vpack.c.b16 %v534, %v532
  %v727 = vpack.c.b16 %v537, %v535
  %v728 = vpack.c.b16 %v538, %v536
  %v729 = vpack.c.b16 %v541, %v539
  %v730 = vpack.c.b16 %v542, %v540
  %v731 = vpack.c.b16 %v545, %v543
  %v732 = vpack.c.b16 %v546, %v544
  %v733 = vpack.c.b16 %v549, %v547
  %v734 = vpack.c.b16 %v550, %v548
  %v735 = vpack.c.b16 %v553, %v551
  %v736 = vpack.c.b16 %v554, %v552
  %v737 = vpack.c.b16 %v557, %v555
  %v738 = vpack.c.b16 %v558, %v556
  %v739 = vpack.c.b16 %v561, %v559
  %v740 = vpack.c.b16 %v562, %v560
  %v741 = vpack.c.b16 %v565, %v563
  %v742 = vpack.c.b16 %v566, %v564
  %v743 = vpack.c.b16 %v569, %v567
  %v744 = vpack.c.b16 %v570, %v568
  %v745 = vpack.c.b16 %v573, %v571
  %v746 = vpack.c.b16 %v574, %v572
  %v747 = vpack.c.b16 %v577, %v575
  %v748 = vpack.c.b16 %v578, %v576
  %v749 = vpack.c.b16 %v581, %v579
  %v750 = vpack.c.b16 %v582, %v580
  %v751 = vpack.c.b16 %v585, %v583
  %v752 = vpack.c.b16 %v586, %v584
  %v753 = vpack.c.b16 %v589, %v587
  %v754 = vpack.c.b16 %v590, %v588
  %v755 = vpack.c.b16 %v593, %v591
  %v756 = vpack.c.b16 %v594, %v592
  %v757 = vpack.c.b16 %v597, %v595
  %v758 = vpack.c.b16 %v598, %v596
  %v759 = vpack.c.b16 %v601, %v599
  %v760 = vpack.c.b16 %v602, %v600
  %v761 = vpack.c.b16 %v605, %v603
  %v762 = vpack.c.b16 %v606, %v604
  %v763 = vpack.c.b16 %v609, %v607
  %v764 = vpack.c.b16 %v610, %v608
  %v765 = vpack.c.b16 %v613, %v611
  %v766 = vpack.c.b16 %v614, %v612
  %v767 = vpack.c.b16 %v617, %v615
  %v768 = vpack.c.b16 %v618, %v616
  %v769 = vpack.c.b16 %v621, %v619
  %v770 = vpack.c.b16 %v622, %v620
  %v771 = vpack.c.b16 %v625, %v623
  %v772 = vpack.c.b16 %v626, %v624
  %v773 = vpack.c.b16 %v629, %v627
  %v774 = vpack.c.b16 %v630, %v628
  %919 = vmatprep.subr.bf16.mxu0 %v632
  %920 = vmatpush1.bf16.msra.mxu0 %v631
  %921 = vmatprep.subr.bf16.mxu0 %v634
  %922 = vmatpush1.bf16.msra.mxu0 %v633
  %923 = vmatprep.subr.bf16.mxu0 %v636
  %924 = vmatpush1.bf16.msra.mxu0 %v635
  %925 = vmatprep.subr.bf16.mxu0 %v638
  %926 = vmatpush1.bf16.msra.mxu0 %v637
  %927 = vmatprep.subr.bf16.mxu0 %v640
  %928 = vmatpush1.bf16.msra.mxu0 %v639
  %929 = vmatprep.subr.bf16.mxu0 %v642
  %930 = vmatpush1.bf16.msra.mxu0 %v641
  %931 = vmatprep.subr.bf16.mxu0 %v644
  %932 = vmatpush1.bf16.msra.mxu0 %v643
  %933 = vmatprep.subr.bf16.mxu0 %v646
  %934 = vmatpush1.bf16.msra.mxu0 %v645
  %935 = vmatprep.subr.bf16.mxu0 %v648
  %936 = vmatpush1.bf16.msra.mxu0 %v647
  %937 = vmatprep.subr.bf16.mxu0 %v650
  %938 = vmatpush1.bf16.msra.mxu0 %v649
  %939 = vmatprep.subr.bf16.mxu0 %v652
  %940 = vmatpush1.bf16.msra.mxu0 %v651
  %941 = vmatprep.subr.bf16.mxu0 %v654
  %942 = vmatpush1.bf16.msra.mxu0 %v653
  %943 = vmatprep.subr.bf16.mxu0 %v656
  %944 = vmatpush1.bf16.msra.mxu0 %v655
  %945 = vmatprep.subr.bf16.mxu0 %v658
  %946 = vmatpush1.bf16.msra.mxu0 %v657
  %947 = vmatprep.subr.bf16.mxu0 %v660
  %948 = vmatpush1.bf16.msra.mxu0 %v659
  %949 = vmatprep.subr.bf16.mxu0 %v662
  %950 = vmatpush1.bf16.msra.mxu0 %v661
  %951 = vmatprep.mubr.bf16.mxu0 %v182
  %952 = vmatmul.mubr.bf16.gmra.mrb[0].mxu0 %v181
  %v953 = vpop.f32.mrb[0].mxu0
  %v954 = vadd.f32 0.0, %v953
  %v955 = vpop.f32.mrb[0].mxu0
  %v956 = vadd.f32 0.0, %v955
  %v957 = vpop.f32.mrb[0].mxu0
  %v958 = vpop.f32.mrb[0].mxu0
  %959 = vdwg.mxu0
  %960 = vmatprep.subr.bf16.mxu0 %v664
  %961 = vmatpush1.bf16.msra.mxu0 %v663
  %962 = vmatprep.subr.bf16.mxu0 %v666
  %963 = vmatpush1.bf16.msra.mxu0 %v665
  %964 = vmatprep.subr.bf16.mxu0 %v668
  %965 = vmatpush1.bf16.msra.mxu0 %v667
  %966 = vmatprep.subr.bf16.mxu0 %v670
  %967 = vmatpush1.bf16.msra.mxu0 %v669
  %968 = vmatprep.subr.bf16.mxu0 %v672
  %969 = vmatpush1.bf16.msra.mxu0 %v671
  %970 = vmatprep.subr.bf16.mxu0 %v674
  %971 = vmatpush1.bf16.msra.mxu0 %v673
  %972 = vmatprep.subr.bf16.mxu0 %v676
  %973 = vmatpush1.bf16.msra.mxu0 %v675
  %974 = vmatprep.subr.bf16.mxu0 %v678
  %975 = vmatpush1.bf16.msra.mxu0 %v677
  %976 = vmatprep.subr.bf16.mxu0 %v680
  %977 = vmatpush1.bf16.msra.mxu0 %v679
  %978 = vmatprep.subr.bf16.mxu0 %v682
  %979 = vmatpush1.bf16.msra.mxu0 %v681
  %980 = vmatprep.subr.bf16.mxu0 %v684
  %981 = vmatpush1.bf16.msra.mxu0 %v683
  %982 = vmatprep.subr.bf16.mxu0 %v686
  %983 = vmatpush1.bf16.msra.mxu0 %v685
  %984 = vmatprep.subr.bf16.mxu0 %v688
  %985 = vmatpush1.bf16.msra.mxu0 %v687
  %986 = vmatprep.subr.bf16.mxu0 %v690
  %987 = vmatpush1.bf16.msra.mxu0 %v689
  %988 = vmatprep.subr.bf16.mxu0 %v692
  %989 = vmatpush1.bf16.msra.mxu0 %v691
  %990 = vmatprep.subr.bf16.mxu0 %v694
  %991 = vmatpush1.bf16.msra.mxu0 %v693
  %992 = vmatprep.mubr.bf16.mxu0 %v184
  %993 = vmatmul.mubr.bf16.gmra.mrb[0].mxu0 %v183
  %v994 = vpop.f32.mrb[0].mxu0
  %v995 = vadd.f32 %v954, %v994
  %v996 = vpop.f32.mrb[0].mxu0
  %v997 = vadd.f32 %v956, %v996
  %v998 = vpop.f32.mrb[0].mxu0
  %v999 = vpop.f32.mrb[0].mxu0
  %1000 = vdwg.mxu0
  %1001 = vmatprep.subr.bf16.mxu0 %v696
  %1002 = vmatpush1.bf16.msra.mxu0 %v695
  %1003 = vmatprep.subr.bf16.mxu0 %v698
  %1004 = vmatpush1.bf16.msra.mxu0 %v697
  %1005 = vmatprep.subr.bf16.mxu0 %v700
  %1006 = vmatpush1.bf16.msra.mxu0 %v699
  %1007 = vmatprep.subr.bf16.mxu0 %v702
  %1008 = vmatpush1.bf16.msra.mxu0 %v701
  %1009 = vmatprep.subr.bf16.mxu0 %v704
  %1010 = vmatpush1.bf16.msra.mxu0 %v703
  %1011 = vmatprep.subr.bf16.mxu0 %v706
  %1012 = vmatpush1.bf16.msra.mxu0 %v705
  %1013 = vmatprep.subr.bf16.mxu0 %v708
  %1014 = vmatpush1.bf16.msra.mxu0 %v707
  %1015 = vmatprep.subr.bf16.mxu0 %v710
  %1016 = vmatpush1.bf16.msra.mxu0 %v709
  %1017 = vmatprep.subr.bf16.mxu0 %v712
  %1018 = vmatpush1.bf16.msra.mxu0 %v711
  %1019 = vmatprep.subr.bf16.mxu0 %v714
  %1020 = vmatpush1.bf16.msra.mxu0 %v713
  %1021 = vmatprep.subr.bf16.mxu0 %v716
  %1022 = vmatpush1.bf16.msra.mxu0 %v715
  %1023 = vmatprep.subr.bf16.mxu0 %v718
  %1024 = vmatpush1.bf16.msra.mxu0 %v717
  %1025 = vmatprep.subr.bf16.mxu0 %v720
  %1026 = vmatpush1.bf16.msra.mxu0 %v719
  %1027 = vmatprep.subr.bf16.mxu0 %v722
  %1028 = vmatpush1.bf16.msra.mxu0 %v721
  %1029 = vmatprep.subr.bf16.mxu0 %v724
  %1030 = vmatpush1.bf16.msra.mxu0 %v723
  %1031 = vmatprep.subr.bf16.mxu0 %v726
  %1032 = vmatpush1.bf16.msra.mxu0 %v725
  %1033 = vmatprep.mubr.bf16.mxu0 %v186
  %1034 = vmatmul.mubr.bf16.gmra.mrb[0].mxu0 %v185
  %v1035 = vpop.f32.mrb[0].mxu0
  %v1036 = vadd.f32 %v995, %v1035
  %v1037 = vpop.f32.mrb[0].mxu0
  %v1038 = vadd.f32 %v997, %v1037
  %v1039 = vpop.f32.mrb[0].mxu0
  %v1040 = vpop.f32.mrb[0].mxu0
  %1041 = vdwg.mxu0
  %1042 = vmatprep.subr.bf16.mxu0 %v728
  %1043 = vmatpush1.bf16.msra.mxu0 %v727
  %1044 = vmatprep.subr.bf16.mxu0 %v730
  %1045 = vmatpush1.bf16.msra.mxu0 %v729
  %1046 = vmatprep.subr.bf16.mxu0 %v732
  %1047 = vmatpush1.bf16.msra.mxu0 %v731
  %1048 = vmatprep.subr.bf16.mxu0 %v734
  %1049 = vmatpush1.bf16.msra.mxu0 %v733
  %1050 = vmatprep.subr.bf16.mxu0 %v736
  %1051 = vmatpush1.bf16.msra.mxu0 %v735
  %1052 = vmatprep.subr.bf16.mxu0 %v738
  %1053 = vmatpush1.bf16.msra.mxu0 %v737
  %1054 = vmatprep.subr.bf16.mxu0 %v740
  %1055 = vmatpush1.bf16.msra.mxu0 %v739
  %1056 = vmatprep.subr.bf16.mxu0 %v742
  %1057 = vmatpush1.bf16.msra.mxu0 %v741
  %1058 = vmatprep.subr.bf16.mxu0 %v744
  %1059 = vmatpush1.bf16.msra.mxu0 %v743
  %1060 = vmatprep.subr.bf16.mxu0 %v746
  %1061 = vmatpush1.bf16.msra.mxu0 %v745
  %1062 = vmatprep.subr.bf16.mxu0 %v748
  %1063 = vmatpush1.bf16.msra.mxu0 %v747
  %1064 = vmatprep.subr.bf16.mxu0 %v750
  %1065 = vmatpush1.bf16.msra.mxu0 %v749
  %1066 = vmatprep.subr.bf16.mxu0 %v752
  %1067 = vmatpush1.bf16.msra.mxu0 %v751
  %1068 = vmatprep.subr.bf16.mxu0 %v754
  %1069 = vmatpush1.bf16.msra.mxu0 %v753
  %1070 = vmatprep.subr.bf16.mxu0 %v756
  %1071 = vmatpush1.bf16.msra.mxu0 %v755
  %1072 = vmatprep.subr.bf16.mxu0 %v758
  %1073 = vmatpush1.bf16.msra.mxu0 %v757
  %1074 = vmatprep.mubr.bf16.mxu0 %v188
  %1075 = vmatmul.mubr.bf16.gmra.mrb[0].mxu0 %v187
  %v1076 = vpop.f32.mrb[0].mxu0
  %v1077 = vadd.f32 %v1036, %v1076
  %v1078 = vpop.f32.mrb[0].mxu0
  %v1079 = vadd.f32 %v1038, %v1078
  %v1080 = vpop.f32.mrb[0].mxu0
  %v1081 = vpop.f32.mrb[0].mxu0
  %1082 = vdwg.mxu0
  %1083 = vmatprep.subr.bf16.mxu0 %v760
  %1084 = vmatpush1.bf16.msra.mxu0 %v759
  %1085 = vmatprep.subr.bf16.mxu0 %v762
  %1086 = vmatpush1.bf16.msra.mxu0 %v761
  %1087 = vmatprep.subr.bf16.mxu0 %v764
  %1088 = vmatpush1.bf16.msra.mxu0 %v763
  %1089 = vmatprep.subr.bf16.mxu0 %v766
  %1090 = vmatpush1.bf16.msra.mxu0 %v765
  %1091 = vmatprep.subr.bf16.mxu0 %v768
  %1092 = vmatpush1.bf16.msra.mxu0 %v767
  %1093 = vmatprep.subr.bf16.mxu0 %v770
  %1094 = vmatpush1.bf16.msra.mxu0 %v769
  %1095 = vmatprep.subr.bf16.mxu0 %v772
  %1096 = vmatpush1.bf16.msra.mxu0 %v771
  %1097 = vmatprep.subr.bf16.mxu0 %v774
  %1098 = vmatpush1.bf16.msra.mxu0 %v773
  %1099 = vmatprep.subr.bf16.mxu0 0
  %1100 = vmatpush1.bf16.msra.mxu0 0
  %1101 = vmatprep.subr.bf16.mxu0 0
  %1102 = vmatpush1.bf16.msra.mxu0 0
  %1103 = vmatprep.subr.bf16.mxu0 0
  %1104 = vmatpush1.bf16.msra.mxu0 0
  %1105 = vmatprep.subr.bf16.mxu0 0
  %1106 = vmatpush1.bf16.msra.mxu0 0
  %1107 = vmatprep.subr.bf16.mxu0 0
  %1108 = vmatpush1.bf16.msra.mxu0 0
  %1109 = vmatprep.subr.bf16.mxu0 0
  %1110 = vmatpush1.bf16.msra.mxu0 0
  %1111 = vmatprep.subr.bf16.mxu0 0
  %1112 = vmatpush1.bf16.msra.mxu0 0
  %1113 = vmatprep.subr.bf16.mxu0 0
  %1114 = vmatpush1.bf16.msra.mxu0 0
  %1115 = vmatprep.mubr.bf16.mxu0 0
  %1116 = vmatmul.mubr.bf16.gmra.mrb[0].mxu0 %v189
  %v1117 = vpop.f32.mrb[0].mxu0
  %v1118 = vadd.f32 %v1077, %v1117
  %v1119 = vpop.f32.mrb[0].mxu0
  %v1120 = vadd.f32 %v1079, %v1119
  %v1121 = vpop.f32.mrb[0].mxu0
  %v1122 = vpop.f32.mrb[0].mxu0
  %1123 = vdwg.mxu0
  %v1124 = vld [vmem:[%s2] sm:$0x3]
  %v1126 = vlaneseq
  %v1127 = vshrl.u32 %v1126, 7
  %v1128 = vsub.s32 0, %v1127
  %v1129 = vrot.slane %v1124, %v1128
  %v1130 = vlaneseq
  %v1131 = vshrl.u32 %v1130, 7
  %v1132 = vsub.s32 1, %v1131
  %v1133 = vrot.slane %v1124, %v1132
  %v1136 = vmul.f32 %v1118, %v1129
  %v1137 = vmul.f32 %v1120, %v1133
  %v1138 = vld [vmem:[%s3] sm:$0x3]
  %v1140 = vlaneseq
  %v1141 = vshrl.u32 %v1140, 7
  %v1142 = vsub.s32 0, %v1141
  %v1143 = vrot.slane %v1138, %v1142
  %v1144 = vlaneseq
  %v1145 = vshrl.u32 %v1144, 7
  %v1146 = vsub.s32 1, %v1145
  %v1147 = vrot.slane %v1138, %v1146
  %v1150 = vadd.f32 %v1136, %v1143
  %v1151 = vadd.f32 %v1137, %v1147
  %v1152 = vmax.f32 %v1150, 0.0
  %v1153 = vmax.f32 %v1151, 0.0
  %v1154 = vpack.c.bf16 %v1152, %v1152
  %v1155 = vpack.c.bf16 %v1153, %v1153
  %v1158 = vunpack.c.l.b16 %v1154
  %v1159 = vunpack.c.l.b16 %v1155
  %v1160 = vpack.c.b16 %v1159, %v1158
  %1162 = vst [vmem:[%s4] sm:$0xff] %v1160
  // Predicated region
  $region18: #{_lambda_.10} parent=0 // pred_check
    _
  $region19: #{_lambda_.10} parent=0 // pred_check_branch
    %1164 = sbr.rel (0) target = $region21
  $region20: #{_lambda_.10} parent=0 // pred_region
    _
  $region21: #{_lambda_.10} parent=0 // pred_fallthru
    _
  // Predicated region
  $region22: #{_lambda_.10} parent=0 // pred_check
    _
  $region23: #{_lambda_.10} parent=0 // pred_check_branch
    %1166 = sbr.rel (0) target = $region25
  $region24: #{_lambda_.10} parent=0 // pred_region
    _
  $region25: #{_lambda_.10} parent=0 // pred_fallthru
    _

</llo_original>
